<compile_context>
chip_gen: v7x
topology: tpu7x:2x2x1
jax: 0.10.0
libtpu: 0.0.40
codegen_flags: <defaults>
</compile_context>

<pallas_src>
import functools

import jax
import jax.numpy as jnp
from jax.experimental import pallas as pl
from jax.experimental.pallas import tpu as pltpu

EPS = 1e-5


# ----------------------------------------------------------------------------
# in-kernel helper: training-mode BatchNorm folded to scale/shift, fused ReLU
# ----------------------------------------------------------------------------
def _bn_relu(y, gamma, beta):
    """y: (rows, C) f32; batch stats over rows (== N*H*W), biased variance."""
    inv_r = 1.0 / y.shape[0]
    mean = jnp.sum(y, axis=0, keepdims=True) * inv_r
    var = jnp.sum(y * y, axis=0, keepdims=True) * inv_r - mean * mean
    scale = gamma * jax.lax.rsqrt(var + EPS)          # EUP
    shift = beta - mean * scale
    return jnp.maximum(y * scale + shift, 0.0)        # 2 VPU ops per element


# ----------------------------------------------------------------------------
# fused ResBlock kernel (single invocation, everything resident in VMEM)
# ----------------------------------------------------------------------------
def resblock_kernel(x_ref, w1_ref, b1_ref, g1_ref, be1_ref,
                    w2_ref, b2_ref, g2_ref, be2_ref,
                    w3_ref, b3_ref, o_ref, xpad_ref, *, N, H, W, C):
    R = N * H * W
    bf16 = jnp.bfloat16

    x = x_ref[...]                                              # (R, C) f32

    # ---- conv 1x1 + BN + ReLU -------------------------------------------
    y1 = jnp.dot(x.astype(bf16), w1_ref[...].astype(bf16),
                 preferred_element_type=jnp.float32) + b1_ref[...]
    h1 = _bn_relu(y1, g1_ref[...], be1_ref[...])                # (R, C) f32

    # ---- conv 3x3 (padding=1) via in-kernel zero-pad + im2col ------------
    # pre-zeroed VMEM scratch holds the padded activation; only the interior
    # is overwritten, so the halo stays zero.
    xpad_ref[...] = jnp.zeros(xpad_ref.shape, xpad_ref.dtype)
    xpad_ref[:, 1:H + 1, 1:W + 1, :] = h1.reshape(N, H, W, C)
    patches = [
        xpad_ref[:, dy:dy + H, dx:dx + W, :].reshape(R, C)
        for dy in range(3) for dx in range(3)
    ]
    patch_mat = jnp.concatenate(patches, axis=1)                # (R, 9*C) f32
    y2 = jnp.dot(patch_mat.astype(bf16), w2_ref[...].astype(bf16),
                 preferred_element_type=jnp.float32) + b2_ref[...]
    h2 = _bn_relu(y2, g2_ref[...], be2_ref[...])                # (R, C) f32

    # ---- conv 1x1 + residual ---------------------------------------------
    y3 = jnp.dot(h2.astype(bf16), w3_ref[...].astype(bf16),
                 preferred_element_type=jnp.float32) + b3_ref[...]
    o_ref[...] = y3 + x


# ----------------------------------------------------------------------------
# public wrapper (PyTorch NCHW in / NCHW out)
# ----------------------------------------------------------------------------
@jax.jit
def res_block_forward(x_nchw, params):
    N, C, H, W = x_nchw.shape
    x = jnp.transpose(x_nchw, (0, 2, 3, 1)).astype(jnp.float32)     # NHWC
    x2d = x.reshape(N * H * W, C)

    kern = functools.partial(resblock_kernel, N=N, H=H, W=W, C=C)
    vmem = pl.BlockSpec(memory_space=pltpu.MemorySpace.VMEM)
    args = (x2d,
            params['w1'], params['b1'], params['g1'], params['beta1'],
            params['w2'], params['b2'], params['g2'], params['beta2'],
            params['w3'], params['b3'])

    out2d = pl.pallas_call(
        kern,
        out_shape=jax.ShapeDtypeStruct((N * H * W, C), jnp.float32),
        in_specs=[vmem] * len(args),
        out_specs=vmem,
        scratch_shapes=[pltpu.VMEM((N, H + 2, W + 2, C), jnp.float32)],
    )(*args)

    out = out2d.reshape(N, H, W, C)
    return jnp.transpose(out, (0, 3, 1, 2))


# ----------------------------------------------------------------------------
# deterministic synthetic parameters (shapes mirror the PyTorch module)
#   w1, w3 : (Cin, Cout)            -- 1x1 convs
#   w2     : (9*Cin, Cout) im2col   -- row index is (ky, kx, cin)
# ----------------------------------------------------------------------------
def init_params(key, n_filters):
    C = n_filters
    k = jax.random.split(key, 6)

    def bias(kk):
        return jax.random.normal(kk, (1, C), jnp.float32) * 0.01

    return dict(
        w1=jax.random.normal(k[0], (C, C), jnp.float32) / jnp.sqrt(C),
        b1=bias(k[1]),
        g1=jnp.ones((1, C), jnp.float32),
        beta1=jnp.zeros((1, C), jnp.float32),
        w2=jax.random.normal(k[2], (9 * C, C), jnp.float32) / jnp.sqrt(9 * C),
        b2=bias(k[3]),
        g2=jnp.ones((1, C), jnp.float32),
        beta2=jnp.zeros((1, C), jnp.float32),
        w3=jax.random.normal(k[4], (C, C), jnp.float32) / jnp.sqrt(C),
        b3=bias(k[5]),
    )


# ----------------------------------------------------------------------------
# pure-JAX f32 reference (for correctness sanity check)
# ----------------------------------------------------------------------------
def ref_forward(x_nchw, params):
    x = jnp.transpose(x_nchw, (0, 2, 3, 1)).astype(jnp.float32)
    C = x.shape[-1]

    def conv1x1(h, w, b):
        return jnp.einsum('nhwc,cd->nhwd', h, w) + b.reshape(1, 1, 1, -1)

    def conv3x3(h, w, b):
        w4 = w.reshape(3, 3, C, C)                      # (ky, kx, cin, cout) = HWIO
        y = jax.lax.conv_general_dilated(
            h, w4, (1, 1), 'SAME',
            dimension_numbers=('NHWC', 'HWIO', 'NHWC'))
        return y + b.reshape(1, 1, 1, -1)

    def bn_relu(y, g, be):
        mean = jnp.mean(y, axis=(0, 1, 2), keepdims=True)
        var = jnp.mean((y - mean) ** 2, axis=(0, 1, 2), keepdims=True)
        yn = (y - mean) * jax.lax.rsqrt(var + EPS)
        return jnp.maximum(yn * g.reshape(1, 1, 1, -1) + be.reshape(1, 1, 1, -1),
                           0.0)

    h = bn_relu(conv1x1(x, params['w1'], params['b1']),
                params['g1'], params['beta1'])
    h = bn_relu(conv3x3(h, params['w2'], params['b2']),
                params['g2'], params['beta2'])
    h = conv1x1(h, params['w3'], params['b3']) + x
    return jnp.transpose(h, (0, 3, 1, 2))


# ----------------------------------------------------------------------------
if __name__ == "__main__":
    key = jax.random.PRNGKey(0)
    kx, kp = jax.random.split(key)

    # small shapes consistent with the module's forward: x is (N, n_filters, H, W)
    N, n_filters, H, W = 2, 32, 16, 16

    x = jax.random.normal(kx, (N, n_filters, H, W), jnp.float32)
    params = init_params(kp, n_filters)

    out = jax.block_until_ready(res_block_forward(x, params))

    assert out.shape == (N, n_filters, H, W), out.shape
    assert bool(jnp.all(jnp.isfinite(out)))

    ref = ref_forward(x, params)
    max_diff = float(jnp.max(jnp.abs(out - ref)))
    tol = 5e-2 * (1.0 + float(jnp.max(jnp.abs(ref))))    # bf16 MXU inputs
    assert max_diff < tol, f"mismatch vs reference: {max_diff} (tol {tol})"

    print("KERNEL_OK")
</pallas_src>

<mosaic_0001>
module attributes {stable_mosaic.version = 11 : i64} {
  func.func @resblock_kernel(%arg0: memref<512x32xf32, #tpu.memory_space<vmem>>, %arg1: memref<32x32xf32, #tpu.memory_space<vmem>>, %arg2: memref<1x32xf32, #tpu.memory_space<vmem>>, %arg3: memref<1x32xf32, #tpu.memory_space<vmem>>, %arg4: memref<1x32xf32, #tpu.memory_space<vmem>>, %arg5: memref<288x32xf32, #tpu.memory_space<vmem>>, %arg6: memref<1x32xf32, #tpu.memory_space<vmem>>, %arg7: memref<1x32xf32, #tpu.memory_space<vmem>>, %arg8: memref<1x32xf32, #tpu.memory_space<vmem>>, %arg9: memref<32x32xf32, #tpu.memory_space<vmem>>, %arg10: memref<1x32xf32, #tpu.memory_space<vmem>>, %arg11: memref<512x32xf32, #tpu.memory_space<vmem>>, %arg12: memref<2x18x18x32xf32, #tpu.memory_space<vmem>>) attributes {dimension_semantics = [], scalar_prefetch = 0 : i64, scratch_operands = 1 : i64, tpu.core_type = #tpu.core_type<tc>} {
    %c0 = arith.constant 0 : index
    %c0_0 = arith.constant 0 : index
    %0 = vector.load %arg0[%c0, %c0_0] : memref<512x32xf32, #tpu.memory_space<vmem>>, vector<512x32xf32>
    %1 = arith.truncf %0 : vector<512x32xf32> to vector<512x32xbf16>
    %c0_1 = arith.constant 0 : index
    %c0_2 = arith.constant 0 : index
    %2 = vector.load %arg1[%c0_1, %c0_2] : memref<32x32xf32, #tpu.memory_space<vmem>>, vector<32x32xf32>
    %3 = arith.truncf %2 : vector<32x32xf32> to vector<32x32xbf16>
    %cst = arith.constant dense<0.000000e+00> : vector<512x32xf32>
    %4 = tpu.matmul %1, %3, %cst {dimension_numbers = #tpu.dot_dimension_numbers<[1], [0], [0], [1], [0, 0, 1, 1], [], []>} : vector<512x32xbf16>, vector<32x32xbf16>, vector<512x32xf32> -> vector<512x32xf32>
    %c0_3 = arith.constant 0 : index
    %c0_4 = arith.constant 0 : index
    %5 = vector.load %arg2[%c0_3, %c0_4] : memref<1x32xf32, #tpu.memory_space<vmem>>, vector<1x32xf32>
    %6 = vector.broadcast %5 : vector<1x32xf32> to vector<512x32xf32>
    %7 = arith.addf %4, %6 : vector<512x32xf32>
    %c0_5 = arith.constant 0 : index
    %c0_6 = arith.constant 0 : index
    %8 = vector.load %arg3[%c0_5, %c0_6] : memref<1x32xf32, #tpu.memory_space<vmem>>, vector<1x32xf32>
    %c0_7 = arith.constant 0 : index
    %c0_8 = arith.constant 0 : index
    %9 = vector.load %arg4[%c0_7, %c0_8] : memref<1x32xf32, #tpu.memory_space<vmem>>, vector<1x32xf32>
    %cst_9 = arith.constant dense<0.000000e+00> : vector<32xf32>
    %10 = vector.multi_reduction <add>, %7, %cst_9 [0] : vector<512x32xf32> to vector<32xf32>
    %11 = vector.shape_cast %10 : vector<32xf32> to vector<1x32xf32>
    %cst_10 = arith.constant 0.001953125 : f32
    %12 = vector.broadcast %cst_10 : f32 to vector<1x32xf32>
    %13 = arith.mulf %11, %12 : vector<1x32xf32>
    %14 = arith.mulf %7, %7 : vector<512x32xf32>
    %cst_11 = arith.constant dense<0.000000e+00> : vector<32xf32>
    %15 = vector.multi_reduction <add>, %14, %cst_11 [0] : vector<512x32xf32> to vector<32xf32>
    %16 = vector.shape_cast %15 : vector<32xf32> to vector<1x32xf32>
    %cst_12 = arith.constant 0.001953125 : f32
    %17 = vector.broadcast %cst_12 : f32 to vector<1x32xf32>
    %18 = arith.mulf %16, %17 : vector<1x32xf32>
    %19 = arith.mulf %13, %13 : vector<1x32xf32>
    %20 = arith.subf %18, %19 : vector<1x32xf32>
    %cst_13 = arith.constant 9.99999974E-6 : f32
    %21 = vector.broadcast %cst_13 : f32 to vector<1x32xf32>
    %22 = arith.addf %20, %21 : vector<1x32xf32>
    %23 = math.rsqrt %22 : vector<1x32xf32>
    %24 = arith.mulf %8, %23 : vector<1x32xf32>
    %25 = arith.mulf %13, %24 : vector<1x32xf32>
    %26 = arith.subf %9, %25 : vector<1x32xf32>
    %27 = vector.broadcast %24 : vector<1x32xf32> to vector<512x32xf32>
    %28 = arith.mulf %7, %27 : vector<512x32xf32>
    %29 = vector.broadcast %26 : vector<1x32xf32> to vector<512x32xf32>
    %30 = arith.addf %28, %29 : vector<512x32xf32>
    %cst_14 = arith.constant 0.000000e+00 : f32
    %31 = vector.broadcast %cst_14 : f32 to vector<512x32xf32>
    %32 = arith.maximumf %30, %31 : vector<512x32xf32>
    %cst_15 = arith.constant 0.000000e+00 : f32
    %33 = vector.broadcast %cst_15 : f32 to vector<2x18x18x32xf32>
    %c0_16 = arith.constant 0 : index
    %c0_17 = arith.constant 0 : index
    %c0_18 = arith.constant 0 : index
    %c0_19 = arith.constant 0 : index
    %34 = vector.load %arg12[%c0_16, %c0_17, %c0_18, %c0_19] : memref<2x18x18x32xf32, #tpu.memory_space<vmem>>, vector<2x18x18x32xf32>
    tpu.vector_store %arg12[%c0_16, %c0_17, %c0_18, %c0_19], %33 {strides = array<i32>} : memref<2x18x18x32xf32, #tpu.memory_space<vmem>>, vector<2x18x18x32xf32>,
    %35 = vector.shape_cast %32 : vector<512x32xf32> to vector<2x16x16x32xf32>
    %c0_20 = arith.constant 0 : index
    %c1 = arith.constant 1 : index
    %c1_21 = arith.constant 1 : index
    %c0_22 = arith.constant 0 : index
    %36 = vector.load %arg12[%c0_20, %c1, %c1_21, %c0_22] : memref<2x18x18x32xf32, #tpu.memory_space<vmem>>, vector<2x16x16x32xf32>
    tpu.vector_store %arg12[%c0_20, %c1, %c1_21, %c0_22], %35 {strides = array<i32>} : memref<2x18x18x32xf32, #tpu.memory_space<vmem>>, vector<2x16x16x32xf32>,
    %c0_23 = arith.constant 0 : index
    %c0_24 = arith.constant 0 : index
    %c0_25 = arith.constant 0 : index
    %c0_26 = arith.constant 0 : index
    %37 = vector.load %arg12[%c0_23, %c0_24, %c0_25, %c0_26] : memref<2x18x18x32xf32, #tpu.memory_space<vmem>>, vector<2x16x16x32xf32>
    %38 = vector.shape_cast %37 : vector<2x16x16x32xf32> to vector<512x32xf32>
    %c0_27 = arith.constant 0 : index
    %c0_28 = arith.constant 0 : index
    %c1_29 = arith.constant 1 : index
    %c0_30 = arith.constant 0 : index
    %39 = vector.load %arg12[%c0_27, %c0_28, %c1_29, %c0_30] : memref<2x18x18x32xf32, #tpu.memory_space<vmem>>, vector<2x16x16x32xf32>
    %40 = vector.shape_cast %39 : vector<2x16x16x32xf32> to vector<512x32xf32>
    %c0_31 = arith.constant 0 : index
    %c0_32 = arith.constant 0 : index
    %c2 = arith.constant 2 : index
    %c0_33 = arith.constant 0 : index
    %41 = vector.load %arg12[%c0_31, %c0_32, %c2, %c0_33] : memref<2x18x18x32xf32, #tpu.memory_space<vmem>>, vector<2x16x16x32xf32>
    %42 = vector.shape_cast %41 : vector<2x16x16x32xf32> to vector<512x32xf32>
    %c0_34 = arith.constant 0 : index
    %c1_35 = arith.constant 1 : index
    %c0_36 = arith.constant 0 : index
    %c0_37 = arith.constant 0 : index
    %43 = vector.load %arg12[%c0_34, %c1_35, %c0_36, %c0_37] : memref<2x18x18x32xf32, #tpu.memory_space<vmem>>, vector<2x16x16x32xf32>
    %44 = vector.shape_cast %43 : vector<2x16x16x32xf32> to vector<512x32xf32>
    %c0_38 = arith.constant 0 : index
    %c1_39 = arith.constant 1 : index
    %c1_40 = arith.constant 1 : index
    %c0_41 = arith.constant 0 : index
    %45 = vector.load %arg12[%c0_38, %c1_39, %c1_40, %c0_41] : memref<2x18x18x32xf32, #tpu.memory_space<vmem>>, vector<2x16x16x32xf32>
    %46 = vector.shape_cast %45 : vector<2x16x16x32xf32> to vector<512x32xf32>
    %c0_42 = arith.constant 0 : index
    %c1_43 = arith.constant 1 : index
    %c2_44 = arith.constant 2 : index
    %c0_45 = arith.constant 0 : index
    %47 = vector.load %arg12[%c0_42, %c1_43, %c2_44, %c0_45] : memref<2x18x18x32xf32, #tpu.memory_space<vmem>>, vector<2x16x16x32xf32>
    %48 = vector.shape_cast %47 : vector<2x16x16x32xf32> to vector<512x32xf32>
    %c0_46 = arith.constant 0 : index
    %c2_47 = arith.constant 2 : index
    %c0_48 = arith.constant 0 : index
    %c0_49 = arith.constant 0 : index
    %49 = vector.load %arg12[%c0_46, %c2_47, %c0_48, %c0_49] : memref<2x18x18x32xf32, #tpu.memory_space<vmem>>, vector<2x16x16x32xf32>
    %50 = vector.shape_cast %49 : vector<2x16x16x32xf32> to vector<512x32xf32>
    %c0_50 = arith.constant 0 : index
    %c2_51 = arith.constant 2 : index
    %c1_52 = arith.constant 1 : index
    %c0_53 = arith.constant 0 : index
    %51 = vector.load %arg12[%c0_50, %c2_51, %c1_52, %c0_53] : memref<2x18x18x32xf32, #tpu.memory_space<vmem>>, vector<2x16x16x32xf32>
    %52 = vector.shape_cast %51 : vector<2x16x16x32xf32> to vector<512x32xf32>
    %c0_54 = arith.constant 0 : index
    %c2_55 = arith.constant 2 : index
    %c2_56 = arith.constant 2 : index
    %c0_57 = arith.constant 0 : index
    %53 = vector.load %arg12[%c0_54, %c2_55, %c2_56, %c0_57] : memref<2x18x18x32xf32, #tpu.memory_space<vmem>>, vector<2x16x16x32xf32>
    %54 = vector.shape_cast %53 : vector<2x16x16x32xf32> to vector<512x32xf32>
    %55 = tpu.concatenate %38, %40, %42, %44, %46, %48, %50, %52, %54 in 1 : vector<512x32xf32>, vector<512x32xf32>, vector<512x32xf32>, vector<512x32xf32>, vector<512x32xf32>, vector<512x32xf32>, vector<512x32xf32>, vector<512x32xf32>, vector<512x32xf32> -> vector<512x288xf32>
    %56 = arith.truncf %55 : vector<512x288xf32> to vector<512x288xbf16>
    %c0_58 = arith.constant 0 : index
    %c0_59 = arith.constant 0 : index
    %57 = vector.load %arg5[%c0_58, %c0_59] : memref<288x32xf32, #tpu.memory_space<vmem>>, vector<288x32xf32>
    %58 = arith.truncf %57 : vector<288x32xf32> to vector<288x32xbf16>
    %cst_60 = arith.constant dense<0.000000e+00> : vector<512x32xf32>
    %59 = tpu.matmul %56, %58, %cst_60 {dimension_numbers = #tpu.dot_dimension_numbers<[1], [0], [0], [1], [0, 0, 1, 1], [], []>} : vector<512x288xbf16>, vector<288x32xbf16>, vector<512x32xf32> -> vector<512x32xf32>
    %c0_61 = arith.constant 0 : index
    %c0_62 = arith.constant 0 : index
    %60 = vector.load %arg6[%c0_61, %c0_62] : memref<1x32xf32, #tpu.memory_space<vmem>>, vector<1x32xf32>
    %61 = vector.broadcast %60 : vector<1x32xf32> to vector<512x32xf32>
    %62 = arith.addf %59, %61 : vector<512x32xf32>
    %c0_63 = arith.constant 0 : index
    %c0_64 = arith.constant 0 : index
    %63 = vector.load %arg7[%c0_63, %c0_64] : memref<1x32xf32, #tpu.memory_space<vmem>>, vector<1x32xf32>
    %c0_65 = arith.constant 0 : index
    %c0_66 = arith.constant 0 : index
    %64 = vector.load %arg8[%c0_65, %c0_66] : memref<1x32xf32, #tpu.memory_space<vmem>>, vector<1x32xf32>
    %cst_67 = arith.constant dense<0.000000e+00> : vector<32xf32>
    %65 = vector.multi_reduction <add>, %62, %cst_67 [0] : vector<512x32xf32> to vector<32xf32>
    %66 = vector.shape_cast %65 : vector<32xf32> to vector<1x32xf32>
    %cst_68 = arith.constant 0.001953125 : f32
    %67 = vector.broadcast %cst_68 : f32 to vector<1x32xf32>
    %68 = arith.mulf %66, %67 : vector<1x32xf32>
    %69 = arith.mulf %62, %62 : vector<512x32xf32>
    %cst_69 = arith.constant dense<0.000000e+00> : vector<32xf32>
    %70 = vector.multi_reduction <add>, %69, %cst_69 [0] : vector<512x32xf32> to vector<32xf32>
    %71 = vector.shape_cast %70 : vector<32xf32> to vector<1x32xf32>
    %cst_70 = arith.constant 0.001953125 : f32
    %72 = vector.broadcast %cst_70 : f32 to vector<1x32xf32>
    %73 = arith.mulf %71, %72 : vector<1x32xf32>
    %74 = arith.mulf %68, %68 : vector<1x32xf32>
    %75 = arith.subf %73, %74 : vector<1x32xf32>
    %cst_71 = arith.constant 9.99999974E-6 : f32
    %76 = vector.broadcast %cst_71 : f32 to vector<1x32xf32>
    %77 = arith.addf %75, %76 : vector<1x32xf32>
    %78 = math.rsqrt %77 : vector<1x32xf32>
    %79 = arith.mulf %63, %78 : vector<1x32xf32>
    %80 = arith.mulf %68, %79 : vector<1x32xf32>
    %81 = arith.subf %64, %80 : vector<1x32xf32>
    %82 = vector.broadcast %79 : vector<1x32xf32> to vector<512x32xf32>
    %83 = arith.mulf %62, %82 : vector<512x32xf32>
    %84 = vector.broadcast %81 : vector<1x32xf32> to vector<512x32xf32>
    %85 = arith.addf %83, %84 : vector<512x32xf32>
    %cst_72 = arith.constant 0.000000e+00 : f32
    %86 = vector.broadcast %cst_72 : f32 to vector<512x32xf32>
    %87 = arith.maximumf %85, %86 : vector<512x32xf32>
    %88 = arith.truncf %87 : vector<512x32xf32> to vector<512x32xbf16>
    %c0_73 = arith.constant 0 : index
    %c0_74 = arith.constant 0 : index
    %89 = vector.load %arg9[%c0_73, %c0_74] : memref<32x32xf32, #tpu.memory_space<vmem>>, vector<32x32xf32>
    %90 = arith.truncf %89 : vector<32x32xf32> to vector<32x32xbf16>
    %cst_75 = arith.constant dense<0.000000e+00> : vector<512x32xf32>
    %91 = tpu.matmul %88, %90, %cst_75 {dimension_numbers = #tpu.dot_dimension_numbers<[1], [0], [0], [1], [0, 0, 1, 1], [], []>} : vector<512x32xbf16>, vector<32x32xbf16>, vector<512x32xf32> -> vector<512x32xf32>
    %c0_76 = arith.constant 0 : index
    %c0_77 = arith.constant 0 : index
    %92 = vector.load %arg10[%c0_76, %c0_77] : memref<1x32xf32, #tpu.memory_space<vmem>>, vector<1x32xf32>
    %93 = vector.broadcast %92 : vector<1x32xf32> to vector<512x32xf32>
    %94 = arith.addf %91, %93 : vector<512x32xf32>
    %95 = arith.addf %94, %0 : vector<512x32xf32>
    %c0_78 = arith.constant 0 : index
    %c0_79 = arith.constant 0 : index
    %96 = vector.load %arg11[%c0_78, %c0_79] : memref<512x32xf32, #tpu.memory_space<vmem>>, vector<512x32xf32>
    tpu.vector_store %arg11[%c0_78, %c0_79], %95 {strides = array<i32>} : memref<512x32xf32, #tpu.memory_space<vmem>>, vector<512x32xf32>,
    return
  }
}

</mosaic_0001>

<llo_original>
// kernel: res_block_forward.1
$region0: #{res_block_forward.1}
  #allocation0 [shape = 'u32[]', space=smem, size = 0x4, offset = 0x4, fixed_abs, tag = 'smem constant byte address 0x4 - core index']
  #allocation1 [shape = 'u32[144,128]{1,0:T(1,128)}', space=vmem, size = 0x12000, scoped, tag = 'internal scratch']
  #allocation2 [shape = 'f32[2,18,18,32]{3,2,1,0:T(8,128)}', space=vmem, size = 0x6c000, scoped, tag = 'scratch operand']
  %s0 = inlined_call_operand.hbm [shape: f32[512,32], index: 0, kind: input, shape index: {}]
  %s1 = inlined_call_operand.vmem [shape: f32[32,32], index: 1, kind: input, shape index: {}]
  %s2 = inlined_call_operand.vmem [shape: f32[1,32], index: 2, kind: input, shape index: {}]
  %s3 = inlined_call_operand.vmem [shape: f32[1,32], index: 3, kind: input, shape index: {}]
  %s4 = inlined_call_operand.vmem [shape: f32[1,32], index: 4, kind: input, shape index: {}]
  %s5 = inlined_call_operand.vmem [shape: f32[288,32], index: 5, kind: input, shape index: {}]
  %s6 = inlined_call_operand.vmem [shape: f32[1,32], index: 6, kind: input, shape index: {}]
  %s7 = inlined_call_operand.vmem [shape: f32[1,32], index: 7, kind: input, shape index: {}]
  %s8 = inlined_call_operand.vmem [shape: f32[1,32], index: 8, kind: input, shape index: {}]
  %s9 = inlined_call_operand.vmem [shape: f32[32,32], index: 9, kind: input, shape index: {}]
  %s10 = inlined_call_operand.vmem [shape: f32[1,32], index: 10, kind: input, shape index: {}]
  %s11 = inlined_call_operand.hbm [shape: f32[512,32], index: 11, kind: output, shape index: {}]
  %s12 = sld [smem:[#allocation0]]
  $region58: #{res_block_forward.1} parent=0
    _
  %s14 = ssub.s32 1, %s12
  %s15 = scalar_select 0, %s14, %s12
  $region1: #{res_block_forward.1} parent=0
    #allocation3 [shape = 'u8[262144]{0}', space=vmem, size = 0x40000, scoped, tag = 'input window, operand 0, single buffered']
    #allocation4 [shape = 's32[1]{0}', space=sflag, size = 0x4, scoped, tag = 'scoped memory for res_block_forward.1']
    #allocation5 [shape = 's32[1]{0}', space=sflag, size = 0x4, scoped, tag = 'scoped memory for res_block_forward.1']
    #allocation6 [shape = 'u8[262144]{0}', space=vmem, size = 0x40000, scoped, tag = 'output window, operand 0, single buffered']
    %16 = vsyncpa [#allocation4], 0
    %17 = vsyncpa [#allocation5], 0
    // Predicated region
    $region2: #{res_block_forward.1} parent=1 // pred_check
      _
    $region3: #{res_block_forward.1} parent=1 // pred_check_branch
      %19 = sbr.rel (0) target = $region5
    $region4: #{res_block_forward.1} parent=1 // pred_region
      %s21 = ssub.s32 8192, 8192
      %22 = vsyncadd [#allocation4], %s21
      %s23 = sshll.u32 [#allocation3], 4
      %s24 = int_to_ptr.vmem [resolvable:$true] %s23
      %29 = dma.hbm_to_vmem [thread:$0]  %s0, 8192, %s24, [#allocation4], 128, 128, 8
    $region5: #{res_block_forward.1} parent=1 // pred_fallthru
      _
    // Predicated region
    $region6: #{res_block_forward.1} parent=1 // pred_check
      _
    $region7: #{res_block_forward.1} parent=1 // pred_check_branch
      %31 = sbr.rel (0) target = $region9
    $region8: #{res_block_forward.1} parent=1 // pred_region
      _
    $region9: #{res_block_forward.1} parent=1 // pred_fallthru
      _
    // Predicated region
    $region10: #{res_block_forward.1} parent=1 // pred_check
      _
    $region11: #{res_block_forward.1} parent=1 // pred_check_branch
      %33 = sbr.rel (0) target = $region13
    $region12: #{res_block_forward.1} parent=1 // pred_region
      _
    $region13: #{res_block_forward.1} parent=1 // pred_fallthru
      _
    // Predicated region
    $region14: #{res_block_forward.1} parent=1 // pred_check
      _
    $region15: #{res_block_forward.1} parent=1 // pred_check_branch
      %35 = sbr.rel (0) target = $region17
    $region16: #{res_block_forward.1} parent=1 // pred_region
      _
    $region17: #{res_block_forward.1} parent=1 // pred_fallthru
      _
    // Predicated region
    $region18: #{res_block_forward.1} parent=1 // pred_check
      _
    $region19: #{res_block_forward.1} parent=1 // pred_check_branch
      %37 = sbr.rel (0) target = $region21
    $region20: #{res_block_forward.1} parent=1 // pred_region
      _
    $region21: #{res_block_forward.1} parent=1 // pred_fallthru
      _
    // Predicated region
    $region22: #{res_block_forward.1} parent=1 // pred_check
      _
    $region23: #{res_block_forward.1} parent=1 // pred_check_branch
      %39 = sbr.rel (0) target = $region25
    $region24: #{res_block_forward.1} parent=1 // pred_region
      _
    $region25: #{res_block_forward.1} parent=1 // pred_fallthru
      _
    // Predicated region
    $region26: #{res_block_forward.1} parent=1 // pred_check
      _
    $region27: #{res_block_forward.1} parent=1 // pred_check_branch
      %41 = sbr.rel (0) target = $region29
    $region28: #{res_block_forward.1} parent=1 // pred_region
      _
    $region29: #{res_block_forward.1} parent=1 // pred_fallthru
      _
    // Predicated region
    $region30: #{res_block_forward.1} parent=1 // pred_check
      _
    $region31: #{res_block_forward.1} parent=1 // pred_check_branch
      %43 = sbr.rel (0) target = $region33
    $region32: #{res_block_forward.1} parent=1 // pred_region
      _
    $region33: #{res_block_forward.1} parent=1 // pred_fallthru
      _
    // Predicated region
    $region34: #{res_block_forward.1} parent=1 // pred_check
      _
    $region35: #{res_block_forward.1} parent=1 // pred_check_branch
      %45 = sbr.rel (0) target = $region37
    $region36: #{res_block_forward.1} parent=1 // pred_region
      _
    $region37: #{res_block_forward.1} parent=1 // pred_fallthru
      _
    // Predicated region
    $region38: #{res_block_forward.1} parent=1 // pred_check
      _
    $region39: #{res_block_forward.1} parent=1 // pred_check_branch
      %47 = sbr.rel (0) target = $region41
    $region40: #{res_block_forward.1} parent=1 // pred_region
      _
    $region41: #{res_block_forward.1} parent=1 // pred_fallthru
      _
    // Predicated region
    $region42: #{res_block_forward.1} parent=1 // pred_check
      _
    $region43: #{res_block_forward.1} parent=1 // pred_check_branch
      %49 = sbr.rel (0) target = $region45
    $region44: #{res_block_forward.1} parent=1 // pred_region
      _
    $region45: #{res_block_forward.1} parent=1 // pred_fallthru
      _
    // Predicated region
    $region46: #{res_block_forward.1} parent=1 // pred_check
      _
    $region47: #{res_block_forward.1} parent=1 // pred_check_branch
      %51 = sbr.rel (0) target = $region49
    $region48: #{res_block_forward.1} parent=1 // pred_region
      %52 = dma.done [#allocation4], 8192
    $region49: #{res_block_forward.1} parent=1 // pred_fallthru
      _
    %v54 = vld [vmem:[#allocation3] sm:$0xff]
    %v55 = vld [vmem:[#allocation3 + $0x8] sm:$0xff]
    %v56 = vld [vmem:[#allocation3 + $0x10] sm:$0xff]
    %v57 = vld [vmem:[#allocation3 + $0x18] sm:$0xff]
    %v58 = vld [vmem:[#allocation3 + $0x20] sm:$0xff]
    %v59 = vld [vmem:[#allocation3 + $0x28] sm:$0xff]
    %v60 = vld [vmem:[#allocation3 + $0x30] sm:$0xff]
    %v61 = vld [vmem:[#allocation3 + $0x38] sm:$0xff]
    %v62 = vld [vmem:[#allocation3 + $0x40] sm:$0xff]
    %v63 = vld [vmem:[#allocation3 + $0x48] sm:$0xff]
    %v64 = vld [vmem:[#allocation3 + $0x50] sm:$0xff]
    %v65 = vld [vmem:[#allocation3 + $0x58] sm:$0xff]
    %v66 = vld [vmem:[#allocation3 + $0x60] sm:$0xff]
    %v67 = vld [vmem:[#allocation3 + $0x68] sm:$0xff]
    %v68 = vld [vmem:[#allocation3 + $0x70] sm:$0xff]
    %v69 = vld [vmem:[#allocation3 + $0x78] sm:$0xff]
    %v70 = vld [vmem:[#allocation3 + $0x80] sm:$0xff]
    %v71 = vld [vmem:[#allocation3 + $0x88] sm:$0xff]
    %v72 = vld [vmem:[#allocation3 + $0x90] sm:$0xff]
    %v73 = vld [vmem:[#allocation3 + $0x98] sm:$0xff]
    %v74 = vld [vmem:[#allocation3 + $0xa0] sm:$0xff]
    %v75 = vld [vmem:[#allocation3 + $0xa8] sm:$0xff]
    %v76 = vld [vmem:[#allocation3 + $0xb0] sm:$0xff]
    %v77 = vld [vmem:[#allocation3 + $0xb8] sm:$0xff]
    %v78 = vld [vmem:[#allocation3 + $0xc0] sm:$0xff]
    %v79 = vld [vmem:[#allocation3 + $0xc8] sm:$0xff]
    %v80 = vld [vmem:[#allocation3 + $0xd0] sm:$0xff]
    %v81 = vld [vmem:[#allocation3 + $0xd8] sm:$0xff]
    %v82 = vld [vmem:[#allocation3 + $0xe0] sm:$0xff]
    %v83 = vld [vmem:[#allocation3 + $0xe8] sm:$0xff]
    %v84 = vld [vmem:[#allocation3 + $0xf0] sm:$0xff]
    %v85 = vld [vmem:[#allocation3 + $0xf8] sm:$0xff]
    %v86 = vld [vmem:[#allocation3 + $0x100] sm:$0xff]
    %v87 = vld [vmem:[#allocation3 + $0x108] sm:$0xff]
    %v88 = vld [vmem:[#allocation3 + $0x110] sm:$0xff]
    %v89 = vld [vmem:[#allocation3 + $0x118] sm:$0xff]
    %v90 = vld [vmem:[#allocation3 + $0x120] sm:$0xff]
    %v91 = vld [vmem:[#allocation3 + $0x128] sm:$0xff]
    %v92 = vld [vmem:[#allocation3 + $0x130] sm:$0xff]
    %v93 = vld [vmem:[#allocation3 + $0x138] sm:$0xff]
    %v94 = vld [vmem:[#allocation3 + $0x140] sm:$0xff]
    %v95 = vld [vmem:[#allocation3 + $0x148] sm:$0xff]
    %v96 = vld [vmem:[#allocation3 + $0x150] sm:$0xff]
    %v97 = vld [vmem:[#allocation3 + $0x158] sm:$0xff]
    %v98 = vld [vmem:[#allocation3 + $0x160] sm:$0xff]
    %v99 = vld [vmem:[#allocation3 + $0x168] sm:$0xff]
    %v100 = vld [vmem:[#allocation3 + $0x170] sm:$0xff]
    %v101 = vld [vmem:[#allocation3 + $0x178] sm:$0xff]
    %v102 = vld [vmem:[#allocation3 + $0x180] sm:$0xff]
    %v103 = vld [vmem:[#allocation3 + $0x188] sm:$0xff]
    %v104 = vld [vmem:[#allocation3 + $0x190] sm:$0xff]
    %v105 = vld [vmem:[#allocation3 + $0x198] sm:$0xff]
    %v106 = vld [vmem:[#allocation3 + $0x1a0] sm:$0xff]
    %v107 = vld [vmem:[#allocation3 + $0x1a8] sm:$0xff]
    %v108 = vld [vmem:[#allocation3 + $0x1b0] sm:$0xff]
    %v109 = vld [vmem:[#allocation3 + $0x1b8] sm:$0xff]
    %v110 = vld [vmem:[#allocation3 + $0x1c0] sm:$0xff]
    %v111 = vld [vmem:[#allocation3 + $0x1c8] sm:$0xff]
    %v112 = vld [vmem:[#allocation3 + $0x1d0] sm:$0xff]
    %v113 = vld [vmem:[#allocation3 + $0x1d8] sm:$0xff]
    %v114 = vld [vmem:[#allocation3 + $0x1e0] sm:$0xff]
    %v115 = vld [vmem:[#allocation3 + $0x1e8] sm:$0xff]
    %v116 = vld [vmem:[#allocation3 + $0x1f0] sm:$0xff]
    %v117 = vld [vmem:[#allocation3 + $0x1f8] sm:$0xff]
    %v118 = vpack.c.bf16 %v55, %v54
    %v119 = vpack.c.bf16 %v57, %v56
    %v120 = vpack.c.bf16 %v59, %v58
    %v121 = vpack.c.bf16 %v61, %v60
    %v122 = vpack.c.bf16 %v63, %v62
    %v123 = vpack.c.bf16 %v65, %v64
    %v124 = vpack.c.bf16 %v67, %v66
    %v125 = vpack.c.bf16 %v69, %v68
    %v126 = vpack.c.bf16 %v71, %v70
    %v127 = vpack.c.bf16 %v73, %v72
    %v128 = vpack.c.bf16 %v75, %v74
    %v129 = vpack.c.bf16 %v77, %v76
    %v130 = vpack.c.bf16 %v79, %v78
    %v131 = vpack.c.bf16 %v81, %v80
    %v132 = vpack.c.bf16 %v83, %v82
    %v133 = vpack.c.bf16 %v85, %v84
    %v134 = vpack.c.bf16 %v87, %v86
    %v135 = vpack.c.bf16 %v89, %v88
    %v136 = vpack.c.bf16 %v91, %v90
    %v137 = vpack.c.bf16 %v93, %v92
    %v138 = vpack.c.bf16 %v95, %v94
    %v139 = vpack.c.bf16 %v97, %v96
    %v140 = vpack.c.bf16 %v99, %v98
    %v141 = vpack.c.bf16 %v101, %v100
    %v142 = vpack.c.bf16 %v103, %v102
    %v143 = vpack.c.bf16 %v105, %v104
    %v144 = vpack.c.bf16 %v107, %v106
    %v145 = vpack.c.bf16 %v109, %v108
    %v146 = vpack.c.bf16 %v111, %v110
    %v147 = vpack.c.bf16 %v113, %v112
    %v148 = vpack.c.bf16 %v115, %v114
    %v149 = vpack.c.bf16 %v117, %v116
    %v150 = vld [vmem:[%s1] sm:$0xff]
    %v151 = vld [vmem:[%s1 + $0x8] sm:$0xff]
    %v152 = vld [vmem:[%s1 + $0x10] sm:$0xff]
    %v153 = vld [vmem:[%s1 + $0x18] sm:$0xff]
    %v154 = vpack.c.bf16 %v151, %v150
    %v155 = vpack.c.bf16 %v153, %v152
    %v156 = vld [vmem:[%s2] sm:$0x1]
    %v158 = vlaneseq
    %v159 = vshrl.u32 %v158, 7
    %v160 = vsub.s32 0, %v159
    %v161 = vrot.slane %v156, %v160
    %vm163 = vcmask 261120
    %v165 = vsel %vm163, %v118, 0
    %v168 = vsel %vm163, %v119, 0
    %v171 = vsel %vm163, %v120, 0
    %v174 = vsel %vm163, %v121, 0
    %v177 = vsel %vm163, %v122, 0
    %v180 = vsel %vm163, %v123, 0
    %v183 = vsel %vm163, %v124, 0
    %v186 = vsel %vm163, %v125, 0
    %v189 = vsel %vm163, %v126, 0
    %v192 = vsel %vm163, %v127, 0
    %v195 = vsel %vm163, %v128, 0
    %v198 = vsel %vm163, %v129, 0
    %v201 = vsel %vm163, %v130, 0
    %v204 = vsel %vm163, %v131, 0
    %v207 = vsel %vm163, %v132, 0
    %v210 = vsel %vm163, %v133, 0
    %v213 = vsel %vm163, %v134, 0
    %v216 = vsel %vm163, %v135, 0
    %v219 = vsel %vm163, %v136, 0
    %v222 = vsel %vm163, %v137, 0
    %v225 = vsel %vm163, %v138, 0
    %v228 = vsel %vm163, %v139, 0
    %v231 = vsel %vm163, %v140, 0
    %v234 = vsel %vm163, %v141, 0
    %v237 = vsel %vm163, %v142, 0
    %v240 = vsel %vm163, %v143, 0
    %v243 = vsel %vm163, %v144, 0
    %v246 = vsel %vm163, %v145, 0
    %v249 = vsel %vm163, %v146, 0
    %v252 = vsel %vm163, %v147, 0
    %v255 = vsel %vm163, %v148, 0
    %v258 = vsel %vm163, %v149, 0
    %260 = vmatprep.subr.bf16.mxu0 0
    %261 = vmatpush1.bf16.msra.mxu0 %v154
    %262 = vmatprep.subr.bf16.mxu0 0
    %263 = vmatpush1.bf16.msra.mxu0 %v155
    %264 = vmatprep.subr.bf16.mxu0 0
    %265 = vmatpush1.bf16.msra.mxu0 0
    %266 = vmatprep.subr.bf16.mxu0 0
    %267 = vmatpush1.bf16.msra.mxu0 0
    %268 = vmatprep.subr.bf16.mxu0 0
    %269 = vmatpush1.bf16.msra.mxu0 0
    %270 = vmatprep.subr.bf16.mxu0 0
    %271 = vmatpush1.bf16.msra.mxu0 0
    %272 = vmatprep.subr.bf16.mxu0 0
    %273 = vmatpush1.bf16.msra.mxu0 0
    %274 = vmatprep.subr.bf16.mxu0 0
    %275 = vmatpush1.bf16.msra.mxu0 0
    %276 = vmatprep.subr.bf16.mxu0 0
    %277 = vmatpush1.bf16.msra.mxu0 0
    %278 = vmatprep.subr.bf16.mxu0 0
    %279 = vmatpush1.bf16.msra.mxu0 0
    %280 = vmatprep.subr.bf16.mxu0 0
    %281 = vmatpush1.bf16.msra.mxu0 0
    %282 = vmatprep.subr.bf16.mxu0 0
    %283 = vmatpush1.bf16.msra.mxu0 0
    %284 = vmatprep.subr.bf16.mxu0 0
    %285 = vmatpush1.bf16.msra.mxu0 0
    %286 = vmatprep.subr.bf16.mxu0 0
    %287 = vmatpush1.bf16.msra.mxu0 0
    %288 = vmatprep.subr.bf16.mxu0 0
    %289 = vmatpush1.bf16.msra.mxu0 0
    %290 = vmatprep.subr.bf16.mxu0 0
    %291 = vmatpush1.bf16.msra.mxu0 0
    %292 = vmatprep.mubr.bf16.mxu0 0
    %293 = vmatmul.mubr.bf16.gmra.mrb[0].mxu0 %v165
    %v294 = vpop.f32.mrb[0].mxu0
    %v295 = vadd.f32 %v161, %v294
    %v296 = vpop.f32.mrb[0].mxu0
    %v297 = vpop.f32.mrb[0].mxu0
    %v298 = vadd.f32 %v161, %v297
    %v299 = vpop.f32.mrb[0].mxu0
    %300 = vmatprep.mubr.bf16.mxu0 0
    %301 = vmatmul.mubr.bf16.gmra.mrb[0].mxu0 %v168
    %v302 = vpop.f32.mrb[0].mxu0
    %v303 = vadd.f32 %v161, %v302
    %v304 = vpop.f32.mrb[0].mxu0
    %v305 = vpop.f32.mrb[0].mxu0
    %v306 = vadd.f32 %v161, %v305
    %v307 = vpop.f32.mrb[0].mxu0
    %308 = vmatprep.mubr.bf16.mxu0 0
    %309 = vmatmul.mubr.bf16.gmra.mrb[0].mxu0 %v171
    %v310 = vpop.f32.mrb[0].mxu0
    %v311 = vadd.f32 %v161, %v310
    %v312 = vpop.f32.mrb[0].mxu0
    %v313 = vpop.f32.mrb[0].mxu0
    %v314 = vadd.f32 %v161, %v313
    %v315 = vpop.f32.mrb[0].mxu0
    %316 = vmatprep.mubr.bf16.mxu0 0
    %317 = vmatmul.mubr.bf16.gmra.mrb[0].mxu0 %v174
    %v318 = vpop.f32.mrb[0].mxu0
    %v319 = vadd.f32 %v161, %v318
    %v320 = vpop.f32.mrb[0].mxu0
    %v321 = vpop.f32.mrb[0].mxu0
    %v322 = vadd.f32 %v161, %v321
    %v323 = vpop.f32.mrb[0].mxu0
    %324 = vmatprep.mubr.bf16.mxu0 0
    %325 = vmatmul.mubr.bf16.gmra.mrb[0].mxu0 %v177
    %v326 = vpop.f32.mrb[0].mxu0
    %v327 = vadd.f32 %v161, %v326
    %v328 = vpop.f32.mrb[0].mxu0
    %v329 = vpop.f32.mrb[0].mxu0
    %v330 = vadd.f32 %v161, %v329
    %v331 = vpop.f32.mrb[0].mxu0
    %332 = vmatprep.mubr.bf16.mxu0 0
    %333 = vmatmul.mubr.bf16.gmra.mrb[0].mxu0 %v180
    %v334 = vpop.f32.mrb[0].mxu0
    %v335 = vadd.f32 %v161, %v334
    %v336 = vpop.f32.mrb[0].mxu0
    %v337 = vpop.f32.mrb[0].mxu0
    %v338 = vadd.f32 %v161, %v337
    %v339 = vpop.f32.mrb[0].mxu0
    %340 = vmatprep.mubr.bf16.mxu0 0
    %341 = vmatmul.mubr.bf16.gmra.mrb[0].mxu0 %v183
    %v342 = vpop.f32.mrb[0].mxu0
    %v343 = vadd.f32 %v161, %v342
    %v344 = vpop.f32.mrb[0].mxu0
    %v345 = vpop.f32.mrb[0].mxu0
    %v346 = vadd.f32 %v161, %v345
    %v347 = vpop.f32.mrb[0].mxu0
    %348 = vmatprep.mubr.bf16.mxu0 0
    %349 = vmatmul.mubr.bf16.gmra.mrb[0].mxu0 %v186
    %v350 = vpop.f32.mrb[0].mxu0
    %v351 = vadd.f32 %v161, %v350
    %v352 = vpop.f32.mrb[0].mxu0
    %v353 = vpop.f32.mrb[0].mxu0
    %v354 = vadd.f32 %v161, %v353
    %v355 = vpop.f32.mrb[0].mxu0
    %356 = vmatprep.mubr.bf16.mxu0 0
    %357 = vmatmul.mubr.bf16.gmra.mrb[0].mxu0 %v189
    %v358 = vpop.f32.mrb[0].mxu0
    %v359 = vadd.f32 %v161, %v358
    %v360 = vpop.f32.mrb[0].mxu0
    %v361 = vpop.f32.mrb[0].mxu0
    %v362 = vadd.f32 %v161, %v361
    %v363 = vpop.f32.mrb[0].mxu0
    %364 = vmatprep.mubr.bf16.mxu0 0
    %365 = vmatmul.mubr.bf16.gmra.mrb[0].mxu0 %v192
    %v366 = vpop.f32.mrb[0].mxu0
    %v367 = vadd.f32 %v161, %v366
    %v368 = vpop.f32.mrb[0].mxu0
    %v369 = vpop.f32.mrb[0].mxu0
    %v370 = vadd.f32 %v161, %v369
    %v371 = vpop.f32.mrb[0].mxu0
    %372 = vmatprep.mubr.bf16.mxu0 0
    %373 = vmatmul.mubr.bf16.gmra.mrb[0].mxu0 %v195
    %v374 = vpop.f32.mrb[0].mxu0
    %v375 = vadd.f32 %v161, %v374
    %v376 = vpop.f32.mrb[0].mxu0
    %v377 = vpop.f32.mrb[0].mxu0
    %v378 = vadd.f32 %v161, %v377
    %v379 = vpop.f32.mrb[0].mxu0
    %380 = vmatprep.mubr.bf16.mxu0 0
    %381 = vmatmul.mubr.bf16.gmra.mrb[0].mxu0 %v198
    %v382 = vpop.f32.mrb[0].mxu0
    %v383 = vadd.f32 %v161, %v382
    %v384 = vpop.f32.mrb[0].mxu0
    %v385 = vpop.f32.mrb[0].mxu0
    %v386 = vadd.f32 %v161, %v385
    %v387 = vpop.f32.mrb[0].mxu0
    %388 = vmatprep.mubr.bf16.mxu0 0
    %389 = vmatmul.mubr.bf16.gmra.mrb[0].mxu0 %v201
    %v390 = vpop.f32.mrb[0].mxu0
    %v391 = vadd.f32 %v161, %v390
    %v392 = vpop.f32.mrb[0].mxu0
    %v393 = vpop.f32.mrb[0].mxu0
    %v394 = vadd.f32 %v161, %v393
    %v395 = vpop.f32.mrb[0].mxu0
    %396 = vmatprep.mubr.bf16.mxu0 0
    %397 = vmatmul.mubr.bf16.gmra.mrb[0].mxu0 %v204
    %v398 = vpop.f32.mrb[0].mxu0
    %v399 = vadd.f32 %v161, %v398
    %v400 = vpop.f32.mrb[0].mxu0
    %v401 = vpop.f32.mrb[0].mxu0
    %v402 = vadd.f32 %v161, %v401
    %v403 = vpop.f32.mrb[0].mxu0
    %404 = vmatprep.mubr.bf16.mxu0 0
    %405 = vmatmul.mubr.bf16.gmra.mrb[0].mxu0 %v207
    %v406 = vpop.f32.mrb[0].mxu0
    %v407 = vadd.f32 %v161, %v406
    %v408 = vpop.f32.mrb[0].mxu0
    %v409 = vpop.f32.mrb[0].mxu0
    %v410 = vadd.f32 %v161, %v409
    %v411 = vpop.f32.mrb[0].mxu0
    %412 = vmatprep.mubr.bf16.mxu0 0
    %413 = vmatmul.mubr.bf16.gmra.mrb[0].mxu0 %v210
    %v414 = vpop.f32.mrb[0].mxu0
    %v415 = vadd.f32 %v161, %v414
    %v416 = vpop.f32.mrb[0].mxu0
    %v417 = vpop.f32.mrb[0].mxu0
    %v418 = vadd.f32 %v161, %v417
    %v419 = vpop.f32.mrb[0].mxu0
    %420 = vmatprep.mubr.bf16.mxu0 0
    %421 = vmatmul.mubr.bf16.gmra.mrb[0].mxu0 %v213
    %v422 = vpop.f32.mrb[0].mxu0
    %v423 = vadd.f32 %v161, %v422
    %v424 = vpop.f32.mrb[0].mxu0
    %v425 = vpop.f32.mrb[0].mxu0
    %v426 = vadd.f32 %v161, %v425
    %v427 = vpop.f32.mrb[0].mxu0
    %428 = vmatprep.mubr.bf16.mxu0 0
    %429 = vmatmul.mubr.bf16.gmra.mrb[0].mxu0 %v216
    %v430 = vpop.f32.mrb[0].mxu0
    %v431 = vadd.f32 %v161, %v430
    %v432 = vpop.f32.mrb[0].mxu0
    %v433 = vpop.f32.mrb[0].mxu0
    %v434 = vadd.f32 %v161, %v433
    %v435 = vpop.f32.mrb[0].mxu0
    %436 = vmatprep.mubr.bf16.mxu0 0
    %437 = vmatmul.mubr.bf16.gmra.mrb[0].mxu0 %v219
    %v438 = vpop.f32.mrb[0].mxu0
    %v439 = vadd.f32 %v161, %v438
    %v440 = vpop.f32.mrb[0].mxu0
    %v441 = vpop.f32.mrb[0].mxu0
    %v442 = vadd.f32 %v161, %v441
    %v443 = vpop.f32.mrb[0].mxu0
    %444 = vmatprep.mubr.bf16.mxu0 0
    %445 = vmatmul.mubr.bf16.gmra.mrb[0].mxu0 %v222
    %v446 = vpop.f32.mrb[0].mxu0
    %v447 = vadd.f32 %v161, %v446
    %v448 = vpop.f32.mrb[0].mxu0
    %v449 = vpop.f32.mrb[0].mxu0
    %v450 = vadd.f32 %v161, %v449
    %v451 = vpop.f32.mrb[0].mxu0
    %452 = vmatprep.mubr.bf16.mxu0 0
    %453 = vmatmul.mubr.bf16.gmra.mrb[0].mxu0 %v225
    %v454 = vpop.f32.mrb[0].mxu0
    %v455 = vadd.f32 %v161, %v454
    %v456 = vpop.f32.mrb[0].mxu0
    %v457 = vpop.f32.mrb[0].mxu0
    %v458 = vadd.f32 %v161, %v457
    %v459 = vpop.f32.mrb[0].mxu0
    %460 = vmatprep.mubr.bf16.mxu0 0
    %461 = vmatmul.mubr.bf16.gmra.mrb[0].mxu0 %v228
    %v462 = vpop.f32.mrb[0].mxu0
    %v463 = vadd.f32 %v161, %v462
    %v464 = vpop.f32.mrb[0].mxu0
    %v465 = vpop.f32.mrb[0].mxu0
    %v466 = vadd.f32 %v161, %v465
    %v467 = vpop.f32.mrb[0].mxu0
    %468 = vmatprep.mubr.bf16.mxu0 0
    %469 = vmatmul.mubr.bf16.gmra.mrb[0].mxu0 %v231
    %v470 = vpop.f32.mrb[0].mxu0
    %v471 = vadd.f32 %v161, %v470
    %v472 = vpop.f32.mrb[0].mxu0
    %v473 = vpop.f32.mrb[0].mxu0
    %v474 = vadd.f32 %v161, %v473
    %v475 = vpop.f32.mrb[0].mxu0
    %476 = vmatprep.mubr.bf16.mxu0 0
    %477 = vmatmul.mubr.bf16.gmra.mrb[0].mxu0 %v234
    %v478 = vpop.f32.mrb[0].mxu0
    %v479 = vadd.f32 %v161, %v478
    %v480 = vpop.f32.mrb[0].mxu0
    %v481 = vpop.f32.mrb[0].mxu0
    %v482 = vadd.f32 %v161, %v481
    %v483 = vpop.f32.mrb[0].mxu0
    %484 = vmatprep.mubr.bf16.mxu0 0
    %485 = vmatmul.mubr.bf16.gmra.mrb[0].mxu0 %v237
    %v486 = vpop.f32.mrb[0].mxu0
    %v487 = vadd.f32 %v161, %v486
    %v488 = vpop.f32.mrb[0].mxu0
    %v489 = vpop.f32.mrb[0].mxu0
    %v490 = vadd.f32 %v161, %v489
    %v491 = vpop.f32.mrb[0].mxu0
    %492 = vmatprep.mubr.bf16.mxu0 0
    %493 = vmatmul.mubr.bf16.gmra.mrb[0].mxu0 %v240
    %v494 = vpop.f32.mrb[0].mxu0
    %v495 = vadd.f32 %v161, %v494
    %v496 = vpop.f32.mrb[0].mxu0
    %v497 = vpop.f32.mrb[0].mxu0
    %v498 = vadd.f32 %v161, %v497
    %v499 = vpop.f32.mrb[0].mxu0
    %500 = vmatprep.mubr.bf16.mxu0 0
    %501 = vmatmul.mubr.bf16.gmra.mrb[0].mxu0 %v243
    %v502 = vpop.f32.mrb[0].mxu0
    %v503 = vadd.f32 %v161, %v502
    %v504 = vpop.f32.mrb[0].mxu0
    %v505 = vpop.f32.mrb[0].mxu0
    %v506 = vadd.f32 %v161, %v505
    %v507 = vpop.f32.mrb[0].mxu0
    %508 = vmatprep.mubr.bf16.mxu0 0
    %509 = vmatmul.mubr.bf16.gmra.mrb[0].mxu0 %v246
    %v510 = vpop.f32.mrb[0].mxu0
    %v511 = vadd.f32 %v161, %v510
    %v512 = vpop.f32.mrb[0].mxu0
    %v513 = vpop.f32.mrb[0].mxu0
    %v514 = vadd.f32 %v161, %v513
    %v515 = vpop.f32.mrb[0].mxu0
    %516 = vmatprep.mubr.bf16.mxu0 0
    %517 = vmatmul.mubr.bf16.gmra.mrb[0].mxu0 %v249
    %v518 = vpop.f32.mrb[0].mxu0
    %v519 = vadd.f32 %v161, %v518
    %v520 = vpop.f32.mrb[0].mxu0
    %v521 = vpop.f32.mrb[0].mxu0
    %v522 = vadd.f32 %v161, %v521
    %v523 = vpop.f32.mrb[0].mxu0
    %524 = vmatprep.mubr.bf16.mxu0 0
    %525 = vmatmul.mubr.bf16.gmra.mrb[0].mxu0 %v252
    %v526 = vpop.f32.mrb[0].mxu0
    %v527 = vadd.f32 %v161, %v526
    %v528 = vpop.f32.mrb[0].mxu0
    %v529 = vpop.f32.mrb[0].mxu0
    %v530 = vadd.f32 %v161, %v529
    %v531 = vpop.f32.mrb[0].mxu0
    %532 = vmatprep.mubr.bf16.mxu0 0
    %533 = vmatmul.mubr.bf16.gmra.mrb[0].mxu0 %v255
    %v534 = vpop.f32.mrb[0].mxu0
    %v535 = vadd.f32 %v161, %v534
    %v536 = vpop.f32.mrb[0].mxu0
    %v537 = vpop.f32.mrb[0].mxu0
    %v538 = vadd.f32 %v161, %v537
    %v539 = vpop.f32.mrb[0].mxu0
    %540 = vmatprep.mubr.bf16.mxu0 0
    %541 = vmatmul.mubr.bf16.gmra.mrb[0].mxu0 %v258
    %v542 = vpop.f32.mrb[0].mxu0
    %v543 = vadd.f32 %v161, %v542
    %v544 = vpop.f32.mrb[0].mxu0
    %v545 = vpop.f32.mrb[0].mxu0
    %v546 = vadd.f32 %v161, %v545
    %v547 = vpop.f32.mrb[0].mxu0
    %548 = vdwg.mxu0
    %v549 = vld [vmem:[%s3] sm:$0x1]
    %v550 = vld [vmem:[%s4] sm:$0x1]
    %v551 = vsel %vm163, %v295, 0.0
    %v552 = vsel %vm163, %v298, 0.0
    %v553 = vadd.f32 %v551, %v552
    %v554 = vsel %vm163, %v303, 0.0
    %v555 = vadd.f32 %v553, %v554
    %v556 = vsel %vm163, %v306, 0.0
    %v557 = vadd.f32 %v555, %v556
    %v558 = vsel %vm163, %v311, 0.0
    %v559 = vadd.f32 %v557, %v558
    %v560 = vsel %vm163, %v314, 0.0
    %v561 = vadd.f32 %v559, %v560
    %v562 = vsel %vm163, %v319, 0.0
    %v563 = vadd.f32 %v561, %v562
    %v564 = vsel %vm163, %v322, 0.0
    %v565 = vadd.f32 %v563, %v564
    %v566 = vsel %vm163, %v327, 0.0
    %v567 = vadd.f32 %v565, %v566
    %v568 = vsel %vm163, %v330, 0.0
    %v569 = vadd.f32 %v567, %v568
    %v570 = vsel %vm163, %v335, 0.0
    %v571 = vadd.f32 %v569, %v570
    %v572 = vsel %vm163, %v338, 0.0
    %v573 = vadd.f32 %v571, %v572
    %v574 = vsel %vm163, %v343, 0.0
    %v575 = vadd.f32 %v573, %v574
    %v576 = vsel %vm163, %v346, 0.0
    %v577 = vadd.f32 %v575, %v576
    %v578 = vsel %vm163, %v351, 0.0
    %v579 = vadd.f32 %v577, %v578
    %v580 = vsel %vm163, %v354, 0.0
    %v581 = vadd.f32 %v579, %v580
    %v582 = vsel %vm163, %v359, 0.0
    %v583 = vadd.f32 %v581, %v582
    %v584 = vsel %vm163, %v362, 0.0
    %v585 = vadd.f32 %v583, %v584
    %v586 = vsel %vm163, %v367, 0.0
    %v587 = vadd.f32 %v585, %v586
    %v588 = vsel %vm163, %v370, 0.0
    %v589 = vadd.f32 %v587, %v588
    %v590 = vsel %vm163, %v375, 0.0
    %v591 = vadd.f32 %v589, %v590
    %v592 = vsel %vm163, %v378, 0.0
    %v593 = vadd.f32 %v591, %v592
    %v594 = vsel %vm163, %v383, 0.0
    %v595 = vadd.f32 %v593, %v594
    %v596 = vsel %vm163, %v386, 0.0
    %v597 = vadd.f32 %v595, %v596
    %v598 = vsel %vm163, %v391, 0.0
    %v599 = vadd.f32 %v597, %v598
    %v600 = vsel %vm163, %v394, 0.0
    %v601 = vadd.f32 %v599, %v600
    %v602 = vsel %vm163, %v399, 0.0
    %v603 = vadd.f32 %v601, %v602
    %v604 = vsel %vm163, %v402, 0.0
    %v605 = vadd.f32 %v603, %v604
    %v606 = vsel %vm163, %v407, 0.0
    %v607 = vadd.f32 %v605, %v606
    %v608 = vsel %vm163, %v410, 0.0
    %v609 = vadd.f32 %v607, %v608
    %v610 = vsel %vm163, %v415, 0.0
    %v611 = vadd.f32 %v609, %v610
    %v612 = vsel %vm163, %v418, 0.0
    %v613 = vadd.f32 %v611, %v612
    %v614 = vsel %vm163, %v423, 0.0
    %v615 = vadd.f32 %v613, %v614
    %v616 = vsel %vm163, %v426, 0.0
    %v617 = vadd.f32 %v615, %v616
    %v618 = vsel %vm163, %v431, 0.0
    %v619 = vadd.f32 %v617, %v618
    %v620 = vsel %vm163, %v434, 0.0
    %v621 = vadd.f32 %v619, %v620
    %v622 = vsel %vm163, %v439, 0.0
    %v623 = vadd.f32 %v621, %v622
    %v624 = vsel %vm163, %v442, 0.0
    %v625 = vadd.f32 %v623, %v624
    %v626 = vsel %vm163, %v447, 0.0
    %v627 = vadd.f32 %v625, %v626
    %v628 = vsel %vm163, %v450, 0.0
    %v629 = vadd.f32 %v627, %v628
    %v630 = vsel %vm163, %v455, 0.0
    %v631 = vadd.f32 %v629, %v630
    %v632 = vsel %vm163, %v458, 0.0
    %v633 = vadd.f32 %v631, %v632
    %v634 = vsel %vm163, %v463, 0.0
    %v635 = vadd.f32 %v633, %v634
    %v636 = vsel %vm163, %v466, 0.0
    %v637 = vadd.f32 %v635, %v636
    %v638 = vsel %vm163, %v471, 0.0
    %v639 = vadd.f32 %v637, %v638
    %v640 = vsel %vm163, %v474, 0.0
    %v641 = vadd.f32 %v639, %v640
    %v642 = vsel %vm163, %v479, 0.0
    %v643 = vadd.f32 %v641, %v642
    %v644 = vsel %vm163, %v482, 0.0
    %v645 = vadd.f32 %v643, %v644
    %v646 = vsel %vm163, %v487, 0.0
    %v647 = vadd.f32 %v645, %v646
    %v648 = vsel %vm163, %v490, 0.0
    %v649 = vadd.f32 %v647, %v648
    %v650 = vsel %vm163, %v495, 0.0
    %v651 = vadd.f32 %v649, %v650
    %v652 = vsel %vm163, %v498, 0.0
    %v653 = vadd.f32 %v651, %v652
    %v654 = vsel %vm163, %v503, 0.0
    %v655 = vadd.f32 %v653, %v654
    %v656 = vsel %vm163, %v506, 0.0
    %v657 = vadd.f32 %v655, %v656
    %v658 = vsel %vm163, %v511, 0.0
    %v659 = vadd.f32 %v657, %v658
    %v660 = vsel %vm163, %v514, 0.0
    %v661 = vadd.f32 %v659, %v660
    %v662 = vsel %vm163, %v519, 0.0
    %v663 = vadd.f32 %v661, %v662
    %v664 = vsel %vm163, %v522, 0.0
    %v665 = vadd.f32 %v663, %v664
    %v666 = vsel %vm163, %v527, 0.0
    %v667 = vadd.f32 %v665, %v666
    %v668 = vsel %vm163, %v530, 0.0
    %v669 = vadd.f32 %v667, %v668
    %v670 = vsel %vm163, %v535, 0.0
    %v671 = vadd.f32 %v669, %v670
    %v672 = vsel %vm163, %v538, 0.0
    %v673 = vadd.f32 %v671, %v672
    %v674 = vsel %vm163, %v543, 0.0
    %v675 = vadd.f32 %v673, %v674
    %v676 = vsel %vm163, %v546, 0.0
    %v677 = vadd.f32 %v675, %v676
    %v678 = vrot.slane %v677, 4
    %v679 = vadd.f32 %v677, %v678
    %v680 = vrot.slane %v679, 2
    %v681 = vadd.f32 %v679, %v680
    %v682 = vrot.slane %v681, 1
    %v683 = vadd.f32 %v681, %v682
    %v684 = vmul.f32 %v683, 0.001953125
    %v685 = vmul.f32 %v295, %v295
    %v686 = vmul.f32 %v298, %v298
    %v687 = vmul.f32 %v303, %v303
    %v688 = vmul.f32 %v306, %v306
    %v689 = vmul.f32 %v311, %v311
    %v690 = vmul.f32 %v314, %v314
    %v691 = vmul.f32 %v319, %v319
    %v692 = vmul.f32 %v322, %v322
    %v693 = vmul.f32 %v327, %v327
    %v694 = vmul.f32 %v330, %v330
    %v695 = vmul.f32 %v335, %v335
    %v696 = vmul.f32 %v338, %v338
    %v697 = vmul.f32 %v343, %v343
    %v698 = vmul.f32 %v346, %v346
    %v699 = vmul.f32 %v351, %v351
    %v700 = vmul.f32 %v354, %v354
    %v701 = vmul.f32 %v359, %v359
    %v702 = vmul.f32 %v362, %v362
    %v703 = vmul.f32 %v367, %v367
    %v704 = vmul.f32 %v370, %v370
    %v705 = vmul.f32 %v375, %v375
    %v706 = vmul.f32 %v378, %v378
    %v707 = vmul.f32 %v383, %v383
    %v708 = vmul.f32 %v386, %v386
    %v709 = vmul.f32 %v391, %v391
    %v710 = vmul.f32 %v394, %v394
    %v711 = vmul.f32 %v399, %v399
    %v712 = vmul.f32 %v402, %v402
    %v713 = vmul.f32 %v407, %v407
    %v714 = vmul.f32 %v410, %v410
    %v715 = vmul.f32 %v415, %v415
    %v716 = vmul.f32 %v418, %v418
    %v717 = vmul.f32 %v423, %v423
    %v718 = vmul.f32 %v426, %v426
    %v719 = vmul.f32 %v431, %v431
    %v720 = vmul.f32 %v434, %v434
    %v721 = vmul.f32 %v439, %v439
    %v722 = vmul.f32 %v442, %v442
    %v723 = vmul.f32 %v447, %v447
    %v724 = vmul.f32 %v450, %v450
    %v725 = vmul.f32 %v455, %v455
    %v726 = vmul.f32 %v458, %v458
    %v727 = vmul.f32 %v463, %v463
    %v728 = vmul.f32 %v466, %v466
    %v729 = vmul.f32 %v471, %v471
    %v730 = vmul.f32 %v474, %v474
    %v731 = vmul.f32 %v479, %v479
    %v732 = vmul.f32 %v482, %v482
    %v733 = vmul.f32 %v487, %v487
    %v734 = vmul.f32 %v490, %v490
    %v735 = vmul.f32 %v495, %v495
    %v736 = vmul.f32 %v498, %v498
    %v737 = vmul.f32 %v503, %v503
    %v738 = vmul.f32 %v506, %v506
    %v739 = vmul.f32 %v511, %v511
    %v740 = vmul.f32 %v514, %v514
    %v741 = vmul.f32 %v519, %v519
    %v742 = vmul.f32 %v522, %v522
    %v743 = vmul.f32 %v527, %v527
    %v744 = vmul.f32 %v530, %v530
    %v745 = vmul.f32 %v535, %v535
    %v746 = vmul.f32 %v538, %v538
    %v747 = vmul.f32 %v543, %v543
    %v748 = vmul.f32 %v546, %v546
    %v749 = vsel %vm163, %v685, 0.0
    %v750 = vsel %vm163, %v686, 0.0
    %v751 = vadd.f32 %v749, %v750
    %v752 = vsel %vm163, %v687, 0.0
    %v753 = vadd.f32 %v751, %v752
    %v754 = vsel %vm163, %v688, 0.0
    %v755 = vadd.f32 %v753, %v754
    %v756 = vsel %vm163, %v689, 0.0
    %v757 = vadd.f32 %v755, %v756
    %v758 = vsel %vm163, %v690, 0.0
    %v759 = vadd.f32 %v757, %v758
    %v760 = vsel %vm163, %v691, 0.0
    %v761 = vadd.f32 %v759, %v760
    %v762 = vsel %vm163, %v692, 0.0
    %v763 = vadd.f32 %v761, %v762
    %v764 = vsel %vm163, %v693, 0.0
    %v765 = vadd.f32 %v763, %v764
    %v766 = vsel %vm163, %v694, 0.0
    %v767 = vadd.f32 %v765, %v766
    %v768 = vsel %vm163, %v695, 0.0
    %v769 = vadd.f32 %v767, %v768
    %v770 = vsel %vm163, %v696, 0.0
    %v771 = vadd.f32 %v769, %v770
    %v772 = vsel %vm163, %v697, 0.0
    %v773 = vadd.f32 %v771, %v772
    %v774 = vsel %vm163, %v698, 0.0
    %v775 = vadd.f32 %v773, %v774
    %v776 = vsel %vm163, %v699, 0.0
    %v777 = vadd.f32 %v775, %v776
    %v778 = vsel %vm163, %v700, 0.0
    %v779 = vadd.f32 %v777, %v778
    %v780 = vsel %vm163, %v701, 0.0
    %v781 = vadd.f32 %v779, %v780
    %v782 = vsel %vm163, %v702, 0.0
    %v783 = vadd.f32 %v781, %v782
    %v784 = vsel %vm163, %v703, 0.0
    %v785 = vadd.f32 %v783, %v784
    %v786 = vsel %vm163, %v704, 0.0
    %v787 = vadd.f32 %v785, %v786
    %v788 = vsel %vm163, %v705, 0.0
    %v789 = vadd.f32 %v787, %v788
    %v790 = vsel %vm163, %v706, 0.0
    %v791 = vadd.f32 %v789, %v790
    %v792 = vsel %vm163, %v707, 0.0
    %v793 = vadd.f32 %v791, %v792
    %v794 = vsel %vm163, %v708, 0.0
    %v795 = vadd.f32 %v793, %v794
    %v796 = vsel %vm163, %v709, 0.0
    %v797 = vadd.f32 %v795, %v796
    %v798 = vsel %vm163, %v710, 0.0
    %v799 = vadd.f32 %v797, %v798
    %v800 = vsel %vm163, %v711, 0.0
    %v801 = vadd.f32 %v799, %v800
    %v802 = vsel %vm163, %v712, 0.0
    %v803 = vadd.f32 %v801, %v802
    %v804 = vsel %vm163, %v713, 0.0
    %v805 = vadd.f32 %v803, %v804
    %v806 = vsel %vm163, %v714, 0.0
    %v807 = vadd.f32 %v805, %v806
    %v808 = vsel %vm163, %v715, 0.0
    %v809 = vadd.f32 %v807, %v808
    %v810 = vsel %vm163, %v716, 0.0
    %v811 = vadd.f32 %v809, %v810
    %v812 = vsel %vm163, %v717, 0.0
    %v813 = vadd.f32 %v811, %v812
    %v814 = vsel %vm163, %v718, 0.0
    %v815 = vadd.f32 %v813, %v814
    %v816 = vsel %vm163, %v719, 0.0
    %v817 = vadd.f32 %v815, %v816
    %v818 = vsel %vm163, %v720, 0.0
    %v819 = vadd.f32 %v817, %v818
    %v820 = vsel %vm163, %v721, 0.0
    %v821 = vadd.f32 %v819, %v820
    %v822 = vsel %vm163, %v722, 0.0
    %v823 = vadd.f32 %v821, %v822
    %v824 = vsel %vm163, %v723, 0.0
    %v825 = vadd.f32 %v823, %v824
    %v826 = vsel %vm163, %v724, 0.0
    %v827 = vadd.f32 %v825, %v826
    %v828 = vsel %vm163, %v725, 0.0
    %v829 = vadd.f32 %v827, %v828
    %v830 = vsel %vm163, %v726, 0.0
    %v831 = vadd.f32 %v829, %v830
    %v832 = vsel %vm163, %v727, 0.0
    %v833 = vadd.f32 %v831, %v832
    %v834 = vsel %vm163, %v728, 0.0
    %v835 = vadd.f32 %v833, %v834
    %v836 = vsel %vm163, %v729, 0.0
    %v837 = vadd.f32 %v835, %v836
    %v838 = vsel %vm163, %v730, 0.0
    %v839 = vadd.f32 %v837, %v838
    %v840 = vsel %vm163, %v731, 0.0
    %v841 = vadd.f32 %v839, %v840
    %v842 = vsel %vm163, %v732, 0.0
    %v843 = vadd.f32 %v841, %v842
    %v844 = vsel %vm163, %v733, 0.0
    %v845 = vadd.f32 %v843, %v844
    %v846 = vsel %vm163, %v734, 0.0
    %v847 = vadd.f32 %v845, %v846
    %v848 = vsel %vm163, %v735, 0.0
    %v849 = vadd.f32 %v847, %v848
    %v850 = vsel %vm163, %v736, 0.0
    %v851 = vadd.f32 %v849, %v850
    %v852 = vsel %vm163, %v737, 0.0
    %v853 = vadd.f32 %v851, %v852
    %v854 = vsel %vm163, %v738, 0.0
    %v855 = vadd.f32 %v853, %v854
    %v856 = vsel %vm163, %v739, 0.0
    %v857 = vadd.f32 %v855, %v856
    %v858 = vsel %vm163, %v740, 0.0
    %v859 = vadd.f32 %v857, %v858
    %v860 = vsel %vm163, %v741, 0.0
    %v861 = vadd.f32 %v859, %v860
    %v862 = vsel %vm163, %v742, 0.0
    %v863 = vadd.f32 %v861, %v862
    %v864 = vsel %vm163, %v743, 0.0
    %v865 = vadd.f32 %v863, %v864
    %v866 = vsel %vm163, %v744, 0.0
    %v867 = vadd.f32 %v865, %v866
    %v868 = vsel %vm163, %v745, 0.0
    %v869 = vadd.f32 %v867, %v868
    %v870 = vsel %vm163, %v746, 0.0
    %v871 = vadd.f32 %v869, %v870
    %v872 = vsel %vm163, %v747, 0.0
    %v873 = vadd.f32 %v871, %v872
    %v874 = vsel %vm163, %v748, 0.0
    %v875 = vadd.f32 %v873, %v874
    %v876 = vrot.slane %v875, 4
    %v877 = vadd.f32 %v875, %v876
    %v878 = vrot.slane %v877, 2
    %v879 = vadd.f32 %v877, %v878
    %v880 = vrot.slane %v879, 1
    %v881 = vadd.f32 %v879, %v880
    %v882 = vmul.f32 %v881, 0.001953125
    %v883 = vmul.f32 %v684, %v684
    %v884 = vsub.f32 %v882, %v883
    %v885 = vadd.f32 %v884, 1e-05
    %v886 = vrsqrt.pop %v885
    %v887 = vmul.f32 %v549, %v886
    %v888 = vmul.f32 %v684, %v887
    %v889 = vsub.f32 %v550, %v888
    %v891 = vlaneseq
    %v892 = vshrl.u32 %v891, 7
    %v893 = vsub.s32 0, %v892
    %v894 = vrot.slane %v887, %v893
    %v896 = vmul.f32 %v295, %v894
    %v897 = vmul.f32 %v298, %v894
    %v898 = vmul.f32 %v303, %v894
    %v899 = vmul.f32 %v306, %v894
    %v900 = vmul.f32 %v311, %v894
    %v901 = vmul.f32 %v314, %v894
    %v902 = vmul.f32 %v319, %v894
    %v903 = vmul.f32 %v322, %v894
    %v904 = vmul.f32 %v327, %v894
    %v905 = vmul.f32 %v330, %v894
    %v906 = vmul.f32 %v335, %v894
    %v907 = vmul.f32 %v338, %v894
    %v908 = vmul.f32 %v343, %v894
    %v909 = vmul.f32 %v346, %v894
    %v910 = vmul.f32 %v351, %v894
    %v911 = vmul.f32 %v354, %v894
    %v912 = vmul.f32 %v359, %v894
    %v913 = vmul.f32 %v362, %v894
    %v914 = vmul.f32 %v367, %v894
    %v915 = vmul.f32 %v370, %v894
    %v916 = vmul.f32 %v375, %v894
    %v917 = vmul.f32 %v378, %v894
    %v918 = vmul.f32 %v383, %v894
    %v919 = vmul.f32 %v386, %v894
    %v920 = vmul.f32 %v391, %v894
    %v921 = vmul.f32 %v394, %v894
    %v922 = vmul.f32 %v399, %v894
    %v923 = vmul.f32 %v402, %v894
    %v924 = vmul.f32 %v407, %v894
    %v925 = vmul.f32 %v410, %v894
    %v926 = vmul.f32 %v415, %v894
    %v927 = vmul.f32 %v418, %v894
    %v928 = vmul.f32 %v423, %v894
    %v929 = vmul.f32 %v426, %v894
    %v930 = vmul.f32 %v431, %v894
    %v931 = vmul.f32 %v434, %v894
    %v932 = vmul.f32 %v439, %v894
    %v933 = vmul.f32 %v442, %v894
    %v934 = vmul.f32 %v447, %v894
    %v935 = vmul.f32 %v450, %v894
    %v936 = vmul.f32 %v455, %v894
    %v937 = vmul.f32 %v458, %v894
    %v938 = vmul.f32 %v463, %v894
    %v939 = vmul.f32 %v466, %v894
    %v940 = vmul.f32 %v471, %v894
    %v941 = vmul.f32 %v474, %v894
    %v942 = vmul.f32 %v479, %v894
    %v943 = vmul.f32 %v482, %v894
    %v944 = vmul.f32 %v487, %v894
    %v945 = vmul.f32 %v490, %v894
    %v946 = vmul.f32 %v495, %v894
    %v947 = vmul.f32 %v498, %v894
    %v948 = vmul.f32 %v503, %v894
    %v949 = vmul.f32 %v506, %v894
    %v950 = vmul.f32 %v511, %v894
    %v951 = vmul.f32 %v514, %v894
    %v952 = vmul.f32 %v519, %v894
    %v953 = vmul.f32 %v522, %v894
    %v954 = vmul.f32 %v527, %v894
    %v955 = vmul.f32 %v530, %v894
    %v956 = vmul.f32 %v535, %v894
    %v957 = vmul.f32 %v538, %v894
    %v958 = vmul.f32 %v543, %v894
    %v959 = vmul.f32 %v546, %v894
    %v961 = vlaneseq
    %v962 = vshrl.u32 %v961, 7
    %v963 = vsub.s32 0, %v962
    %v964 = vrot.slane %v889, %v963
    %v966 = vadd.f32 %v896, %v964
    %v967 = vadd.f32 %v897, %v964
    %v968 = vadd.f32 %v898, %v964
    %v969 = vadd.f32 %v899, %v964
    %v970 = vadd.f32 %v900, %v964
    %v971 = vadd.f32 %v901, %v964
    %v972 = vadd.f32 %v902, %v964
    %v973 = vadd.f32 %v903, %v964
    %v974 = vadd.f32 %v904, %v964
    %v975 = vadd.f32 %v905, %v964
    %v976 = vadd.f32 %v906, %v964
    %v977 = vadd.f32 %v907, %v964
    %v978 = vadd.f32 %v908, %v964
    %v979 = vadd.f32 %v909, %v964
    %v980 = vadd.f32 %v910, %v964
    %v981 = vadd.f32 %v911, %v964
    %v982 = vadd.f32 %v912, %v964
    %v983 = vadd.f32 %v913, %v964
    %v984 = vadd.f32 %v914, %v964
    %v985 = vadd.f32 %v915, %v964
    %v986 = vadd.f32 %v916, %v964
    %v987 = vadd.f32 %v917, %v964
    %v988 = vadd.f32 %v918, %v964
    %v989 = vadd.f32 %v919, %v964
    %v990 = vadd.f32 %v920, %v964
    %v991 = vadd.f32 %v921, %v964
    %v992 = vadd.f32 %v922, %v964
    %v993 = vadd.f32 %v923, %v964
    %v994 = vadd.f32 %v924, %v964
    %v995 = vadd.f32 %v925, %v964
    %v996 = vadd.f32 %v926, %v964
    %v997 = vadd.f32 %v927, %v964
    %v998 = vadd.f32 %v928, %v964
    %v999 = vadd.f32 %v929, %v964
    %v1000 = vadd.f32 %v930, %v964
    %v1001 = vadd.f32 %v931, %v964
    %v1002 = vadd.f32 %v932, %v964
    %v1003 = vadd.f32 %v933, %v964
    %v1004 = vadd.f32 %v934, %v964
    %v1005 = vadd.f32 %v935, %v964
    %v1006 = vadd.f32 %v936, %v964
    %v1007 = vadd.f32 %v937, %v964
    %v1008 = vadd.f32 %v938, %v964
    %v1009 = vadd.f32 %v939, %v964
    %v1010 = vadd.f32 %v940, %v964
    %v1011 = vadd.f32 %v941, %v964
    %v1012 = vadd.f32 %v942, %v964
    %v1013 = vadd.f32 %v943, %v964
    %v1014 = vadd.f32 %v944, %v964
    %v1015 = vadd.f32 %v945, %v964
    %v1016 = vadd.f32 %v946, %v964
    %v1017 = vadd.f32 %v947, %v964
    %v1018 = vadd.f32 %v948, %v964
    %v1019 = vadd.f32 %v949, %v964
    %v1020 = vadd.f32 %v950, %v964
    %v1021 = vadd.f32 %v951, %v964
    %v1022 = vadd.f32 %v952, %v964
    %v1023 = vadd.f32 %v953, %v964
    %v1024 = vadd.f32 %v954, %v964
    %v1025 = vadd.f32 %v955, %v964
    %v1026 = vadd.f32 %v956, %v964
    %v1027 = vadd.f32 %v957, %v964
    %v1028 = vadd.f32 %v958, %v964
    %v1029 = vadd.f32 %v959, %v964
    %v1030 = vmax.f32 %v966, 0.0
    %v1031 = vmax.f32 %v967, 0.0
    %v1032 = vmax.f32 %v968, 0.0
    %v1033 = vmax.f32 %v969, 0.0
    %v1034 = vmax.f32 %v970, 0.0
    %v1035 = vmax.f32 %v971, 0.0
    %v1036 = vmax.f32 %v972, 0.0
    %v1037 = vmax.f32 %v973, 0.0
    %v1038 = vmax.f32 %v974, 0.0
    %v1039 = vmax.f32 %v975, 0.0
    %v1040 = vmax.f32 %v976, 0.0
    %v1041 = vmax.f32 %v977, 0.0
    %v1042 = vmax.f32 %v978, 0.0
    %v1043 = vmax.f32 %v979, 0.0
    %v1044 = vmax.f32 %v980, 0.0
    %v1045 = vmax.f32 %v981, 0.0
    %v1046 = vmax.f32 %v982, 0.0
    %v1047 = vmax.f32 %v983, 0.0
    %v1048 = vmax.f32 %v984, 0.0
    %v1049 = vmax.f32 %v985, 0.0
    %v1050 = vmax.f32 %v986, 0.0
    %v1051 = vmax.f32 %v987, 0.0
    %v1052 = vmax.f32 %v988, 0.0
    %v1053 = vmax.f32 %v989, 0.0
    %v1054 = vmax.f32 %v990, 0.0
    %v1055 = vmax.f32 %v991, 0.0
    %v1056 = vmax.f32 %v992, 0.0
    %v1057 = vmax.f32 %v993, 0.0
    %v1058 = vmax.f32 %v994, 0.0
    %v1059 = vmax.f32 %v995, 0.0
    %v1060 = vmax.f32 %v996, 0.0
    %v1061 = vmax.f32 %v997, 0.0
    %v1062 = vmax.f32 %v998, 0.0
    %v1063 = vmax.f32 %v999, 0.0
    %v1064 = vmax.f32 %v1000, 0.0
    %v1065 = vmax.f32 %v1001, 0.0
    %v1066 = vmax.f32 %v1002, 0.0
    %v1067 = vmax.f32 %v1003, 0.0
    %v1068 = vmax.f32 %v1004, 0.0
    %v1069 = vmax.f32 %v1005, 0.0
    %v1070 = vmax.f32 %v1006, 0.0
    %v1071 = vmax.f32 %v1007, 0.0
    %v1072 = vmax.f32 %v1008, 0.0
    %v1073 = vmax.f32 %v1009, 0.0
    %v1074 = vmax.f32 %v1010, 0.0
    %v1075 = vmax.f32 %v1011, 0.0
    %v1076 = vmax.f32 %v1012, 0.0
    %v1077 = vmax.f32 %v1013, 0.0
    %v1078 = vmax.f32 %v1014, 0.0
    %v1079 = vmax.f32 %v1015, 0.0
    %v1080 = vmax.f32 %v1016, 0.0
    %v1081 = vmax.f32 %v1017, 0.0
    %v1082 = vmax.f32 %v1018, 0.0
    %v1083 = vmax.f32 %v1019, 0.0
    %v1084 = vmax.f32 %v1020, 0.0
    %v1085 = vmax.f32 %v1021, 0.0
    %v1086 = vmax.f32 %v1022, 0.0
    %v1087 = vmax.f32 %v1023, 0.0
    %v1088 = vmax.f32 %v1024, 0.0
    %v1089 = vmax.f32 %v1025, 0.0
    %v1090 = vmax.f32 %v1026, 0.0
    %v1091 = vmax.f32 %v1027, 0.0
    %v1092 = vmax.f32 %v1028, 0.0
    %v1093 = vmax.f32 %v1029, 0.0
    %1094 = vst.msk [vmem:[#allocation2] sm:$0xff] %vm163, 0.0
    %1095 = vst.msk [vmem:[#allocation2 + $0x8] sm:$0xff] %vm163, 0.0
    %vm1096 = vcmask 254976
    %1097 = vst.msk [vmem:[#allocation2 + $0x10] sm:$0x3] %vm1096, 0.0
    %1098 = vst.msk [vmem:[#allocation2 + $0x18] sm:$0xff] %vm163, 0.0
    %1099 = vst.msk [vmem:[#allocation2 + $0x20] sm:$0xff] %vm163, 0.0
    %1100 = vst.msk [vmem:[#allocation2 + $0x28] sm:$0x3] %vm1096, 0.0
    %1101 = vst.msk [vmem:[#allocation2 + $0x30] sm:$0xff] %vm163, 0.0
    %1102 = vst.msk [vmem:[#allocation2 + $0x38] sm:$0xff] %vm163, 0.0
    %1103 = vst.msk [vmem:[#allocation2 + $0x40] sm:$0x3] %vm1096, 0.0
    %1104 = vst.msk [vmem:[#allocation2 + $0x48] sm:$0xff] %vm163, 0.0
    %1105 = vst.msk [vmem:[#allocation2 + $0x50] sm:$0xff] %vm163, 0.0
    %1106 = vst.msk [vmem:[#allocation2 + $0x58] sm:$0x3] %vm1096, 0.0
    %1107 = vst.msk [vmem:[#allocation2 + $0x60] sm:$0xff] %vm163, 0.0
    %1108 = vst.msk [vmem:[#allocation2 + $0x68] sm:$0xff] %vm163, 0.0
    %1109 = vst.msk [vmem:[#allocation2 + $0x70] sm:$0x3] %vm1096, 0.0
    %1110 = vst.msk [vmem:[#allocation2 + $0x78] sm:$0xff] %vm163, 0.0
    %1111 = vst.msk [vmem:[#allocation2 + $0x80] sm:$0xff] %vm163, 0.0
    %1112 = vst.msk [vmem:[#allocation2 + $0x88] sm:$0x3] %vm1096, 0.0
    %1113 = vst.msk [vmem:[#allocation2 + $0x90] sm:$0xff] %vm163, 0.0
    %1114 = vst.msk [vmem:[#allocation2 + $0x98] sm:$0xff] %vm163, 0.0
    %1115 = vst.msk [vmem:[#allocation2 + $0xa0] sm:$0x3] %vm1096, 0.0
    %1116 = vst.msk [vmem:[#allocation2 + $0xa8] sm:$0xff] %vm163, 0.0
    %1117 = vst.msk [vmem:[#allocation2 + $0xb0] sm:$0xff] %vm163, 0.0
    %1118 = vst.msk [vmem:[#allocation2 + $0xb8] sm:$0x3] %vm1096, 0.0
    %1119 = vst.msk [vmem:[#allocation2 + $0xc0] sm:$0xff] %vm163, 0.0
    %1120 = vst.msk [vmem:[#allocation2 + $0xc8] sm:$0xff] %vm163, 0.0
    %1121 = vst.msk [vmem:[#allocation2 + $0xd0] sm:$0x3] %vm1096, 0.0
    %1122 = vst.msk [vmem:[#allocation2 + $0xd8] sm:$0xff] %vm163, 0.0
    %1123 = vst.msk [vmem:[#allocation2 + $0xe0] sm:$0xff] %vm163, 0.0
    %1124 = vst.msk [vmem:[#allocation2 + $0xe8] sm:$0x3] %vm1096, 0.0
    %1125 = vst.msk [vmem:[#allocation2 + $0xf0] sm:$0xff] %vm163, 0.0
    %1126 = vst.msk [vmem:[#allocation2 + $0xf8] sm:$0xff] %vm163, 0.0
    %1127 = vst.msk [vmem:[#allocation2 + $0x100] sm:$0x3] %vm1096, 0.0
    %1128 = vst.msk [vmem:[#allocation2 + $0x108] sm:$0xff] %vm163, 0.0
    %1129 = vst.msk [vmem:[#allocation2 + $0x110] sm:$0xff] %vm163, 0.0
    %1130 = vst.msk [vmem:[#allocation2 + $0x118] sm:$0x3] %vm1096, 0.0
    %1131 = vst.msk [vmem:[#allocation2 + $0x120] sm:$0xff] %vm163, 0.0
    %1132 = vst.msk [vmem:[#allocation2 + $0x128] sm:$0xff] %vm163, 0.0
    %1133 = vst.msk [vmem:[#allocation2 + $0x130] sm:$0x3] %vm1096, 0.0
    %1134 = vst.msk [vmem:[#allocation2 + $0x138] sm:$0xff] %vm163, 0.0
    %1135 = vst.msk [vmem:[#allocation2 + $0x140] sm:$0xff] %vm163, 0.0
    %1136 = vst.msk [vmem:[#allocation2 + $0x148] sm:$0x3] %vm1096, 0.0
    %1137 = vst.msk [vmem:[#allocation2 + $0x150] sm:$0xff] %vm163, 0.0
    %1138 = vst.msk [vmem:[#allocation2 + $0x158] sm:$0xff] %vm163, 0.0
    %1139 = vst.msk [vmem:[#allocation2 + $0x160] sm:$0x3] %vm1096, 0.0
    %1140 = vst.msk [vmem:[#allocation2 + $0x168] sm:$0xff] %vm163, 0.0
    %1141 = vst.msk [vmem:[#allocation2 + $0x170] sm:$0xff] %vm163, 0.0
    %1142 = vst.msk [vmem:[#allocation2 + $0x178] sm:$0x3] %vm1096, 0.0
    %1143 = vst.msk [vmem:[#allocation2 + $0x180] sm:$0xff] %vm163, 0.0
    %1144 = vst.msk [vmem:[#allocation2 + $0x188] sm:$0xff] %vm163, 0.0
    %1145 = vst.msk [vmem:[#allocation2 + $0x190] sm:$0x3] %vm1096, 0.0
    %1146 = vst.msk [vmem:[#allocation2 + $0x198] sm:$0xff] %vm163, 0.0
    %1147 = vst.msk [vmem:[#allocation2 + $0x1a0] sm:$0xff] %vm163, 0.0
    %1148 = vst.msk [vmem:[#allocation2 + $0x1a8] sm:$0x3] %vm1096, 0.0
    %1149 = vst.msk [vmem:[#allocation2 + $0x1b0] sm:$0xff] %vm163, 0.0
    %1150 = vst.msk [vmem:[#allocation2 + $0x1b8] sm:$0xff] %vm163, 0.0
    %1151 = vst.msk [vmem:[#allocation2 + $0x1c0] sm:$0x3] %vm1096, 0.0
    %1152 = vst.msk [vmem:[#allocation2 + $0x1c8] sm:$0xff] %vm163, 0.0
    %1153 = vst.msk [vmem:[#allocation2 + $0x1d0] sm:$0xff] %vm163, 0.0
    %1154 = vst.msk [vmem:[#allocation2 + $0x1d8] sm:$0x3] %vm1096, 0.0
    %1155 = vst.msk [vmem:[#allocation2 + $0x1e0] sm:$0xff] %vm163, 0.0
    %1156 = vst.msk [vmem:[#allocation2 + $0x1e8] sm:$0xff] %vm163, 0.0
    %1157 = vst.msk [vmem:[#allocation2 + $0x1f0] sm:$0x3] %vm1096, 0.0
    %1158 = vst.msk [vmem:[#allocation2 + $0x1f8] sm:$0xff] %vm163, 0.0
    %1159 = vst.msk [vmem:[#allocation2 + $0x200] sm:$0xff] %vm163, 0.0
    %1160 = vst.msk [vmem:[#allocation2 + $0x208] sm:$0x3] %vm1096, 0.0
    %1161 = vst.msk [vmem:[#allocation2 + $0x210] sm:$0xff] %vm163, 0.0
    %1162 = vst.msk [vmem:[#allocation2 + $0x218] sm:$0xff] %vm163, 0.0
    %1163 = vst.msk [vmem:[#allocation2 + $0x220] sm:$0x3] %vm1096, 0.0
    %1164 = vst.msk [vmem:[#allocation2 + $0x228] sm:$0xff] %vm163, 0.0
    %1165 = vst.msk [vmem:[#allocation2 + $0x230] sm:$0xff] %vm163, 0.0
    %1166 = vst.msk [vmem:[#allocation2 + $0x238] sm:$0x3] %vm1096, 0.0
    %1167 = vst.msk [vmem:[#allocation2 + $0x240] sm:$0xff] %vm163, 0.0
    %1168 = vst.msk [vmem:[#allocation2 + $0x248] sm:$0xff] %vm163, 0.0
    %1169 = vst.msk [vmem:[#allocation2 + $0x250] sm:$0x3] %vm1096, 0.0
    %1170 = vst.msk [vmem:[#allocation2 + $0x258] sm:$0xff] %vm163, 0.0
    %1171 = vst.msk [vmem:[#allocation2 + $0x260] sm:$0xff] %vm163, 0.0
    %1172 = vst.msk [vmem:[#allocation2 + $0x268] sm:$0x3] %vm1096, 0.0
    %1173 = vst.msk [vmem:[#allocation2 + $0x270] sm:$0xff] %vm163, 0.0
    %1174 = vst.msk [vmem:[#allocation2 + $0x278] sm:$0xff] %vm163, 0.0
    %1175 = vst.msk [vmem:[#allocation2 + $0x280] sm:$0x3] %vm1096, 0.0
    %1176 = vst.msk [vmem:[#allocation2 + $0x288] sm:$0xff] %vm163, 0.0
    %1177 = vst.msk [vmem:[#allocation2 + $0x290] sm:$0xff] %vm163, 0.0
    %1178 = vst.msk [vmem:[#allocation2 + $0x298] sm:$0x3] %vm1096, 0.0
    %1179 = vst.msk [vmem:[#allocation2 + $0x2a0] sm:$0xff] %vm163, 0.0
    %1180 = vst.msk [vmem:[#allocation2 + $0x2a8] sm:$0xff] %vm163, 0.0
    %1181 = vst.msk [vmem:[#allocation2 + $0x2b0] sm:$0x3] %vm1096, 0.0
    %1182 = vst.msk [vmem:[#allocation2 + $0x2b8] sm:$0xff] %vm163, 0.0
    %1183 = vst.msk [vmem:[#allocation2 + $0x2c0] sm:$0xff] %vm163, 0.0
    %1184 = vst.msk [vmem:[#allocation2 + $0x2c8] sm:$0x3] %vm1096, 0.0
    %1185 = vst.msk [vmem:[#allocation2 + $0x2d0] sm:$0xff] %vm163, 0.0
    %1186 = vst.msk [vmem:[#allocation2 + $0x2d8] sm:$0xff] %vm163, 0.0
    %1187 = vst.msk [vmem:[#allocation2 + $0x2e0] sm:$0x3] %vm1096, 0.0
    %1188 = vst.msk [vmem:[#allocation2 + $0x2e8] sm:$0xff] %vm163, 0.0
    %1189 = vst.msk [vmem:[#allocation2 + $0x2f0] sm:$0xff] %vm163, 0.0
    %1190 = vst.msk [vmem:[#allocation2 + $0x2f8] sm:$0x3] %vm1096, 0.0
    %1191 = vst.msk [vmem:[#allocation2 + $0x300] sm:$0xff] %vm163, 0.0
    %1192 = vst.msk [vmem:[#allocation2 + $0x308] sm:$0xff] %vm163, 0.0
    %1193 = vst.msk [vmem:[#allocation2 + $0x310] sm:$0x3] %vm1096, 0.0
    %1194 = vst.msk [vmem:[#allocation2 + $0x318] sm:$0xff] %vm163, 0.0
    %1195 = vst.msk [vmem:[#allocation2 + $0x320] sm:$0xff] %vm163, 0.0
    %1196 = vst.msk [vmem:[#allocation2 + $0x328] sm:$0x3] %vm1096, 0.0
    %1197 = vst.msk [vmem:[#allocation2 + $0x330] sm:$0xff] %vm163, 0.0
    %1198 = vst.msk [vmem:[#allocation2 + $0x338] sm:$0xff] %vm163, 0.0
    %1199 = vst.msk [vmem:[#allocation2 + $0x340] sm:$0x3] %vm1096, 0.0
    %1200 = vst.msk [vmem:[#allocation2 + $0x348] sm:$0xff] %vm163, 0.0
    %1201 = vst.msk [vmem:[#allocation2 + $0x350] sm:$0xff] %vm163, 0.0
    %1202 = vst.msk [vmem:[#allocation2 + $0x358] sm:$0x3] %vm1096, 0.0
    %s1203 = scalar_lea.vmem [#allocation2], 24
    %1204 = vst.msk [vmem:[%s1203 + $0x1] sm:$0xff] %vm163, %v1030
    %1205 = vst.msk [vmem:[%s1203 + $0x9] sm:$0xff] %vm163, %v1031
    %1206 = vst.msk [vmem:[%s1203 + $0x19] sm:$0xff] %vm163, %v1032
    %1207 = vst.msk [vmem:[%s1203 + $0x21] sm:$0xff] %vm163, %v1033
    %1208 = vst.msk [vmem:[%s1203 + $0x31] sm:$0xff] %vm163, %v1034
    %1209 = vst.msk [vmem:[%s1203 + $0x39] sm:$0xff] %vm163, %v1035
    %1210 = vst.msk [vmem:[%s1203 + $0x49] sm:$0xff] %vm163, %v1036
    %1211 = vst.msk [vmem:[%s1203 + $0x51] sm:$0xff] %vm163, %v1037
    %1212 = vst.msk [vmem:[%s1203 + $0x61] sm:$0xff] %vm163, %v1038
    %1213 = vst.msk [vmem:[%s1203 + $0x69] sm:$0xff] %vm163, %v1039
    %1214 = vst.msk [vmem:[%s1203 + $0x79] sm:$0xff] %vm163, %v1040
    %1215 = vst.msk [vmem:[%s1203 + $0x81] sm:$0xff] %vm163, %v1041
    %1216 = vst.msk [vmem:[%s1203 + $0x91] sm:$0xff] %vm163, %v1042
    %1217 = vst.msk [vmem:[%s1203 + $0x99] sm:$0xff] %vm163, %v1043
    %1218 = vst.msk [vmem:[%s1203 + $0xa9] sm:$0xff] %vm163, %v1044
    %1219 = vst.msk [vmem:[%s1203 + $0xb1] sm:$0xff] %vm163, %v1045
    %1220 = vst.msk [vmem:[%s1203 + $0xc1] sm:$0xff] %vm163, %v1046
    %1221 = vst.msk [vmem:[%s1203 + $0xc9] sm:$0xff] %vm163, %v1047
    %1222 = vst.msk [vmem:[%s1203 + $0xd9] sm:$0xff] %vm163, %v1048
    %1223 = vst.msk [vmem:[%s1203 + $0xe1] sm:$0xff] %vm163, %v1049
    %1224 = vst.msk [vmem:[%s1203 + $0xf1] sm:$0xff] %vm163, %v1050
    %1225 = vst.msk [vmem:[%s1203 + $0xf9] sm:$0xff] %vm163, %v1051
    %1226 = vst.msk [vmem:[%s1203 + $0x109] sm:$0xff] %vm163, %v1052
    %1227 = vst.msk [vmem:[%s1203 + $0x111] sm:$0xff] %vm163, %v1053
    %1228 = vst.msk [vmem:[%s1203 + $0x121] sm:$0xff] %vm163, %v1054
    %1229 = vst.msk [vmem:[%s1203 + $0x129] sm:$0xff] %vm163, %v1055
    %1230 = vst.msk [vmem:[%s1203 + $0x139] sm:$0xff] %vm163, %v1056
    %1231 = vst.msk [vmem:[%s1203 + $0x141] sm:$0xff] %vm163, %v1057
    %1232 = vst.msk [vmem:[%s1203 + $0x151] sm:$0xff] %vm163, %v1058
    %1233 = vst.msk [vmem:[%s1203 + $0x159] sm:$0xff] %vm163, %v1059
    %1234 = vst.msk [vmem:[%s1203 + $0x169] sm:$0xff] %vm163, %v1060
    %1235 = vst.msk [vmem:[%s1203 + $0x171] sm:$0xff] %vm163, %v1061
    %1236 = vst.msk [vmem:[%s1203 + $0x1b1] sm:$0xff] %vm163, %v1062
    %1237 = vst.msk [vmem:[%s1203 + $0x1b9] sm:$0xff] %vm163, %v1063
    %1238 = vst.msk [vmem:[%s1203 + $0x1c9] sm:$0xff] %vm163, %v1064
    %1239 = vst.msk [vmem:[%s1203 + $0x1d1] sm:$0xff] %vm163, %v1065
    %1240 = vst.msk [vmem:[%s1203 + $0x1e1] sm:$0xff] %vm163, %v1066
    %1241 = vst.msk [vmem:[%s1203 + $0x1e9] sm:$0xff] %vm163, %v1067
    %1242 = vst.msk [vmem:[%s1203 + $0x1f9] sm:$0xff] %vm163, %v1068
    %1243 = vst.msk [vmem:[%s1203 + $0x201] sm:$0xff] %vm163, %v1069
    %1244 = vst.msk [vmem:[%s1203 + $0x211] sm:$0xff] %vm163, %v1070
    %1245 = vst.msk [vmem:[%s1203 + $0x219] sm:$0xff] %vm163, %v1071
    %1246 = vst.msk [vmem:[%s1203 + $0x229] sm:$0xff] %vm163, %v1072
    %1247 = vst.msk [vmem:[%s1203 + $0x231] sm:$0xff] %vm163, %v1073
    %1248 = vst.msk [vmem:[%s1203 + $0x241] sm:$0xff] %vm163, %v1074
    %1249 = vst.msk [vmem:[%s1203 + $0x249] sm:$0xff] %vm163, %v1075
    %1250 = vst.msk [vmem:[%s1203 + $0x259] sm:$0xff] %vm163, %v1076
    %1251 = vst.msk [vmem:[%s1203 + $0x261] sm:$0xff] %vm163, %v1077
    %1252 = vst.msk [vmem:[%s1203 + $0x271] sm:$0xff] %vm163, %v1078
    %1253 = vst.msk [vmem:[%s1203 + $0x279] sm:$0xff] %vm163, %v1079
    %1254 = vst.msk [vmem:[%s1203 + $0x289] sm:$0xff] %vm163, %v1080
    %1255 = vst.msk [vmem:[%s1203 + $0x291] sm:$0xff] %vm163, %v1081
    %1256 = vst.msk [vmem:[%s1203 + $0x2a1] sm:$0xff] %vm163, %v1082
    %1257 = vst.msk [vmem:[%s1203 + $0x2a9] sm:$0xff] %vm163, %v1083
    %1258 = vst.msk [vmem:[%s1203 + $0x2b9] sm:$0xff] %vm163, %v1084
    %1259 = vst.msk [vmem:[%s1203 + $0x2c1] sm:$0xff] %vm163, %v1085
    %1260 = vst.msk [vmem:[%s1203 + $0x2d1] sm:$0xff] %vm163, %v1086
    %1261 = vst.msk [vmem:[%s1203 + $0x2d9] sm:$0xff] %vm163, %v1087
    %1262 = vst.msk [vmem:[%s1203 + $0x2e9] sm:$0xff] %vm163, %v1088
    %1263 = vst.msk [vmem:[%s1203 + $0x2f1] sm:$0xff] %vm163, %v1089
    %1264 = vst.msk [vmem:[%s1203 + $0x301] sm:$0xff] %vm163, %v1090
    %1265 = vst.msk [vmem:[%s1203 + $0x309] sm:$0xff] %vm163, %v1091
    %1266 = vst.msk [vmem:[%s1203 + $0x319] sm:$0xff] %vm163, %v1092
    %1267 = vst.msk [vmem:[%s1203 + $0x321] sm:$0xff] %vm163, %v1093
    %v1268 = vld [vmem:[#allocation2] sm:$0xff]
    %v1269 = vld [vmem:[#allocation2 + $0x8] sm:$0xff]
    %v1270 = vld [vmem:[#allocation2 + $0x18] sm:$0xff]
    %v1271 = vld [vmem:[#allocation2 + $0x20] sm:$0xff]
    %v1272 = vld [vmem:[#allocation2 + $0x30] sm:$0xff]
    %v1273 = vld [vmem:[#allocation2 + $0x38] sm:$0xff]
    %v1274 = vld [vmem:[#allocation2 + $0x48] sm:$0xff]
    %v1275 = vld [vmem:[#allocation2 + $0x50] sm:$0xff]
    %v1276 = vld [vmem:[#allocation2 + $0x60] sm:$0xff]
    %v1277 = vld [vmem:[#allocation2 + $0x68] sm:$0xff]
    %v1278 = vld [vmem:[#allocation2 + $0x78] sm:$0xff]
    %v1279 = vld [vmem:[#allocation2 + $0x80] sm:$0xff]
    %v1280 = vld [vmem:[#allocation2 + $0x90] sm:$0xff]
    %v1281 = vld [vmem:[#allocation2 + $0x98] sm:$0xff]
    %v1282 = vld [vmem:[#allocation2 + $0xa8] sm:$0xff]
    %v1283 = vld [vmem:[#allocation2 + $0xb0] sm:$0xff]
    %v1284 = vld [vmem:[#allocation2 + $0xc0] sm:$0xff]
    %v1285 = vld [vmem:[#allocation2 + $0xc8] sm:$0xff]
    %v1286 = vld [vmem:[#allocation2 + $0xd8] sm:$0xff]
    %v1287 = vld [vmem:[#allocation2 + $0xe0] sm:$0xff]
    %v1288 = vld [vmem:[#allocation2 + $0xf0] sm:$0xff]
    %v1289 = vld [vmem:[#allocation2 + $0xf8] sm:$0xff]
    %v1290 = vld [vmem:[#allocation2 + $0x108] sm:$0xff]
    %v1291 = vld [vmem:[#allocation2 + $0x110] sm:$0xff]
    %v1292 = vld [vmem:[#allocation2 + $0x120] sm:$0xff]
    %v1293 = vld [vmem:[#allocation2 + $0x128] sm:$0xff]
    %v1294 = vld [vmem:[#allocation2 + $0x138] sm:$0xff]
    %v1295 = vld [vmem:[#allocation2 + $0x140] sm:$0xff]
    %v1296 = vld [vmem:[#allocation2 + $0x150] sm:$0xff]
    %v1297 = vld [vmem:[#allocation2 + $0x158] sm:$0xff]
    %v1298 = vld [vmem:[#allocation2 + $0x168] sm:$0xff]
    %v1299 = vld [vmem:[#allocation2 + $0x170] sm:$0xff]
    %v1300 = vld [vmem:[#allocation2 + $0x1b0] sm:$0xff]
    %v1301 = vld [vmem:[#allocation2 + $0x1b8] sm:$0xff]
    %v1302 = vld [vmem:[#allocation2 + $0x1c8] sm:$0xff]
    %v1303 = vld [vmem:[#allocation2 + $0x1d0] sm:$0xff]
    %v1304 = vld [vmem:[#allocation2 + $0x1e0] sm:$0xff]
    %v1305 = vld [vmem:[#allocation2 + $0x1e8] sm:$0xff]
    %v1306 = vld [vmem:[#allocation2 + $0x1f8] sm:$0xff]
    %v1307 = vld [vmem:[#allocation2 + $0x200] sm:$0xff]
    %v1308 = vld [vmem:[#allocation2 + $0x210] sm:$0xff]
    %v1309 = vld [vmem:[#allocation2 + $0x218] sm:$0xff]
    %v1310 = vld [vmem:[#allocation2 + $0x228] sm:$0xff]
    %v1311 = vld [vmem:[#allocation2 + $0x230] sm:$0xff]
    %v1312 = vld [vmem:[#allocation2 + $0x240] sm:$0xff]
    %v1313 = vld [vmem:[#allocation2 + $0x248] sm:$0xff]
    %v1314 = vld [vmem:[#allocation2 + $0x258] sm:$0xff]
    %v1315 = vld [vmem:[#allocation2 + $0x260] sm:$0xff]
    %v1316 = vld [vmem:[#allocation2 + $0x270] sm:$0xff]
    %v1317 = vld [vmem:[#allocation2 + $0x278] sm:$0xff]
    %v1318 = vld [vmem:[#allocation2 + $0x288] sm:$0xff]
    %v1319 = vld [vmem:[#allocation2 + $0x290] sm:$0xff]
    %v1320 = vld [vmem:[#allocation2 + $0x2a0] sm:$0xff]
    %v1321 = vld [vmem:[#allocation2 + $0x2a8] sm:$0xff]
    %v1322 = vld [vmem:[#allocation2 + $0x2b8] sm:$0xff]
    %v1323 = vld [vmem:[#allocation2 + $0x2c0] sm:$0xff]
    %v1324 = vld [vmem:[#allocation2 + $0x2d0] sm:$0xff]
    %v1325 = vld [vmem:[#allocation2 + $0x2d8] sm:$0xff]
    %v1326 = vld [vmem:[#allocation2 + $0x2e8] sm:$0xff]
    %v1327 = vld [vmem:[#allocation2 + $0x2f0] sm:$0xff]
    %v1328 = vld [vmem:[#allocation2 + $0x300] sm:$0xff]
    %v1329 = vld [vmem:[#allocation2 + $0x308] sm:$0xff]
    %v1330 = vld [vmem:[#allocation2 + $0x318] sm:$0xff]
    %v1331 = vld [vmem:[#allocation2 + $0x320] sm:$0xff]
    %v1332 = vld [vmem:[#allocation2 + $0x1] sm:$0xff]
    %v1333 = vld [vmem:[#allocation2 + $0x9] sm:$0xff]
    %v1334 = vld [vmem:[#allocation2 + $0x19] sm:$0xff]
    %v1335 = vld [vmem:[#allocation2 + $0x21] sm:$0xff]
    %v1336 = vld [vmem:[#allocation2 + $0x31] sm:$0xff]
    %v1337 = vld [vmem:[#allocation2 + $0x39] sm:$0xff]
    %v1338 = vld [vmem:[#allocation2 + $0x49] sm:$0xff]
    %v1339 = vld [vmem:[#allocation2 + $0x51] sm:$0xff]
    %v1340 = vld [vmem:[#allocation2 + $0x61] sm:$0xff]
    %v1341 = vld [vmem:[#allocation2 + $0x69] sm:$0xff]
    %v1342 = vld [vmem:[#allocation2 + $0x79] sm:$0xff]
    %v1343 = vld [vmem:[#allocation2 + $0x81] sm:$0xff]
    %v1344 = vld [vmem:[#allocation2 + $0x91] sm:$0xff]
    %v1345 = vld [vmem:[#allocation2 + $0x99] sm:$0xff]
    %v1346 = vld [vmem:[#allocation2 + $0xa9] sm:$0xff]
    %v1347 = vld [vmem:[#allocation2 + $0xb1] sm:$0xff]
    %v1348 = vld [vmem:[#allocation2 + $0xc1] sm:$0xff]
    %v1349 = vld [vmem:[#allocation2 + $0xc9] sm:$0xff]
    %v1350 = vld [vmem:[#allocation2 + $0xd9] sm:$0xff]
    %v1351 = vld [vmem:[#allocation2 + $0xe1] sm:$0xff]
    %v1352 = vld [vmem:[#allocation2 + $0xf1] sm:$0xff]
    %v1353 = vld [vmem:[#allocation2 + $0xf9] sm:$0xff]
    %v1354 = vld [vmem:[#allocation2 + $0x109] sm:$0xff]
    %v1355 = vld [vmem:[#allocation2 + $0x111] sm:$0xff]
    %v1356 = vld [vmem:[#allocation2 + $0x121] sm:$0xff]
    %v1357 = vld [vmem:[#allocation2 + $0x129] sm:$0xff]
    %v1358 = vld [vmem:[#allocation2 + $0x139] sm:$0xff]
    %v1359 = vld [vmem:[#allocation2 + $0x141] sm:$0xff]
    %v1360 = vld [vmem:[#allocation2 + $0x151] sm:$0xff]
    %v1361 = vld [vmem:[#allocation2 + $0x159] sm:$0xff]
    %v1362 = vld [vmem:[#allocation2 + $0x169] sm:$0xff]
    %v1363 = vld [vmem:[#allocation2 + $0x171] sm:$0xff]
    %v1364 = vld [vmem:[#allocation2 + $0x1b1] sm:$0xff]
    %v1365 = vld [vmem:[#allocation2 + $0x1b9] sm:$0xff]
    %v1366 = vld [vmem:[#allocation2 + $0x1c9] sm:$0xff]
    %v1367 = vld [vmem:[#allocation2 + $0x1d1] sm:$0xff]
    %v1368 = vld [vmem:[#allocation2 + $0x1e1] sm:$0xff]
    %v1369 = vld [vmem:[#allocation2 + $0x1e9] sm:$0xff]
    %v1370 = vld [vmem:[#allocation2 + $0x1f9] sm:$0xff]
    %v1371 = vld [vmem:[#allocation2 + $0x201] sm:$0xff]
    %v1372 = vld [vmem:[#allocation2 + $0x211] sm:$0xff]
    %v1373 = vld [vmem:[#allocation2 + $0x219] sm:$0xff]
    %v1374 = vld [vmem:[#allocation2 + $0x229] sm:$0xff]
    %v1375 = vld [vmem:[#allocation2 + $0x231] sm:$0xff]
    %v1376 = vld [vmem:[#allocation2 + $0x241] sm:$0xff]
    %v1377 = vld [vmem:[#allocation2 + $0x249] sm:$0xff]
    %v1378 = vld [vmem:[#allocation2 + $0x259] sm:$0xff]
    %v1379 = vld [vmem:[#allocation2 + $0x261] sm:$0xff]
    %v1380 = vld [vmem:[#allocation2 + $0x271] sm:$0xff]
    %v1381 = vld [vmem:[#allocation2 + $0x279] sm:$0xff]
    %v1382 = vld [vmem:[#allocation2 + $0x289] sm:$0xff]
    %v1383 = vld [vmem:[#allocation2 + $0x291] sm:$0xff]
    %v1384 = vld [vmem:[#allocation2 + $0x2a1] sm:$0xff]
    %v1385 = vld [vmem:[#allocation2 + $0x2a9] sm:$0xff]
    %v1386 = vld [vmem:[#allocation2 + $0x2b9] sm:$0xff]
    %v1387 = vld [vmem:[#allocation2 + $0x2c1] sm:$0xff]
    %v1388 = vld [vmem:[#allocation2 + $0x2d1] sm:$0xff]
    %v1389 = vld [vmem:[#allocation2 + $0x2d9] sm:$0xff]
    %v1390 = vld [vmem:[#allocation2 + $0x2e9] sm:$0xff]
    %v1391 = vld [vmem:[#allocation2 + $0x2f1] sm:$0xff]
    %v1392 = vld [vmem:[#allocation2 + $0x301] sm:$0xff]
    %v1393 = vld [vmem:[#allocation2 + $0x309] sm:$0xff]
    %v1394 = vld [vmem:[#allocation2 + $0x319] sm:$0xff]
    %v1395 = vld [vmem:[#allocation2 + $0x321] sm:$0xff]
    %v1396 = vld [vmem:[#allocation2 + $0x2] sm:$0xff]
    %v1397 = vld [vmem:[#allocation2 + $0xa] sm:$0xff]
    %v1398 = vld [vmem:[#allocation2 + $0x1a] sm:$0xff]
    %v1399 = vld [vmem:[#allocation2 + $0x22] sm:$0xff]
    %v1400 = vld [vmem:[#allocation2 + $0x32] sm:$0xff]
    %v1401 = vld [vmem:[#allocation2 + $0x3a] sm:$0xff]
    %v1402 = vld [vmem:[#allocation2 + $0x4a] sm:$0xff]
    %v1403 = vld [vmem:[#allocation2 + $0x52] sm:$0xff]
    %v1404 = vld [vmem:[#allocation2 + $0x62] sm:$0xff]
    %v1405 = vld [vmem:[#allocation2 + $0x6a] sm:$0xff]
    %v1406 = vld [vmem:[#allocation2 + $0x7a] sm:$0xff]
    %v1407 = vld [vmem:[#allocation2 + $0x82] sm:$0xff]
    %v1408 = vld [vmem:[#allocation2 + $0x92] sm:$0xff]
    %v1409 = vld [vmem:[#allocation2 + $0x9a] sm:$0xff]
    %v1410 = vld [vmem:[#allocation2 + $0xaa] sm:$0xff]
    %v1411 = vld [vmem:[#allocation2 + $0xb2] sm:$0xff]
    %v1412 = vld [vmem:[#allocation2 + $0xc2] sm:$0xff]
    %v1413 = vld [vmem:[#allocation2 + $0xca] sm:$0xff]
    %v1414 = vld [vmem:[#allocation2 + $0xda] sm:$0xff]
    %v1415 = vld [vmem:[#allocation2 + $0xe2] sm:$0xff]
    %v1416 = vld [vmem:[#allocation2 + $0xf2] sm:$0xff]
    %v1417 = vld [vmem:[#allocation2 + $0xfa] sm:$0xff]
    %v1418 = vld [vmem:[#allocation2 + $0x10a] sm:$0xff]
    %v1419 = vld [vmem:[#allocation2 + $0x112] sm:$0xff]
    %v1420 = vld [vmem:[#allocation2 + $0x122] sm:$0xff]
    %v1421 = vld [vmem:[#allocation2 + $0x12a] sm:$0xff]
    %v1422 = vld [vmem:[#allocation2 + $0x13a] sm:$0xff]
    %v1423 = vld [vmem:[#allocation2 + $0x142] sm:$0xff]
    %v1424 = vld [vmem:[#allocation2 + $0x152] sm:$0xff]
    %v1425 = vld [vmem:[#allocation2 + $0x15a] sm:$0xff]
    %v1426 = vld [vmem:[#allocation2 + $0x16a] sm:$0xff]
    %v1427 = vld [vmem:[#allocation2 + $0x172] sm:$0xff]
    %v1428 = vld [vmem:[#allocation2 + $0x1b2] sm:$0xff]
    %v1429 = vld [vmem:[#allocation2 + $0x1ba] sm:$0xff]
    %v1430 = vld [vmem:[#allocation2 + $0x1ca] sm:$0xff]
    %v1431 = vld [vmem:[#allocation2 + $0x1d2] sm:$0xff]
    %v1432 = vld [vmem:[#allocation2 + $0x1e2] sm:$0xff]
    %v1433 = vld [vmem:[#allocation2 + $0x1ea] sm:$0xff]
    %v1434 = vld [vmem:[#allocation2 + $0x1fa] sm:$0xff]
    %v1435 = vld [vmem:[#allocation2 + $0x202] sm:$0xff]
    %v1436 = vld [vmem:[#allocation2 + $0x212] sm:$0xff]
    %v1437 = vld [vmem:[#allocation2 + $0x21a] sm:$0xff]
    %v1438 = vld [vmem:[#allocation2 + $0x22a] sm:$0xff]
    %v1439 = vld [vmem:[#allocation2 + $0x232] sm:$0xff]
    %v1440 = vld [vmem:[#allocation2 + $0x242] sm:$0xff]
    %v1441 = vld [vmem:[#allocation2 + $0x24a] sm:$0xff]
    %v1442 = vld [vmem:[#allocation2 + $0x25a] sm:$0xff]
    %v1443 = vld [vmem:[#allocation2 + $0x262] sm:$0xff]
    %v1444 = vld [vmem:[#allocation2 + $0x272] sm:$0xff]
    %v1445 = vld [vmem:[#allocation2 + $0x27a] sm:$0xff]
    %v1446 = vld [vmem:[#allocation2 + $0x28a] sm:$0xff]
    %v1447 = vld [vmem:[#allocation2 + $0x292] sm:$0xff]
    %v1448 = vld [vmem:[#allocation2 + $0x2a2] sm:$0xff]
    %v1449 = vld [vmem:[#allocation2 + $0x2aa] sm:$0xff]
    %v1450 = vld [vmem:[#allocation2 + $0x2ba] sm:$0xff]
    %v1451 = vld [vmem:[#allocation2 + $0x2c2] sm:$0xff]
    %v1452 = vld [vmem:[#allocation2 + $0x2d2] sm:$0xff]
    %v1453 = vld [vmem:[#allocation2 + $0x2da] sm:$0xff]
    %v1454 = vld [vmem:[#allocation2 + $0x2ea] sm:$0xff]
    %v1455 = vld [vmem:[#allocation2 + $0x2f2] sm:$0xff]
    %v1456 = vld [vmem:[#allocation2 + $0x302] sm:$0xff]
    %v1457 = vld [vmem:[#allocation2 + $0x30a] sm:$0xff]
    %v1458 = vld [vmem:[#allocation2 + $0x31a] sm:$0xff]
    %v1459 = vld [vmem:[#allocation2 + $0x322] sm:$0xff]
    %v1460 = vld [vmem:[%s1203] sm:$0xff]
    %v1461 = vld [vmem:[%s1203 + $0x8] sm:$0xff]
    %v1462 = vld [vmem:[%s1203 + $0x18] sm:$0xff]
    %v1463 = vld [vmem:[%s1203 + $0x20] sm:$0xff]
    %v1464 = vld [vmem:[%s1203 + $0x30] sm:$0xff]
    %v1465 = vld [vmem:[%s1203 + $0x38] sm:$0xff]
    %v1466 = vld [vmem:[%s1203 + $0x48] sm:$0xff]
    %v1467 = vld [vmem:[%s1203 + $0x50] sm:$0xff]
    %v1468 = vld [vmem:[%s1203 + $0x60] sm:$0xff]
    %v1469 = vld [vmem:[%s1203 + $0x68] sm:$0xff]
    %v1470 = vld [vmem:[%s1203 + $0x78] sm:$0xff]
    %v1471 = vld [vmem:[%s1203 + $0x80] sm:$0xff]
    %v1472 = vld [vmem:[%s1203 + $0x90] sm:$0xff]
    %v1473 = vld [vmem:[%s1203 + $0x98] sm:$0xff]
    %v1474 = vld [vmem:[%s1203 + $0xa8] sm:$0xff]
    %v1475 = vld [vmem:[%s1203 + $0xb0] sm:$0xff]
    %v1476 = vld [vmem:[%s1203 + $0xc0] sm:$0xff]
    %v1477 = vld [vmem:[%s1203 + $0xc8] sm:$0xff]
    %v1478 = vld [vmem:[%s1203 + $0xd8] sm:$0xff]
    %v1479 = vld [vmem:[%s1203 + $0xe0] sm:$0xff]
    %v1480 = vld [vmem:[%s1203 + $0xf0] sm:$0xff]
    %v1481 = vld [vmem:[%s1203 + $0xf8] sm:$0xff]
    %v1482 = vld [vmem:[%s1203 + $0x108] sm:$0xff]
    %v1483 = vld [vmem:[%s1203 + $0x110] sm:$0xff]
    %v1484 = vld [vmem:[%s1203 + $0x120] sm:$0xff]
    %v1485 = vld [vmem:[%s1203 + $0x128] sm:$0xff]
    %v1486 = vld [vmem:[%s1203 + $0x138] sm:$0xff]
    %v1487 = vld [vmem:[%s1203 + $0x140] sm:$0xff]
    %v1488 = vld [vmem:[%s1203 + $0x150] sm:$0xff]
    %v1489 = vld [vmem:[%s1203 + $0x158] sm:$0xff]
    %v1490 = vld [vmem:[%s1203 + $0x168] sm:$0xff]
    %v1491 = vld [vmem:[%s1203 + $0x170] sm:$0xff]
    %v1492 = vld [vmem:[%s1203 + $0x1b0] sm:$0xff]
    %v1493 = vld [vmem:[%s1203 + $0x1b8] sm:$0xff]
    %v1494 = vld [vmem:[%s1203 + $0x1c8] sm:$0xff]
    %v1495 = vld [vmem:[%s1203 + $0x1d0] sm:$0xff]
    %v1496 = vld [vmem:[%s1203 + $0x1e0] sm:$0xff]
    %v1497 = vld [vmem:[%s1203 + $0x1e8] sm:$0xff]
    %v1498 = vld [vmem:[%s1203 + $0x1f8] sm:$0xff]
    %v1499 = vld [vmem:[%s1203 + $0x200] sm:$0xff]
    %v1500 = vld [vmem:[%s1203 + $0x210] sm:$0xff]
    %v1501 = vld [vmem:[%s1203 + $0x218] sm:$0xff]
    %v1502 = vld [vmem:[%s1203 + $0x228] sm:$0xff]
    %v1503 = vld [vmem:[%s1203 + $0x230] sm:$0xff]
    %v1504 = vld [vmem:[%s1203 + $0x240] sm:$0xff]
    %v1505 = vld [vmem:[%s1203 + $0x248] sm:$0xff]
    %v1506 = vld [vmem:[%s1203 + $0x258] sm:$0xff]
    %v1507 = vld [vmem:[%s1203 + $0x260] sm:$0xff]
    %v1508 = vld [vmem:[%s1203 + $0x270] sm:$0xff]
    %v1509 = vld [vmem:[%s1203 + $0x278] sm:$0xff]
    %v1510 = vld [vmem:[%s1203 + $0x288] sm:$0xff]
    %v1511 = vld [vmem:[%s1203 + $0x290] sm:$0xff]
    %v1512 = vld [vmem:[%s1203 + $0x2a0] sm:$0xff]
    %v1513 = vld [vmem:[%s1203 + $0x2a8] sm:$0xff]
    %v1514 = vld [vmem:[%s1203 + $0x2b8] sm:$0xff]
    %v1515 = vld [vmem:[%s1203 + $0x2c0] sm:$0xff]
    %v1516 = vld [vmem:[%s1203 + $0x2d0] sm:$0xff]
    %v1517 = vld [vmem:[%s1203 + $0x2d8] sm:$0xff]
    %v1518 = vld [vmem:[%s1203 + $0x2e8] sm:$0xff]
    %v1519 = vld [vmem:[%s1203 + $0x2f0] sm:$0xff]
    %v1520 = vld [vmem:[%s1203 + $0x300] sm:$0xff]
    %v1521 = vld [vmem:[%s1203 + $0x308] sm:$0xff]
    %v1522 = vld [vmem:[%s1203 + $0x318] sm:$0xff]
    %v1523 = vld [vmem:[%s1203 + $0x320] sm:$0xff]
    %v1524 = vld [vmem:[%s1203 + $0x1] sm:$0xff]
    %v1525 = vld [vmem:[%s1203 + $0x9] sm:$0xff]
    %v1526 = vld [vmem:[%s1203 + $0x19] sm:$0xff]
    %v1527 = vld [vmem:[%s1203 + $0x21] sm:$0xff]
    %v1528 = vld [vmem:[%s1203 + $0x31] sm:$0xff]
    %v1529 = vld [vmem:[%s1203 + $0x39] sm:$0xff]
    %v1530 = vld [vmem:[%s1203 + $0x49] sm:$0xff]
    %v1531 = vld [vmem:[%s1203 + $0x51] sm:$0xff]
    %v1532 = vld [vmem:[%s1203 + $0x61] sm:$0xff]
    %v1533 = vld [vmem:[%s1203 + $0x69] sm:$0xff]
    %v1534 = vld [vmem:[%s1203 + $0x79] sm:$0xff]
    %v1535 = vld [vmem:[%s1203 + $0x81] sm:$0xff]
    %v1536 = vld [vmem:[%s1203 + $0x91] sm:$0xff]
    %v1537 = vld [vmem:[%s1203 + $0x99] sm:$0xff]
    %v1538 = vld [vmem:[%s1203 + $0xa9] sm:$0xff]
    %v1539 = vld [vmem:[%s1203 + $0xb1] sm:$0xff]
    %v1540 = vld [vmem:[%s1203 + $0xc1] sm:$0xff]
    %v1541 = vld [vmem:[%s1203 + $0xc9] sm:$0xff]
    %v1542 = vld [vmem:[%s1203 + $0xd9] sm:$0xff]
    %v1543 = vld [vmem:[%s1203 + $0xe1] sm:$0xff]
    %v1544 = vld [vmem:[%s1203 + $0xf1] sm:$0xff]
    %v1545 = vld [vmem:[%s1203 + $0xf9] sm:$0xff]
    %v1546 = vld [vmem:[%s1203 + $0x109] sm:$0xff]
    %v1547 = vld [vmem:[%s1203 + $0x111] sm:$0xff]
    %v1548 = vld [vmem:[%s1203 + $0x121] sm:$0xff]
    %v1549 = vld [vmem:[%s1203 + $0x129] sm:$0xff]
    %v1550 = vld [vmem:[%s1203 + $0x139] sm:$0xff]
    %v1551 = vld [vmem:[%s1203 + $0x141] sm:$0xff]
    %v1552 = vld [vmem:[%s1203 + $0x151] sm:$0xff]
    %v1553 = vld [vmem:[%s1203 + $0x159] sm:$0xff]
    %v1554 = vld [vmem:[%s1203 + $0x169] sm:$0xff]
    %v1555 = vld [vmem:[%s1203 + $0x171] sm:$0xff]
    %v1556 = vld [vmem:[%s1203 + $0x1b1] sm:$0xff]
    %v1557 = vld [vmem:[%s1203 + $0x1b9] sm:$0xff]
    %v1558 = vld [vmem:[%s1203 + $0x1c9] sm:$0xff]
    %v1559 = vld [vmem:[%s1203 + $0x1d1] sm:$0xff]
    %v1560 = vld [vmem:[%s1203 + $0x1e1] sm:$0xff]
    %v1561 = vld [vmem:[%s1203 + $0x1e9] sm:$0xff]
    %v1562 = vld [vmem:[%s1203 + $0x1f9] sm:$0xff]
    %v1563 = vld [vmem:[%s1203 + $0x201] sm:$0xff]
    %v1564 = vld [vmem:[%s1203 + $0x211] sm:$0xff]
    %v1565 = vld [vmem:[%s1203 + $0x219] sm:$0xff]
    %v1566 = vld [vmem:[%s1203 + $0x229] sm:$0xff]
    %v1567 = vld [vmem:[%s1203 + $0x231] sm:$0xff]
    %v1568 = vld [vmem:[%s1203 + $0x241] sm:$0xff]
    %v1569 = vld [vmem:[%s1203 + $0x249] sm:$0xff]
    %v1570 = vld [vmem:[%s1203 + $0x259] sm:$0xff]
    %v1571 = vld [vmem:[%s1203 + $0x261] sm:$0xff]
    %v1572 = vld [vmem:[%s1203 + $0x271] sm:$0xff]
    %v1573 = vld [vmem:[%s1203 + $0x279] sm:$0xff]
    %v1574 = vld [vmem:[%s1203 + $0x289] sm:$0xff]
    %v1575 = vld [vmem:[%s1203 + $0x291] sm:$0xff]
    %v1576 = vld [vmem:[%s1203 + $0x2a1] sm:$0xff]
    %v1577 = vld [vmem:[%s1203 + $0x2a9] sm:$0xff]
    %v1578 = vld [vmem:[%s1203 + $0x2b9] sm:$0xff]
    %v1579 = vld [vmem:[%s1203 + $0x2c1] sm:$0xff]
    %v1580 = vld [vmem:[%s1203 + $0x2d1] sm:$0xff]
    %v1581 = vld [vmem:[%s1203 + $0x2d9] sm:$0xff]
    %v1582 = vld [vmem:[%s1203 + $0x2e9] sm:$0xff]
    %v1583 = vld [vmem:[%s1203 + $0x2f1] sm:$0xff]
    %v1584 = vld [vmem:[%s1203 + $0x301] sm:$0xff]
    %v1585 = vld [vmem:[%s1203 + $0x309] sm:$0xff]
    %v1586 = vld [vmem:[%s1203 + $0x319] sm:$0xff]
    %v1587 = vld [vmem:[%s1203 + $0x321] sm:$0xff]
    %v1588 = vld [vmem:[%s1203 + $0x2] sm:$0xff]
    %v1589 = vld [vmem:[%s1203 + $0xa] sm:$0xff]
    %v1590 = vld [vmem:[%s1203 + $0x1a] sm:$0xff]
    %v1591 = vld [vmem:[%s1203 + $0x22] sm:$0xff]
    %v1592 = vld [vmem:[%s1203 + $0x32] sm:$0xff]
    %v1593 = vld [vmem:[%s1203 + $0x3a] sm:$0xff]
    %v1594 = vld [vmem:[%s1203 + $0x4a] sm:$0xff]
    %v1595 = vld [vmem:[%s1203 + $0x52] sm:$0xff]
    %v1596 = vld [vmem:[%s1203 + $0x62] sm:$0xff]
    %v1597 = vld [vmem:[%s1203 + $0x6a] sm:$0xff]
    %v1598 = vld [vmem:[%s1203 + $0x7a] sm:$0xff]
    %v1599 = vld [vmem:[%s1203 + $0x82] sm:$0xff]
    %v1600 = vld [vmem:[%s1203 + $0x92] sm:$0xff]
    %v1601 = vld [vmem:[%s1203 + $0x9a] sm:$0xff]
    %v1602 = vld [vmem:[%s1203 + $0xaa] sm:$0xff]
    %v1603 = vld [vmem:[%s1203 + $0xb2] sm:$0xff]
    %v1604 = vld [vmem:[%s1203 + $0xc2] sm:$0xff]
    %v1605 = vld [vmem:[%s1203 + $0xca] sm:$0xff]
    %v1606 = vld [vmem:[%s1203 + $0xda] sm:$0xff]
    %v1607 = vld [vmem:[%s1203 + $0xe2] sm:$0xff]
    %v1608 = vld [vmem:[%s1203 + $0xf2] sm:$0xff]
    %v1609 = vld [vmem:[%s1203 + $0xfa] sm:$0xff]
    %v1610 = vld [vmem:[%s1203 + $0x10a] sm:$0xff]
    %v1611 = vld [vmem:[%s1203 + $0x112] sm:$0xff]
    %v1612 = vld [vmem:[%s1203 + $0x122] sm:$0xff]
    %v1613 = vld [vmem:[%s1203 + $0x12a] sm:$0xff]
    %v1614 = vld [vmem:[%s1203 + $0x13a] sm:$0xff]
    %v1615 = vld [vmem:[%s1203 + $0x142] sm:$0xff]
    %v1616 = vld [vmem:[%s1203 + $0x152] sm:$0xff]
    %v1617 = vld [vmem:[%s1203 + $0x15a] sm:$0xff]
    %v1618 = vld [vmem:[%s1203 + $0x16a] sm:$0xff]
    %v1619 = vld [vmem:[%s1203 + $0x172] sm:$0xff]
    %v1620 = vld [vmem:[%s1203 + $0x1b2] sm:$0xff]
    %v1621 = vld [vmem:[%s1203 + $0x1ba] sm:$0xff]
    %v1622 = vld [vmem:[%s1203 + $0x1ca] sm:$0xff]
    %v1623 = vld [vmem:[%s1203 + $0x1d2] sm:$0xff]
    %v1624 = vld [vmem:[%s1203 + $0x1e2] sm:$0xff]
    %v1625 = vld [vmem:[%s1203 + $0x1ea] sm:$0xff]
    %v1626 = vld [vmem:[%s1203 + $0x1fa] sm:$0xff]
    %v1627 = vld [vmem:[%s1203 + $0x202] sm:$0xff]
    %v1628 = vld [vmem:[%s1203 + $0x212] sm:$0xff]
    %v1629 = vld [vmem:[%s1203 + $0x21a] sm:$0xff]
    %v1630 = vld [vmem:[%s1203 + $0x22a] sm:$0xff]
    %v1631 = vld [vmem:[%s1203 + $0x232] sm:$0xff]
    %v1632 = vld [vmem:[%s1203 + $0x242] sm:$0xff]
    %v1633 = vld [vmem:[%s1203 + $0x24a] sm:$0xff]
    %v1634 = vld [vmem:[%s1203 + $0x25a] sm:$0xff]
    %v1635 = vld [vmem:[%s1203 + $0x262] sm:$0xff]
    %v1636 = vld [vmem:[%s1203 + $0x272] sm:$0xff]
    %v1637 = vld [vmem:[%s1203 + $0x27a] sm:$0xff]
    %v1638 = vld [vmem:[%s1203 + $0x28a] sm:$0xff]
    %v1639 = vld [vmem:[%s1203 + $0x292] sm:$0xff]
    %v1640 = vld [vmem:[%s1203 + $0x2a2] sm:$0xff]
    %v1641 = vld [vmem:[%s1203 + $0x2aa] sm:$0xff]
    %v1642 = vld [vmem:[%s1203 + $0x2ba] sm:$0xff]
    %v1643 = vld [vmem:[%s1203 + $0x2c2] sm:$0xff]
    %v1644 = vld [vmem:[%s1203 + $0x2d2] sm:$0xff]
    %v1645 = vld [vmem:[%s1203 + $0x2da] sm:$0xff]
    %v1646 = vld [vmem:[%s1203 + $0x2ea] sm:$0xff]
    %v1647 = vld [vmem:[%s1203 + $0x2f2] sm:$0xff]
    %v1648 = vld [vmem:[%s1203 + $0x302] sm:$0xff]
    %v1649 = vld [vmem:[%s1203 + $0x30a] sm:$0xff]
    %v1650 = vld [vmem:[%s1203 + $0x31a] sm:$0xff]
    %v1651 = vld [vmem:[%s1203 + $0x322] sm:$0xff]
    %s1652 = scalar_lea.vmem [#allocation2], 48
    %v1653 = vld [vmem:[%s1652] sm:$0xff]
    %v1654 = vld [vmem:[%s1652 + $0x8] sm:$0xff]
    %v1655 = vld [vmem:[%s1652 + $0x18] sm:$0xff]
    %v1656 = vld [vmem:[%s1652 + $0x20] sm:$0xff]
    %v1657 = vld [vmem:[%s1652 + $0x30] sm:$0xff]
    %v1658 = vld [vmem:[%s1652 + $0x38] sm:$0xff]
    %v1659 = vld [vmem:[%s1652 + $0x48] sm:$0xff]
    %v1660 = vld [vmem:[%s1652 + $0x50] sm:$0xff]
    %v1661 = vld [vmem:[%s1652 + $0x60] sm:$0xff]
    %v1662 = vld [vmem:[%s1652 + $0x68] sm:$0xff]
    %v1663 = vld [vmem:[%s1652 + $0x78] sm:$0xff]
    %v1664 = vld [vmem:[%s1652 + $0x80] sm:$0xff]
    %v1665 = vld [vmem:[%s1652 + $0x90] sm:$0xff]
    %v1666 = vld [vmem:[%s1652 + $0x98] sm:$0xff]
    %v1667 = vld [vmem:[%s1652 + $0xa8] sm:$0xff]
    %v1668 = vld [vmem:[%s1652 + $0xb0] sm:$0xff]
    %v1669 = vld [vmem:[%s1652 + $0xc0] sm:$0xff]
    %v1670 = vld [vmem:[%s1652 + $0xc8] sm:$0xff]
    %v1671 = vld [vmem:[%s1652 + $0xd8] sm:$0xff]
    %v1672 = vld [vmem:[%s1652 + $0xe0] sm:$0xff]
    %v1673 = vld [vmem:[%s1652 + $0xf0] sm:$0xff]
    %v1674 = vld [vmem:[%s1652 + $0xf8] sm:$0xff]
    %v1675 = vld [vmem:[%s1652 + $0x108] sm:$0xff]
    %v1676 = vld [vmem:[%s1652 + $0x110] sm:$0xff]
    %v1677 = vld [vmem:[%s1652 + $0x120] sm:$0xff]
    %v1678 = vld [vmem:[%s1652 + $0x128] sm:$0xff]
    %v1679 = vld [vmem:[%s1652 + $0x138] sm:$0xff]
    %v1680 = vld [vmem:[%s1652 + $0x140] sm:$0xff]
    %v1681 = vld [vmem:[%s1652 + $0x150] sm:$0xff]
    %v1682 = vld [vmem:[%s1652 + $0x158] sm:$0xff]
    %v1683 = vld [vmem:[%s1652 + $0x168] sm:$0xff]
    %v1684 = vld [vmem:[%s1652 + $0x170] sm:$0xff]
    %v1685 = vld [vmem:[%s1652 + $0x1b0] sm:$0xff]
    %v1686 = vld [vmem:[%s1652 + $0x1b8] sm:$0xff]
    %v1687 = vld [vmem:[%s1652 + $0x1c8] sm:$0xff]
    %v1688 = vld [vmem:[%s1652 + $0x1d0] sm:$0xff]
    %v1689 = vld [vmem:[%s1652 + $0x1e0] sm:$0xff]
    %v1690 = vld [vmem:[%s1652 + $0x1e8] sm:$0xff]
    %v1691 = vld [vmem:[%s1652 + $0x1f8] sm:$0xff]
    %v1692 = vld [vmem:[%s1652 + $0x200] sm:$0xff]
    %v1693 = vld [vmem:[%s1652 + $0x210] sm:$0xff]
    %v1694 = vld [vmem:[%s1652 + $0x218] sm:$0xff]
    %v1695 = vld [vmem:[%s1652 + $0x228] sm:$0xff]
    %v1696 = vld [vmem:[%s1652 + $0x230] sm:$0xff]
    %v1697 = vld [vmem:[%s1652 + $0x240] sm:$0xff]
    %v1698 = vld [vmem:[%s1652 + $0x248] sm:$0xff]
    %v1699 = vld [vmem:[%s1652 + $0x258] sm:$0xff]
    %v1700 = vld [vmem:[%s1652 + $0x260] sm:$0xff]
    %v1701 = vld [vmem:[%s1652 + $0x270] sm:$0xff]
    %v1702 = vld [vmem:[%s1652 + $0x278] sm:$0xff]
    %v1703 = vld [vmem:[%s1652 + $0x288] sm:$0xff]
    %v1704 = vld [vmem:[%s1652 + $0x290] sm:$0xff]
    %v1705 = vld [vmem:[%s1652 + $0x2a0] sm:$0xff]
    %v1706 = vld [vmem:[%s1652 + $0x2a8] sm:$0xff]
    %v1707 = vld [vmem:[%s1652 + $0x2b8] sm:$0xff]
    %v1708 = vld [vmem:[%s1652 + $0x2c0] sm:$0xff]
    %v1709 = vld [vmem:[%s1652 + $0x2d0] sm:$0xff]
    %v1710 = vld [vmem:[%s1652 + $0x2d8] sm:$0xff]
    %v1711 = vld [vmem:[%s1652 + $0x2e8] sm:$0xff]
    %v1712 = vld [vmem:[%s1652 + $0x2f0] sm:$0xff]
    %v1713 = vld [vmem:[%s1652 + $0x300] sm:$0xff]
    %v1714 = vld [vmem:[%s1652 + $0x308] sm:$0xff]
    %v1715 = vld [vmem:[%s1652 + $0x318] sm:$0xff]
    %v1716 = vld [vmem:[%s1652 + $0x320] sm:$0xff]
    %v1717 = vld [vmem:[%s1652 + $0x1] sm:$0xff]
    %v1718 = vld [vmem:[%s1652 + $0x9] sm:$0xff]
    %v1719 = vld [vmem:[%s1652 + $0x19] sm:$0xff]
    %v1720 = vld [vmem:[%s1652 + $0x21] sm:$0xff]
    %v1721 = vld [vmem:[%s1652 + $0x31] sm:$0xff]
    %v1722 = vld [vmem:[%s1652 + $0x39] sm:$0xff]
    %v1723 = vld [vmem:[%s1652 + $0x49] sm:$0xff]
    %v1724 = vld [vmem:[%s1652 + $0x51] sm:$0xff]
    %v1725 = vld [vmem:[%s1652 + $0x61] sm:$0xff]
    %v1726 = vld [vmem:[%s1652 + $0x69] sm:$0xff]
    %v1727 = vld [vmem:[%s1652 + $0x79] sm:$0xff]
    %v1728 = vld [vmem:[%s1652 + $0x81] sm:$0xff]
    %v1729 = vld [vmem:[%s1652 + $0x91] sm:$0xff]
    %v1730 = vld [vmem:[%s1652 + $0x99] sm:$0xff]
    %v1731 = vld [vmem:[%s1652 + $0xa9] sm:$0xff]
    %v1732 = vld [vmem:[%s1652 + $0xb1] sm:$0xff]
    %v1733 = vld [vmem:[%s1652 + $0xc1] sm:$0xff]
    %v1734 = vld [vmem:[%s1652 + $0xc9] sm:$0xff]
    %v1735 = vld [vmem:[%s1652 + $0xd9] sm:$0xff]
    %v1736 = vld [vmem:[%s1652 + $0xe1] sm:$0xff]
    %v1737 = vld [vmem:[%s1652 + $0xf1] sm:$0xff]
    %v1738 = vld [vmem:[%s1652 + $0xf9] sm:$0xff]
    %v1739 = vld [vmem:[%s1652 + $0x109] sm:$0xff]
    %v1740 = vld [vmem:[%s1652 + $0x111] sm:$0xff]
    %v1741 = vld [vmem:[%s1652 + $0x121] sm:$0xff]
    %v1742 = vld [vmem:[%s1652 + $0x129] sm:$0xff]
    %v1743 = vld [vmem:[%s1652 + $0x139] sm:$0xff]
    %v1744 = vld [vmem:[%s1652 + $0x141] sm:$0xff]
    %v1745 = vld [vmem:[%s1652 + $0x151] sm:$0xff]
    %v1746 = vld [vmem:[%s1652 + $0x159] sm:$0xff]
    %v1747 = vld [vmem:[%s1652 + $0x169] sm:$0xff]
    %v1748 = vld [vmem:[%s1652 + $0x171] sm:$0xff]
    %v1749 = vld [vmem:[%s1652 + $0x1b1] sm:$0xff]
    %v1750 = vld [vmem:[%s1652 + $0x1b9] sm:$0xff]
    %v1751 = vld [vmem:[%s1652 + $0x1c9] sm:$0xff]
    %v1752 = vld [vmem:[%s1652 + $0x1d1] sm:$0xff]
    %v1753 = vld [vmem:[%s1652 + $0x1e1] sm:$0xff]
    %v1754 = vld [vmem:[%s1652 + $0x1e9] sm:$0xff]
    %v1755 = vld [vmem:[%s1652 + $0x1f9] sm:$0xff]
    %v1756 = vld [vmem:[%s1652 + $0x201] sm:$0xff]
    %v1757 = vld [vmem:[%s1652 + $0x211] sm:$0xff]
    %v1758 = vld [vmem:[%s1652 + $0x219] sm:$0xff]
    %v1759 = vld [vmem:[%s1652 + $0x229] sm:$0xff]
    %v1760 = vld [vmem:[%s1652 + $0x231] sm:$0xff]
    %v1761 = vld [vmem:[%s1652 + $0x241] sm:$0xff]
    %v1762 = vld [vmem:[%s1652 + $0x249] sm:$0xff]
    %v1763 = vld [vmem:[%s1652 + $0x259] sm:$0xff]
    %v1764 = vld [vmem:[%s1652 + $0x261] sm:$0xff]
    %v1765 = vld [vmem:[%s1652 + $0x271] sm:$0xff]
    %v1766 = vld [vmem:[%s1652 + $0x279] sm:$0xff]
    %v1767 = vld [vmem:[%s1652 + $0x289] sm:$0xff]
    %v1768 = vld [vmem:[%s1652 + $0x291] sm:$0xff]
    %v1769 = vld [vmem:[%s1652 + $0x2a1] sm:$0xff]
    %v1770 = vld [vmem:[%s1652 + $0x2a9] sm:$0xff]
    %v1771 = vld [vmem:[%s1652 + $0x2b9] sm:$0xff]
    %v1772 = vld [vmem:[%s1652 + $0x2c1] sm:$0xff]
    %v1773 = vld [vmem:[%s1652 + $0x2d1] sm:$0xff]
    %v1774 = vld [vmem:[%s1652 + $0x2d9] sm:$0xff]
    %v1775 = vld [vmem:[%s1652 + $0x2e9] sm:$0xff]
    %v1776 = vld [vmem:[%s1652 + $0x2f1] sm:$0xff]
    %v1777 = vld [vmem:[%s1652 + $0x301] sm:$0xff]
    %v1778 = vld [vmem:[%s1652 + $0x309] sm:$0xff]
    %v1779 = vld [vmem:[%s1652 + $0x319] sm:$0xff]
    %v1780 = vld [vmem:[%s1652 + $0x321] sm:$0xff]
    %v1781 = vld [vmem:[%s1652 + $0x2] sm:$0xff]
    %v1782 = vld [vmem:[%s1652 + $0xa] sm:$0xff]
    %v1783 = vld [vmem:[%s1652 + $0x1a] sm:$0xff]
    %v1784 = vld [vmem:[%s1652 + $0x22] sm:$0xff]
    %v1785 = vld [vmem:[%s1652 + $0x32] sm:$0xff]
    %v1786 = vld [vmem:[%s1652 + $0x3a] sm:$0xff]
    %v1787 = vld [vmem:[%s1652 + $0x4a] sm:$0xff]
    %v1788 = vld [vmem:[%s1652 + $0x52] sm:$0xff]
    %v1789 = vld [vmem:[%s1652 + $0x62] sm:$0xff]
    %v1790 = vld [vmem:[%s1652 + $0x6a] sm:$0xff]
    %v1791 = vld [vmem:[%s1652 + $0x7a] sm:$0xff]
    %v1792 = vld [vmem:[%s1652 + $0x82] sm:$0xff]
    %v1793 = vld [vmem:[%s1652 + $0x92] sm:$0xff]
    %v1794 = vld [vmem:[%s1652 + $0x9a] sm:$0xff]
    %v1795 = vld [vmem:[%s1652 + $0xaa] sm:$0xff]
    %v1796 = vld [vmem:[%s1652 + $0xb2] sm:$0xff]
    %v1797 = vld [vmem:[%s1652 + $0xc2] sm:$0xff]
    %v1798 = vld [vmem:[%s1652 + $0xca] sm:$0xff]
    %v1799 = vld [vmem:[%s1652 + $0xda] sm:$0xff]
    %v1800 = vld [vmem:[%s1652 + $0xe2] sm:$0xff]
    %v1801 = vld [vmem:[%s1652 + $0xf2] sm:$0xff]
    %v1802 = vld [vmem:[%s1652 + $0xfa] sm:$0xff]
    %v1803 = vld [vmem:[%s1652 + $0x10a] sm:$0xff]
    %v1804 = vld [vmem:[%s1652 + $0x112] sm:$0xff]
    %v1805 = vld [vmem:[%s1652 + $0x122] sm:$0xff]
    %v1806 = vld [vmem:[%s1652 + $0x12a] sm:$0xff]
    %v1807 = vld [vmem:[%s1652 + $0x13a] sm:$0xff]
    %v1808 = vld [vmem:[%s1652 + $0x142] sm:$0xff]
    %v1809 = vld [vmem:[%s1652 + $0x152] sm:$0xff]
    %v1810 = vld [vmem:[%s1652 + $0x15a] sm:$0xff]
    %v1811 = vld [vmem:[%s1652 + $0x16a] sm:$0xff]
    %v1812 = vld [vmem:[%s1652 + $0x172] sm:$0xff]
    %v1813 = vld [vmem:[%s1652 + $0x1b2] sm:$0xff]
    %v1814 = vld [vmem:[%s1652 + $0x1ba] sm:$0xff]
    %v1815 = vld [vmem:[%s1652 + $0x1ca] sm:$0xff]
    %v1816 = vld [vmem:[%s1652 + $0x1d2] sm:$0xff]
    %v1817 = vld [vmem:[%s1652 + $0x1e2] sm:$0xff]
    %v1818 = vld [vmem:[%s1652 + $0x1ea] sm:$0xff]
    %v1819 = vld [vmem:[%s1652 + $0x1fa] sm:$0xff]
    %v1820 = vld [vmem:[%s1652 + $0x202] sm:$0xff]
    %v1821 = vld [vmem:[%s1652 + $0x212] sm:$0xff]
    %v1822 = vld [vmem:[%s1652 + $0x21a] sm:$0xff]
    %v1823 = vld [vmem:[%s1652 + $0x22a] sm:$0xff]
    %v1824 = vld [vmem:[%s1652 + $0x232] sm:$0xff]
    %v1825 = vld [vmem:[%s1652 + $0x242] sm:$0xff]
    %v1826 = vld [vmem:[%s1652 + $0x24a] sm:$0xff]
    %v1827 = vld [vmem:[%s1652 + $0x25a] sm:$0xff]
    %v1828 = vld [vmem:[%s1652 + $0x262] sm:$0xff]
    %v1829 = vld [vmem:[%s1652 + $0x272] sm:$0xff]
    %v1830 = vld [vmem:[%s1652 + $0x27a] sm:$0xff]
    %v1831 = vld [vmem:[%s1652 + $0x28a] sm:$0xff]
    %v1832 = vld [vmem:[%s1652 + $0x292] sm:$0xff]
    %v1833 = vld [vmem:[%s1652 + $0x2a2] sm:$0xff]
    %v1834 = vld [vmem:[%s1652 + $0x2aa] sm:$0xff]
    %v1835 = vld [vmem:[%s1652 + $0x2ba] sm:$0xff]
    %v1836 = vld [vmem:[%s1652 + $0x2c2] sm:$0xff]
    %v1837 = vld [vmem:[%s1652 + $0x2d2] sm:$0xff]
    %v1838 = vld [vmem:[%s1652 + $0x2da] sm:$0xff]
    %v1839 = vld [vmem:[%s1652 + $0x2ea] sm:$0xff]
    %v1840 = vld [vmem:[%s1652 + $0x2f2] sm:$0xff]
    %v1841 = vld [vmem:[%s1652 + $0x302] sm:$0xff]
    %v1842 = vld [vmem:[%s1652 + $0x30a] sm:$0xff]
    %v1843 = vld [vmem:[%s1652 + $0x31a] sm:$0xff]
    %v1844 = vld [vmem:[%s1652 + $0x322] sm:$0xff]
    %1909 = vrot.lane.b32.xlu0 %v1332, 32
    %v1910 = vpop.permute.xlu0 %1909
    %1911 = vrot.lane.b32.xlu0 %v1333, 32
    %v1912 = vpop.permute.xlu0 %1911
    %1913 = vrot.lane.b32.xlu0 %v1334, 32
    %v1914 = vpop.permute.xlu0 %1913
    %1915 = vrot.lane.b32.xlu0 %v1335, 32
    %v1916 = vpop.permute.xlu0 %1915
    %1917 = vrot.lane.b32.xlu0 %v1336, 32
    %v1918 = vpop.permute.xlu0 %1917
    %1919 = vrot.lane.b32.xlu0 %v1337, 32
    %v1920 = vpop.permute.xlu0 %1919
    %1921 = vrot.lane.b32.xlu0 %v1338, 32
    %v1922 = vpop.permute.xlu0 %1921
    %1923 = vrot.lane.b32.xlu0 %v1339, 32
    %v1924 = vpop.permute.xlu0 %1923
    %1925 = vrot.lane.b32.xlu0 %v1340, 32
    %v1926 = vpop.permute.xlu0 %1925
    %1927 = vrot.lane.b32.xlu0 %v1341, 32
    %v1928 = vpop.permute.xlu0 %1927
    %1929 = vrot.lane.b32.xlu0 %v1342, 32
    %v1930 = vpop.permute.xlu0 %1929
    %1931 = vrot.lane.b32.xlu0 %v1343, 32
    %v1932 = vpop.permute.xlu0 %1931
    %1933 = vrot.lane.b32.xlu0 %v1344, 32
    %v1934 = vpop.permute.xlu0 %1933
    %1935 = vrot.lane.b32.xlu0 %v1345, 32
    %v1936 = vpop.permute.xlu0 %1935
    %1937 = vrot.lane.b32.xlu0 %v1346, 32
    %v1938 = vpop.permute.xlu0 %1937
    %1939 = vrot.lane.b32.xlu0 %v1347, 32
    %v1940 = vpop.permute.xlu0 %1939
    %1941 = vrot.lane.b32.xlu0 %v1348, 32
    %v1942 = vpop.permute.xlu0 %1941
    %1943 = vrot.lane.b32.xlu0 %v1349, 32
    %v1944 = vpop.permute.xlu0 %1943
    %1945 = vrot.lane.b32.xlu0 %v1350, 32
    %v1946 = vpop.permute.xlu0 %1945
    %1947 = vrot.lane.b32.xlu0 %v1351, 32
    %v1948 = vpop.permute.xlu0 %1947
    %1949 = vrot.lane.b32.xlu0 %v1352, 32
    %v1950 = vpop.permute.xlu0 %1949
    %1951 = vrot.lane.b32.xlu0 %v1353, 32
    %v1952 = vpop.permute.xlu0 %1951
    %1953 = vrot.lane.b32.xlu0 %v1354, 32
    %v1954 = vpop.permute.xlu0 %1953
    %1955 = vrot.lane.b32.xlu0 %v1355, 32
    %v1956 = vpop.permute.xlu0 %1955
    %1957 = vrot.lane.b32.xlu0 %v1356, 32
    %v1958 = vpop.permute.xlu0 %1957
    %1959 = vrot.lane.b32.xlu0 %v1357, 32
    %v1960 = vpop.permute.xlu0 %1959
    %1961 = vrot.lane.b32.xlu0 %v1358, 32
    %v1962 = vpop.permute.xlu0 %1961
    %1963 = vrot.lane.b32.xlu0 %v1359, 32
    %v1964 = vpop.permute.xlu0 %1963
    %1965 = vrot.lane.b32.xlu0 %v1360, 32
    %v1966 = vpop.permute.xlu0 %1965
    %1967 = vrot.lane.b32.xlu0 %v1361, 32
    %v1968 = vpop.permute.xlu0 %1967
    %1969 = vrot.lane.b32.xlu0 %v1362, 32
    %v1970 = vpop.permute.xlu0 %1969
    %1971 = vrot.lane.b32.xlu0 %v1363, 32
    %v1972 = vpop.permute.xlu0 %1971
    %1973 = vrot.lane.b32.xlu0 %v1364, 32
    %v1974 = vpop.permute.xlu0 %1973
    %1975 = vrot.lane.b32.xlu0 %v1365, 32
    %v1976 = vpop.permute.xlu0 %1975
    %1977 = vrot.lane.b32.xlu0 %v1366, 32
    %v1978 = vpop.permute.xlu0 %1977
    %1979 = vrot.lane.b32.xlu0 %v1367, 32
    %v1980 = vpop.permute.xlu0 %1979
    %1981 = vrot.lane.b32.xlu0 %v1368, 32
    %v1982 = vpop.permute.xlu0 %1981
    %1983 = vrot.lane.b32.xlu0 %v1369, 32
    %v1984 = vpop.permute.xlu0 %1983
    %1985 = vrot.lane.b32.xlu0 %v1370, 32
    %v1986 = vpop.permute.xlu0 %1985
    %1987 = vrot.lane.b32.xlu0 %v1371, 32
    %v1988 = vpop.permute.xlu0 %1987
    %1989 = vrot.lane.b32.xlu0 %v1372, 32
    %v1990 = vpop.permute.xlu0 %1989
    %1991 = vrot.lane.b32.xlu0 %v1373, 32
    %v1992 = vpop.permute.xlu0 %1991
    %1993 = vrot.lane.b32.xlu0 %v1374, 32
    %v1994 = vpop.permute.xlu0 %1993
    %1995 = vrot.lane.b32.xlu0 %v1375, 32
    %v1996 = vpop.permute.xlu0 %1995
    %1997 = vrot.lane.b32.xlu0 %v1376, 32
    %v1998 = vpop.permute.xlu0 %1997
    %1999 = vrot.lane.b32.xlu0 %v1377, 32
    %v2000 = vpop.permute.xlu0 %1999
    %2001 = vrot.lane.b32.xlu0 %v1378, 32
    %v2002 = vpop.permute.xlu0 %2001
    %2003 = vrot.lane.b32.xlu0 %v1379, 32
    %v2004 = vpop.permute.xlu0 %2003
    %2005 = vrot.lane.b32.xlu0 %v1380, 32
    %v2006 = vpop.permute.xlu0 %2005
    %2007 = vrot.lane.b32.xlu0 %v1381, 32
    %v2008 = vpop.permute.xlu0 %2007
    %2009 = vrot.lane.b32.xlu0 %v1382, 32
    %v2010 = vpop.permute.xlu0 %2009
    %2011 = vrot.lane.b32.xlu0 %v1383, 32
    %v2012 = vpop.permute.xlu0 %2011
    %2013 = vrot.lane.b32.xlu0 %v1384, 32
    %v2014 = vpop.permute.xlu0 %2013
    %2015 = vrot.lane.b32.xlu0 %v1385, 32
    %v2016 = vpop.permute.xlu0 %2015
    %2017 = vrot.lane.b32.xlu0 %v1386, 32
    %v2018 = vpop.permute.xlu0 %2017
    %2019 = vrot.lane.b32.xlu0 %v1387, 32
    %v2020 = vpop.permute.xlu0 %2019
    %2021 = vrot.lane.b32.xlu0 %v1388, 32
    %v2022 = vpop.permute.xlu0 %2021
    %2023 = vrot.lane.b32.xlu0 %v1389, 32
    %v2024 = vpop.permute.xlu0 %2023
    %2025 = vrot.lane.b32.xlu0 %v1390, 32
    %v2026 = vpop.permute.xlu0 %2025
    %2027 = vrot.lane.b32.xlu0 %v1391, 32
    %v2028 = vpop.permute.xlu0 %2027
    %2029 = vrot.lane.b32.xlu0 %v1392, 32
    %v2030 = vpop.permute.xlu0 %2029
    %2031 = vrot.lane.b32.xlu0 %v1393, 32
    %v2032 = vpop.permute.xlu0 %2031
    %2033 = vrot.lane.b32.xlu0 %v1394, 32
    %v2034 = vpop.permute.xlu0 %2033
    %2035 = vrot.lane.b32.xlu0 %v1395, 32
    %v2036 = vpop.permute.xlu0 %2035
    %2165 = vrot.lane.b32.xlu0 %v1396, 64
    %v2166 = vpop.permute.xlu0 %2165
    %2167 = vrot.lane.b32.xlu0 %v1397, 64
    %v2168 = vpop.permute.xlu0 %2167
    %2169 = vrot.lane.b32.xlu0 %v1398, 64
    %v2170 = vpop.permute.xlu0 %2169
    %2171 = vrot.lane.b32.xlu0 %v1399, 64
    %v2172 = vpop.permute.xlu0 %2171
    %2173 = vrot.lane.b32.xlu0 %v1400, 64
    %v2174 = vpop.permute.xlu0 %2173
    %2175 = vrot.lane.b32.xlu0 %v1401, 64
    %v2176 = vpop.permute.xlu0 %2175
    %2177 = vrot.lane.b32.xlu0 %v1402, 64
    %v2178 = vpop.permute.xlu0 %2177
    %2179 = vrot.lane.b32.xlu0 %v1403, 64
    %v2180 = vpop.permute.xlu0 %2179
    %2181 = vrot.lane.b32.xlu0 %v1404, 64
    %v2182 = vpop.permute.xlu0 %2181
    %2183 = vrot.lane.b32.xlu0 %v1405, 64
    %v2184 = vpop.permute.xlu0 %2183
    %2185 = vrot.lane.b32.xlu0 %v1406, 64
    %v2186 = vpop.permute.xlu0 %2185
    %2187 = vrot.lane.b32.xlu0 %v1407, 64
    %v2188 = vpop.permute.xlu0 %2187
    %2189 = vrot.lane.b32.xlu0 %v1408, 64
    %v2190 = vpop.permute.xlu0 %2189
    %2191 = vrot.lane.b32.xlu0 %v1409, 64
    %v2192 = vpop.permute.xlu0 %2191
    %2193 = vrot.lane.b32.xlu0 %v1410, 64
    %v2194 = vpop.permute.xlu0 %2193
    %2195 = vrot.lane.b32.xlu0 %v1411, 64
    %v2196 = vpop.permute.xlu0 %2195
    %2197 = vrot.lane.b32.xlu0 %v1412, 64
    %v2198 = vpop.permute.xlu0 %2197
    %2199 = vrot.lane.b32.xlu0 %v1413, 64
    %v2200 = vpop.permute.xlu0 %2199
    %2201 = vrot.lane.b32.xlu0 %v1414, 64
    %v2202 = vpop.permute.xlu0 %2201
    %2203 = vrot.lane.b32.xlu0 %v1415, 64
    %v2204 = vpop.permute.xlu0 %2203
    %2205 = vrot.lane.b32.xlu0 %v1416, 64
    %v2206 = vpop.permute.xlu0 %2205
    %2207 = vrot.lane.b32.xlu0 %v1417, 64
    %v2208 = vpop.permute.xlu0 %2207
    %2209 = vrot.lane.b32.xlu0 %v1418, 64
    %v2210 = vpop.permute.xlu0 %2209
    %2211 = vrot.lane.b32.xlu0 %v1419, 64
    %v2212 = vpop.permute.xlu0 %2211
    %2213 = vrot.lane.b32.xlu0 %v1420, 64
    %v2214 = vpop.permute.xlu0 %2213
    %2215 = vrot.lane.b32.xlu0 %v1421, 64
    %v2216 = vpop.permute.xlu0 %2215
    %2217 = vrot.lane.b32.xlu0 %v1422, 64
    %v2218 = vpop.permute.xlu0 %2217
    %2219 = vrot.lane.b32.xlu0 %v1423, 64
    %v2220 = vpop.permute.xlu0 %2219
    %2221 = vrot.lane.b32.xlu0 %v1424, 64
    %v2222 = vpop.permute.xlu0 %2221
    %2223 = vrot.lane.b32.xlu0 %v1425, 64
    %v2224 = vpop.permute.xlu0 %2223
    %2225 = vrot.lane.b32.xlu0 %v1426, 64
    %v2226 = vpop.permute.xlu0 %2225
    %2227 = vrot.lane.b32.xlu0 %v1427, 64
    %v2228 = vpop.permute.xlu0 %2227
    %2229 = vrot.lane.b32.xlu0 %v1428, 64
    %v2230 = vpop.permute.xlu0 %2229
    %2231 = vrot.lane.b32.xlu0 %v1429, 64
    %v2232 = vpop.permute.xlu0 %2231
    %2233 = vrot.lane.b32.xlu0 %v1430, 64
    %v2234 = vpop.permute.xlu0 %2233
    %2235 = vrot.lane.b32.xlu0 %v1431, 64
    %v2236 = vpop.permute.xlu0 %2235
    %2237 = vrot.lane.b32.xlu0 %v1432, 64
    %v2238 = vpop.permute.xlu0 %2237
    %2239 = vrot.lane.b32.xlu0 %v1433, 64
    %v2240 = vpop.permute.xlu0 %2239
    %2241 = vrot.lane.b32.xlu0 %v1434, 64
    %v2242 = vpop.permute.xlu0 %2241
    %2243 = vrot.lane.b32.xlu0 %v1435, 64
    %v2244 = vpop.permute.xlu0 %2243
    %2245 = vrot.lane.b32.xlu0 %v1436, 64
    %v2246 = vpop.permute.xlu0 %2245
    %2247 = vrot.lane.b32.xlu0 %v1437, 64
    %v2248 = vpop.permute.xlu0 %2247
    %2249 = vrot.lane.b32.xlu0 %v1438, 64
    %v2250 = vpop.permute.xlu0 %2249
    %2251 = vrot.lane.b32.xlu0 %v1439, 64
    %v2252 = vpop.permute.xlu0 %2251
    %2253 = vrot.lane.b32.xlu0 %v1440, 64
    %v2254 = vpop.permute.xlu0 %2253
    %2255 = vrot.lane.b32.xlu0 %v1441, 64
    %v2256 = vpop.permute.xlu0 %2255
    %2257 = vrot.lane.b32.xlu0 %v1442, 64
    %v2258 = vpop.permute.xlu0 %2257
    %2259 = vrot.lane.b32.xlu0 %v1443, 64
    %v2260 = vpop.permute.xlu0 %2259
    %2261 = vrot.lane.b32.xlu0 %v1444, 64
    %v2262 = vpop.permute.xlu0 %2261
    %2263 = vrot.lane.b32.xlu0 %v1445, 64
    %v2264 = vpop.permute.xlu0 %2263
    %2265 = vrot.lane.b32.xlu0 %v1446, 64
    %v2266 = vpop.permute.xlu0 %2265
    %2267 = vrot.lane.b32.xlu0 %v1447, 64
    %v2268 = vpop.permute.xlu0 %2267
    %2269 = vrot.lane.b32.xlu0 %v1448, 64
    %v2270 = vpop.permute.xlu0 %2269
    %2271 = vrot.lane.b32.xlu0 %v1449, 64
    %v2272 = vpop.permute.xlu0 %2271
    %2273 = vrot.lane.b32.xlu0 %v1450, 64
    %v2274 = vpop.permute.xlu0 %2273
    %2275 = vrot.lane.b32.xlu0 %v1451, 64
    %v2276 = vpop.permute.xlu0 %2275
    %2277 = vrot.lane.b32.xlu0 %v1452, 64
    %v2278 = vpop.permute.xlu0 %2277
    %2279 = vrot.lane.b32.xlu0 %v1453, 64
    %v2280 = vpop.permute.xlu0 %2279
    %2281 = vrot.lane.b32.xlu0 %v1454, 64
    %v2282 = vpop.permute.xlu0 %2281
    %2283 = vrot.lane.b32.xlu0 %v1455, 64
    %v2284 = vpop.permute.xlu0 %2283
    %2285 = vrot.lane.b32.xlu0 %v1456, 64
    %v2286 = vpop.permute.xlu0 %2285
    %2287 = vrot.lane.b32.xlu0 %v1457, 64
    %v2288 = vpop.permute.xlu0 %2287
    %2289 = vrot.lane.b32.xlu0 %v1458, 64
    %v2290 = vpop.permute.xlu0 %2289
    %2291 = vrot.lane.b32.xlu0 %v1459, 64
    %v2292 = vpop.permute.xlu0 %2291
    %2421 = vrot.lane.b32.xlu0 %v1460, 96
    %v2422 = vpop.permute.xlu0 %2421
    %2423 = vrot.lane.b32.xlu0 %v1461, 96
    %v2424 = vpop.permute.xlu0 %2423
    %2425 = vrot.lane.b32.xlu0 %v1462, 96
    %v2426 = vpop.permute.xlu0 %2425
    %2427 = vrot.lane.b32.xlu0 %v1463, 96
    %v2428 = vpop.permute.xlu0 %2427
    %2429 = vrot.lane.b32.xlu0 %v1464, 96
    %v2430 = vpop.permute.xlu0 %2429
    %2431 = vrot.lane.b32.xlu0 %v1465, 96
    %v2432 = vpop.permute.xlu0 %2431
    %2433 = vrot.lane.b32.xlu0 %v1466, 96
    %v2434 = vpop.permute.xlu0 %2433
    %2435 = vrot.lane.b32.xlu0 %v1467, 96
    %v2436 = vpop.permute.xlu0 %2435
    %2437 = vrot.lane.b32.xlu0 %v1468, 96
    %v2438 = vpop.permute.xlu0 %2437
    %2439 = vrot.lane.b32.xlu0 %v1469, 96
    %v2440 = vpop.permute.xlu0 %2439
    %2441 = vrot.lane.b32.xlu0 %v1470, 96
    %v2442 = vpop.permute.xlu0 %2441
    %2443 = vrot.lane.b32.xlu0 %v1471, 96
    %v2444 = vpop.permute.xlu0 %2443
    %2445 = vrot.lane.b32.xlu0 %v1472, 96
    %v2446 = vpop.permute.xlu0 %2445
    %2447 = vrot.lane.b32.xlu0 %v1473, 96
    %v2448 = vpop.permute.xlu0 %2447
    %2449 = vrot.lane.b32.xlu0 %v1474, 96
    %v2450 = vpop.permute.xlu0 %2449
    %2451 = vrot.lane.b32.xlu0 %v1475, 96
    %v2452 = vpop.permute.xlu0 %2451
    %2453 = vrot.lane.b32.xlu0 %v1476, 96
    %v2454 = vpop.permute.xlu0 %2453
    %2455 = vrot.lane.b32.xlu0 %v1477, 96
    %v2456 = vpop.permute.xlu0 %2455
    %2457 = vrot.lane.b32.xlu0 %v1478, 96
    %v2458 = vpop.permute.xlu0 %2457
    %2459 = vrot.lane.b32.xlu0 %v1479, 96
    %v2460 = vpop.permute.xlu0 %2459
    %2461 = vrot.lane.b32.xlu0 %v1480, 96
    %v2462 = vpop.permute.xlu0 %2461
    %2463 = vrot.lane.b32.xlu0 %v1481, 96
    %v2464 = vpop.permute.xlu0 %2463
    %2465 = vrot.lane.b32.xlu0 %v1482, 96
    %v2466 = vpop.permute.xlu0 %2465
    %2467 = vrot.lane.b32.xlu0 %v1483, 96
    %v2468 = vpop.permute.xlu0 %2467
    %2469 = vrot.lane.b32.xlu0 %v1484, 96
    %v2470 = vpop.permute.xlu0 %2469
    %2471 = vrot.lane.b32.xlu0 %v1485, 96
    %v2472 = vpop.permute.xlu0 %2471
    %2473 = vrot.lane.b32.xlu0 %v1486, 96
    %v2474 = vpop.permute.xlu0 %2473
    %2475 = vrot.lane.b32.xlu0 %v1487, 96
    %v2476 = vpop.permute.xlu0 %2475
    %2477 = vrot.lane.b32.xlu0 %v1488, 96
    %v2478 = vpop.permute.xlu0 %2477
    %2479 = vrot.lane.b32.xlu0 %v1489, 96
    %v2480 = vpop.permute.xlu0 %2479
    %2481 = vrot.lane.b32.xlu0 %v1490, 96
    %v2482 = vpop.permute.xlu0 %2481
    %2483 = vrot.lane.b32.xlu0 %v1491, 96
    %v2484 = vpop.permute.xlu0 %2483
    %2485 = vrot.lane.b32.xlu0 %v1492, 96
    %v2486 = vpop.permute.xlu0 %2485
    %2487 = vrot.lane.b32.xlu0 %v1493, 96
    %v2488 = vpop.permute.xlu0 %2487
    %2489 = vrot.lane.b32.xlu0 %v1494, 96
    %v2490 = vpop.permute.xlu0 %2489
    %2491 = vrot.lane.b32.xlu0 %v1495, 96
    %v2492 = vpop.permute.xlu0 %2491
    %2493 = vrot.lane.b32.xlu0 %v1496, 96
    %v2494 = vpop.permute.xlu0 %2493
    %2495 = vrot.lane.b32.xlu0 %v1497, 96
    %v2496 = vpop.permute.xlu0 %2495
    %2497 = vrot.lane.b32.xlu0 %v1498, 96
    %v2498 = vpop.permute.xlu0 %2497
    %2499 = vrot.lane.b32.xlu0 %v1499, 96
    %v2500 = vpop.permute.xlu0 %2499
    %2501 = vrot.lane.b32.xlu0 %v1500, 96
    %v2502 = vpop.permute.xlu0 %2501
    %2503 = vrot.lane.b32.xlu0 %v1501, 96
    %v2504 = vpop.permute.xlu0 %2503
    %2505 = vrot.lane.b32.xlu0 %v1502, 96
    %v2506 = vpop.permute.xlu0 %2505
    %2507 = vrot.lane.b32.xlu0 %v1503, 96
    %v2508 = vpop.permute.xlu0 %2507
    %2509 = vrot.lane.b32.xlu0 %v1504, 96
    %v2510 = vpop.permute.xlu0 %2509
    %2511 = vrot.lane.b32.xlu0 %v1505, 96
    %v2512 = vpop.permute.xlu0 %2511
    %2513 = vrot.lane.b32.xlu0 %v1506, 96
    %v2514 = vpop.permute.xlu0 %2513
    %2515 = vrot.lane.b32.xlu0 %v1507, 96
    %v2516 = vpop.permute.xlu0 %2515
    %2517 = vrot.lane.b32.xlu0 %v1508, 96
    %v2518 = vpop.permute.xlu0 %2517
    %2519 = vrot.lane.b32.xlu0 %v1509, 96
    %v2520 = vpop.permute.xlu0 %2519
    %2521 = vrot.lane.b32.xlu0 %v1510, 96
    %v2522 = vpop.permute.xlu0 %2521
    %2523 = vrot.lane.b32.xlu0 %v1511, 96
    %v2524 = vpop.permute.xlu0 %2523
    %2525 = vrot.lane.b32.xlu0 %v1512, 96
    %v2526 = vpop.permute.xlu0 %2525
    %2527 = vrot.lane.b32.xlu0 %v1513, 96
    %v2528 = vpop.permute.xlu0 %2527
    %2529 = vrot.lane.b32.xlu0 %v1514, 96
    %v2530 = vpop.permute.xlu0 %2529
    %2531 = vrot.lane.b32.xlu0 %v1515, 96
    %v2532 = vpop.permute.xlu0 %2531
    %2533 = vrot.lane.b32.xlu0 %v1516, 96
    %v2534 = vpop.permute.xlu0 %2533
    %2535 = vrot.lane.b32.xlu0 %v1517, 96
    %v2536 = vpop.permute.xlu0 %2535
    %2537 = vrot.lane.b32.xlu0 %v1518, 96
    %v2538 = vpop.permute.xlu0 %2537
    %2539 = vrot.lane.b32.xlu0 %v1519, 96
    %v2540 = vpop.permute.xlu0 %2539
    %2541 = vrot.lane.b32.xlu0 %v1520, 96
    %v2542 = vpop.permute.xlu0 %2541
    %2543 = vrot.lane.b32.xlu0 %v1521, 96
    %v2544 = vpop.permute.xlu0 %2543
    %2545 = vrot.lane.b32.xlu0 %v1522, 96
    %v2546 = vpop.permute.xlu0 %2545
    %2547 = vrot.lane.b32.xlu0 %v1523, 96
    %v2548 = vpop.permute.xlu0 %2547
    %2677 = vrot.lane.b32.xlu0 %v1588, 32
    %v2678 = vpop.permute.xlu0 %2677
    %2679 = vrot.lane.b32.xlu0 %v1589, 32
    %v2680 = vpop.permute.xlu0 %2679
    %2681 = vrot.lane.b32.xlu0 %v1590, 32
    %v2682 = vpop.permute.xlu0 %2681
    %2683 = vrot.lane.b32.xlu0 %v1591, 32
    %v2684 = vpop.permute.xlu0 %2683
    %2685 = vrot.lane.b32.xlu0 %v1592, 32
    %v2686 = vpop.permute.xlu0 %2685
    %2687 = vrot.lane.b32.xlu0 %v1593, 32
    %v2688 = vpop.permute.xlu0 %2687
    %2689 = vrot.lane.b32.xlu0 %v1594, 32
    %v2690 = vpop.permute.xlu0 %2689
    %2691 = vrot.lane.b32.xlu0 %v1595, 32
    %v2692 = vpop.permute.xlu0 %2691
    %2693 = vrot.lane.b32.xlu0 %v1596, 32
    %v2694 = vpop.permute.xlu0 %2693
    %2695 = vrot.lane.b32.xlu0 %v1597, 32
    %v2696 = vpop.permute.xlu0 %2695
    %2697 = vrot.lane.b32.xlu0 %v1598, 32
    %v2698 = vpop.permute.xlu0 %2697
    %2699 = vrot.lane.b32.xlu0 %v1599, 32
    %v2700 = vpop.permute.xlu0 %2699
    %2701 = vrot.lane.b32.xlu0 %v1600, 32
    %v2702 = vpop.permute.xlu0 %2701
    %2703 = vrot.lane.b32.xlu0 %v1601, 32
    %v2704 = vpop.permute.xlu0 %2703
    %2705 = vrot.lane.b32.xlu0 %v1602, 32
    %v2706 = vpop.permute.xlu0 %2705
    %2707 = vrot.lane.b32.xlu0 %v1603, 32
    %v2708 = vpop.permute.xlu0 %2707
    %2709 = vrot.lane.b32.xlu0 %v1604, 32
    %v2710 = vpop.permute.xlu0 %2709
    %2711 = vrot.lane.b32.xlu0 %v1605, 32
    %v2712 = vpop.permute.xlu0 %2711
    %2713 = vrot.lane.b32.xlu0 %v1606, 32
    %v2714 = vpop.permute.xlu0 %2713
    %2715 = vrot.lane.b32.xlu0 %v1607, 32
    %v2716 = vpop.permute.xlu0 %2715
    %2717 = vrot.lane.b32.xlu0 %v1608, 32
    %v2718 = vpop.permute.xlu0 %2717
    %2719 = vrot.lane.b32.xlu0 %v1609, 32
    %v2720 = vpop.permute.xlu0 %2719
    %2721 = vrot.lane.b32.xlu0 %v1610, 32
    %v2722 = vpop.permute.xlu0 %2721
    %2723 = vrot.lane.b32.xlu0 %v1611, 32
    %v2724 = vpop.permute.xlu0 %2723
    %2725 = vrot.lane.b32.xlu0 %v1612, 32
    %v2726 = vpop.permute.xlu0 %2725
    %2727 = vrot.lane.b32.xlu0 %v1613, 32
    %v2728 = vpop.permute.xlu0 %2727
    %2729 = vrot.lane.b32.xlu0 %v1614, 32
    %v2730 = vpop.permute.xlu0 %2729
    %2731 = vrot.lane.b32.xlu0 %v1615, 32
    %v2732 = vpop.permute.xlu0 %2731
    %2733 = vrot.lane.b32.xlu0 %v1616, 32
    %v2734 = vpop.permute.xlu0 %2733
    %2735 = vrot.lane.b32.xlu0 %v1617, 32
    %v2736 = vpop.permute.xlu0 %2735
    %2737 = vrot.lane.b32.xlu0 %v1618, 32
    %v2738 = vpop.permute.xlu0 %2737
    %2739 = vrot.lane.b32.xlu0 %v1619, 32
    %v2740 = vpop.permute.xlu0 %2739
    %2741 = vrot.lane.b32.xlu0 %v1620, 32
    %v2742 = vpop.permute.xlu0 %2741
    %2743 = vrot.lane.b32.xlu0 %v1621, 32
    %v2744 = vpop.permute.xlu0 %2743
    %2745 = vrot.lane.b32.xlu0 %v1622, 32
    %v2746 = vpop.permute.xlu0 %2745
    %2747 = vrot.lane.b32.xlu0 %v1623, 32
    %v2748 = vpop.permute.xlu0 %2747
    %2749 = vrot.lane.b32.xlu0 %v1624, 32
    %v2750 = vpop.permute.xlu0 %2749
    %2751 = vrot.lane.b32.xlu0 %v1625, 32
    %v2752 = vpop.permute.xlu0 %2751
    %2753 = vrot.lane.b32.xlu0 %v1626, 32
    %v2754 = vpop.permute.xlu0 %2753
    %2755 = vrot.lane.b32.xlu0 %v1627, 32
    %v2756 = vpop.permute.xlu0 %2755
    %2757 = vrot.lane.b32.xlu0 %v1628, 32
    %v2758 = vpop.permute.xlu0 %2757
    %2759 = vrot.lane.b32.xlu0 %v1629, 32
    %v2760 = vpop.permute.xlu0 %2759
    %2761 = vrot.lane.b32.xlu0 %v1630, 32
    %v2762 = vpop.permute.xlu0 %2761
    %2763 = vrot.lane.b32.xlu0 %v1631, 32
    %v2764 = vpop.permute.xlu0 %2763
    %2765 = vrot.lane.b32.xlu0 %v1632, 32
    %v2766 = vpop.permute.xlu0 %2765
    %2767 = vrot.lane.b32.xlu0 %v1633, 32
    %v2768 = vpop.permute.xlu0 %2767
    %2769 = vrot.lane.b32.xlu0 %v1634, 32
    %v2770 = vpop.permute.xlu0 %2769
    %2771 = vrot.lane.b32.xlu0 %v1635, 32
    %v2772 = vpop.permute.xlu0 %2771
    %2773 = vrot.lane.b32.xlu0 %v1636, 32
    %v2774 = vpop.permute.xlu0 %2773
    %2775 = vrot.lane.b32.xlu0 %v1637, 32
    %v2776 = vpop.permute.xlu0 %2775
    %2777 = vrot.lane.b32.xlu0 %v1638, 32
    %v2778 = vpop.permute.xlu0 %2777
    %2779 = vrot.lane.b32.xlu0 %v1639, 32
    %v2780 = vpop.permute.xlu0 %2779
    %2781 = vrot.lane.b32.xlu0 %v1640, 32
    %v2782 = vpop.permute.xlu0 %2781
    %2783 = vrot.lane.b32.xlu0 %v1641, 32
    %v2784 = vpop.permute.xlu0 %2783
    %2785 = vrot.lane.b32.xlu0 %v1642, 32
    %v2786 = vpop.permute.xlu0 %2785
    %2787 = vrot.lane.b32.xlu0 %v1643, 32
    %v2788 = vpop.permute.xlu0 %2787
    %2789 = vrot.lane.b32.xlu0 %v1644, 32
    %v2790 = vpop.permute.xlu0 %2789
    %2791 = vrot.lane.b32.xlu0 %v1645, 32
    %v2792 = vpop.permute.xlu0 %2791
    %2793 = vrot.lane.b32.xlu0 %v1646, 32
    %v2794 = vpop.permute.xlu0 %2793
    %2795 = vrot.lane.b32.xlu0 %v1647, 32
    %v2796 = vpop.permute.xlu0 %2795
    %2797 = vrot.lane.b32.xlu0 %v1648, 32
    %v2798 = vpop.permute.xlu0 %2797
    %2799 = vrot.lane.b32.xlu0 %v1649, 32
    %v2800 = vpop.permute.xlu0 %2799
    %2801 = vrot.lane.b32.xlu0 %v1650, 32
    %v2802 = vpop.permute.xlu0 %2801
    %2803 = vrot.lane.b32.xlu0 %v1651, 32
    %v2804 = vpop.permute.xlu0 %2803
    %2933 = vrot.lane.b32.xlu0 %v1653, 64
    %v2934 = vpop.permute.xlu0 %2933
    %2935 = vrot.lane.b32.xlu0 %v1654, 64
    %v2936 = vpop.permute.xlu0 %2935
    %2937 = vrot.lane.b32.xlu0 %v1655, 64
    %v2938 = vpop.permute.xlu0 %2937
    %2939 = vrot.lane.b32.xlu0 %v1656, 64
    %v2940 = vpop.permute.xlu0 %2939
    %2941 = vrot.lane.b32.xlu0 %v1657, 64
    %v2942 = vpop.permute.xlu0 %2941
    %2943 = vrot.lane.b32.xlu0 %v1658, 64
    %v2944 = vpop.permute.xlu0 %2943
    %2945 = vrot.lane.b32.xlu0 %v1659, 64
    %v2946 = vpop.permute.xlu0 %2945
    %2947 = vrot.lane.b32.xlu0 %v1660, 64
    %v2948 = vpop.permute.xlu0 %2947
    %2949 = vrot.lane.b32.xlu0 %v1661, 64
    %v2950 = vpop.permute.xlu0 %2949
    %2951 = vrot.lane.b32.xlu0 %v1662, 64
    %v2952 = vpop.permute.xlu0 %2951
    %2953 = vrot.lane.b32.xlu0 %v1663, 64
    %v2954 = vpop.permute.xlu0 %2953
    %2955 = vrot.lane.b32.xlu0 %v1664, 64
    %v2956 = vpop.permute.xlu0 %2955
    %2957 = vrot.lane.b32.xlu0 %v1665, 64
    %v2958 = vpop.permute.xlu0 %2957
    %2959 = vrot.lane.b32.xlu0 %v1666, 64
    %v2960 = vpop.permute.xlu0 %2959
    %2961 = vrot.lane.b32.xlu0 %v1667, 64
    %v2962 = vpop.permute.xlu0 %2961
    %2963 = vrot.lane.b32.xlu0 %v1668, 64
    %v2964 = vpop.permute.xlu0 %2963
    %2965 = vrot.lane.b32.xlu0 %v1669, 64
    %v2966 = vpop.permute.xlu0 %2965
    %2967 = vrot.lane.b32.xlu0 %v1670, 64
    %v2968 = vpop.permute.xlu0 %2967
    %2969 = vrot.lane.b32.xlu0 %v1671, 64
    %v2970 = vpop.permute.xlu0 %2969
    %2971 = vrot.lane.b32.xlu0 %v1672, 64
    %v2972 = vpop.permute.xlu0 %2971
    %2973 = vrot.lane.b32.xlu0 %v1673, 64
    %v2974 = vpop.permute.xlu0 %2973
    %2975 = vrot.lane.b32.xlu0 %v1674, 64
    %v2976 = vpop.permute.xlu0 %2975
    %2977 = vrot.lane.b32.xlu0 %v1675, 64
    %v2978 = vpop.permute.xlu0 %2977
    %2979 = vrot.lane.b32.xlu0 %v1676, 64
    %v2980 = vpop.permute.xlu0 %2979
    %2981 = vrot.lane.b32.xlu0 %v1677, 64
    %v2982 = vpop.permute.xlu0 %2981
    %2983 = vrot.lane.b32.xlu0 %v1678, 64
    %v2984 = vpop.permute.xlu0 %2983
    %2985 = vrot.lane.b32.xlu0 %v1679, 64
    %v2986 = vpop.permute.xlu0 %2985
    %2987 = vrot.lane.b32.xlu0 %v1680, 64
    %v2988 = vpop.permute.xlu0 %2987
    %2989 = vrot.lane.b32.xlu0 %v1681, 64
    %v2990 = vpop.permute.xlu0 %2989
    %2991 = vrot.lane.b32.xlu0 %v1682, 64
    %v2992 = vpop.permute.xlu0 %2991
    %2993 = vrot.lane.b32.xlu0 %v1683, 64
    %v2994 = vpop.permute.xlu0 %2993
    %2995 = vrot.lane.b32.xlu0 %v1684, 64
    %v2996 = vpop.permute.xlu0 %2995
    %2997 = vrot.lane.b32.xlu0 %v1685, 64
    %v2998 = vpop.permute.xlu0 %2997
    %2999 = vrot.lane.b32.xlu0 %v1686, 64
    %v3000 = vpop.permute.xlu0 %2999
    %3001 = vrot.lane.b32.xlu0 %v1687, 64
    %v3002 = vpop.permute.xlu0 %3001
    %3003 = vrot.lane.b32.xlu0 %v1688, 64
    %v3004 = vpop.permute.xlu0 %3003
    %3005 = vrot.lane.b32.xlu0 %v1689, 64
    %v3006 = vpop.permute.xlu0 %3005
    %3007 = vrot.lane.b32.xlu0 %v1690, 64
    %v3008 = vpop.permute.xlu0 %3007
    %3009 = vrot.lane.b32.xlu0 %v1691, 64
    %v3010 = vpop.permute.xlu0 %3009
    %3011 = vrot.lane.b32.xlu0 %v1692, 64
    %v3012 = vpop.permute.xlu0 %3011
    %3013 = vrot.lane.b32.xlu0 %v1693, 64
    %v3014 = vpop.permute.xlu0 %3013
    %3015 = vrot.lane.b32.xlu0 %v1694, 64
    %v3016 = vpop.permute.xlu0 %3015
    %3017 = vrot.lane.b32.xlu0 %v1695, 64
    %v3018 = vpop.permute.xlu0 %3017
    %3019 = vrot.lane.b32.xlu0 %v1696, 64
    %v3020 = vpop.permute.xlu0 %3019
    %3021 = vrot.lane.b32.xlu0 %v1697, 64
    %v3022 = vpop.permute.xlu0 %3021
    %3023 = vrot.lane.b32.xlu0 %v1698, 64
    %v3024 = vpop.permute.xlu0 %3023
    %3025 = vrot.lane.b32.xlu0 %v1699, 64
    %v3026 = vpop.permute.xlu0 %3025
    %3027 = vrot.lane.b32.xlu0 %v1700, 64
    %v3028 = vpop.permute.xlu0 %3027
    %3029 = vrot.lane.b32.xlu0 %v1701, 64
    %v3030 = vpop.permute.xlu0 %3029
    %3031 = vrot.lane.b32.xlu0 %v1702, 64
    %v3032 = vpop.permute.xlu0 %3031
    %3033 = vrot.lane.b32.xlu0 %v1703, 64
    %v3034 = vpop.permute.xlu0 %3033
    %3035 = vrot.lane.b32.xlu0 %v1704, 64
    %v3036 = vpop.permute.xlu0 %3035
    %3037 = vrot.lane.b32.xlu0 %v1705, 64
    %v3038 = vpop.permute.xlu0 %3037
    %3039 = vrot.lane.b32.xlu0 %v1706, 64
    %v3040 = vpop.permute.xlu0 %3039
    %3041 = vrot.lane.b32.xlu0 %v1707, 64
    %v3042 = vpop.permute.xlu0 %3041
    %3043 = vrot.lane.b32.xlu0 %v1708, 64
    %v3044 = vpop.permute.xlu0 %3043
    %3045 = vrot.lane.b32.xlu0 %v1709, 64
    %v3046 = vpop.permute.xlu0 %3045
    %3047 = vrot.lane.b32.xlu0 %v1710, 64
    %v3048 = vpop.permute.xlu0 %3047
    %3049 = vrot.lane.b32.xlu0 %v1711, 64
    %v3050 = vpop.permute.xlu0 %3049
    %3051 = vrot.lane.b32.xlu0 %v1712, 64
    %v3052 = vpop.permute.xlu0 %3051
    %3053 = vrot.lane.b32.xlu0 %v1713, 64
    %v3054 = vpop.permute.xlu0 %3053
    %3055 = vrot.lane.b32.xlu0 %v1714, 64
    %v3056 = vpop.permute.xlu0 %3055
    %3057 = vrot.lane.b32.xlu0 %v1715, 64
    %v3058 = vpop.permute.xlu0 %3057
    %3059 = vrot.lane.b32.xlu0 %v1716, 64
    %v3060 = vpop.permute.xlu0 %3059
    %3189 = vrot.lane.b32.xlu0 %v1717, 96
    %v3190 = vpop.permute.xlu0 %3189
    %3191 = vrot.lane.b32.xlu0 %v1718, 96
    %v3192 = vpop.permute.xlu0 %3191
    %3193 = vrot.lane.b32.xlu0 %v1719, 96
    %v3194 = vpop.permute.xlu0 %3193
    %3195 = vrot.lane.b32.xlu0 %v1720, 96
    %v3196 = vpop.permute.xlu0 %3195
    %3197 = vrot.lane.b32.xlu0 %v1721, 96
    %v3198 = vpop.permute.xlu0 %3197
    %3199 = vrot.lane.b32.xlu0 %v1722, 96
    %v3200 = vpop.permute.xlu0 %3199
    %3201 = vrot.lane.b32.xlu0 %v1723, 96
    %v3202 = vpop.permute.xlu0 %3201
    %3203 = vrot.lane.b32.xlu0 %v1724, 96
    %v3204 = vpop.permute.xlu0 %3203
    %3205 = vrot.lane.b32.xlu0 %v1725, 96
    %v3206 = vpop.permute.xlu0 %3205
    %3207 = vrot.lane.b32.xlu0 %v1726, 96
    %v3208 = vpop.permute.xlu0 %3207
    %3209 = vrot.lane.b32.xlu0 %v1727, 96
    %v3210 = vpop.permute.xlu0 %3209
    %3211 = vrot.lane.b32.xlu0 %v1728, 96
    %v3212 = vpop.permute.xlu0 %3211
    %3213 = vrot.lane.b32.xlu0 %v1729, 96
    %v3214 = vpop.permute.xlu0 %3213
    %3215 = vrot.lane.b32.xlu0 %v1730, 96
    %v3216 = vpop.permute.xlu0 %3215
    %3217 = vrot.lane.b32.xlu0 %v1731, 96
    %v3218 = vpop.permute.xlu0 %3217
    %3219 = vrot.lane.b32.xlu0 %v1732, 96
    %v3220 = vpop.permute.xlu0 %3219
    %3221 = vrot.lane.b32.xlu0 %v1733, 96
    %v3222 = vpop.permute.xlu0 %3221
    %3223 = vrot.lane.b32.xlu0 %v1734, 96
    %v3224 = vpop.permute.xlu0 %3223
    %3225 = vrot.lane.b32.xlu0 %v1735, 96
    %v3226 = vpop.permute.xlu0 %3225
    %3227 = vrot.lane.b32.xlu0 %v1736, 96
    %v3228 = vpop.permute.xlu0 %3227
    %3229 = vrot.lane.b32.xlu0 %v1737, 96
    %v3230 = vpop.permute.xlu0 %3229
    %3231 = vrot.lane.b32.xlu0 %v1738, 96
    %v3232 = vpop.permute.xlu0 %3231
    %3233 = vrot.lane.b32.xlu0 %v1739, 96
    %v3234 = vpop.permute.xlu0 %3233
    %3235 = vrot.lane.b32.xlu0 %v1740, 96
    %v3236 = vpop.permute.xlu0 %3235
    %3237 = vrot.lane.b32.xlu0 %v1741, 96
    %v3238 = vpop.permute.xlu0 %3237
    %3239 = vrot.lane.b32.xlu0 %v1742, 96
    %v3240 = vpop.permute.xlu0 %3239
    %3241 = vrot.lane.b32.xlu0 %v1743, 96
    %v3242 = vpop.permute.xlu0 %3241
    %3243 = vrot.lane.b32.xlu0 %v1744, 96
    %v3244 = vpop.permute.xlu0 %3243
    %3245 = vrot.lane.b32.xlu0 %v1745, 96
    %v3246 = vpop.permute.xlu0 %3245
    %3247 = vrot.lane.b32.xlu0 %v1746, 96
    %v3248 = vpop.permute.xlu0 %3247
    %3249 = vrot.lane.b32.xlu0 %v1747, 96
    %v3250 = vpop.permute.xlu0 %3249
    %3251 = vrot.lane.b32.xlu0 %v1748, 96
    %v3252 = vpop.permute.xlu0 %3251
    %3253 = vrot.lane.b32.xlu0 %v1749, 96
    %v3254 = vpop.permute.xlu0 %3253
    %3255 = vrot.lane.b32.xlu0 %v1750, 96
    %v3256 = vpop.permute.xlu0 %3255
    %3257 = vrot.lane.b32.xlu0 %v1751, 96
    %v3258 = vpop.permute.xlu0 %3257
    %3259 = vrot.lane.b32.xlu0 %v1752, 96
    %v3260 = vpop.permute.xlu0 %3259
    %3261 = vrot.lane.b32.xlu0 %v1753, 96
    %v3262 = vpop.permute.xlu0 %3261
    %3263 = vrot.lane.b32.xlu0 %v1754, 96
    %v3264 = vpop.permute.xlu0 %3263
    %3265 = vrot.lane.b32.xlu0 %v1755, 96
    %v3266 = vpop.permute.xlu0 %3265
    %3267 = vrot.lane.b32.xlu0 %v1756, 96
    %v3268 = vpop.permute.xlu0 %3267
    %3269 = vrot.lane.b32.xlu0 %v1757, 96
    %v3270 = vpop.permute.xlu0 %3269
    %3271 = vrot.lane.b32.xlu0 %v1758, 96
    %v3272 = vpop.permute.xlu0 %3271
    %3273 = vrot.lane.b32.xlu0 %v1759, 96
    %v3274 = vpop.permute.xlu0 %3273
    %3275 = vrot.lane.b32.xlu0 %v1760, 96
    %v3276 = vpop.permute.xlu0 %3275
    %3277 = vrot.lane.b32.xlu0 %v1761, 96
    %v3278 = vpop.permute.xlu0 %3277
    %3279 = vrot.lane.b32.xlu0 %v1762, 96
    %v3280 = vpop.permute.xlu0 %3279
    %3281 = vrot.lane.b32.xlu0 %v1763, 96
    %v3282 = vpop.permute.xlu0 %3281
    %3283 = vrot.lane.b32.xlu0 %v1764, 96
    %v3284 = vpop.permute.xlu0 %3283
    %3285 = vrot.lane.b32.xlu0 %v1765, 96
    %v3286 = vpop.permute.xlu0 %3285
    %3287 = vrot.lane.b32.xlu0 %v1766, 96
    %v3288 = vpop.permute.xlu0 %3287
    %3289 = vrot.lane.b32.xlu0 %v1767, 96
    %v3290 = vpop.permute.xlu0 %3289
    %3291 = vrot.lane.b32.xlu0 %v1768, 96
    %v3292 = vpop.permute.xlu0 %3291
    %3293 = vrot.lane.b32.xlu0 %v1769, 96
    %v3294 = vpop.permute.xlu0 %3293
    %3295 = vrot.lane.b32.xlu0 %v1770, 96
    %v3296 = vpop.permute.xlu0 %3295
    %3297 = vrot.lane.b32.xlu0 %v1771, 96
    %v3298 = vpop.permute.xlu0 %3297
    %3299 = vrot.lane.b32.xlu0 %v1772, 96
    %v3300 = vpop.permute.xlu0 %3299
    %3301 = vrot.lane.b32.xlu0 %v1773, 96
    %v3302 = vpop.permute.xlu0 %3301
    %3303 = vrot.lane.b32.xlu0 %v1774, 96
    %v3304 = vpop.permute.xlu0 %3303
    %3305 = vrot.lane.b32.xlu0 %v1775, 96
    %v3306 = vpop.permute.xlu0 %3305
    %3307 = vrot.lane.b32.xlu0 %v1776, 96
    %v3308 = vpop.permute.xlu0 %3307
    %3309 = vrot.lane.b32.xlu0 %v1777, 96
    %v3310 = vpop.permute.xlu0 %3309
    %3311 = vrot.lane.b32.xlu0 %v1778, 96
    %v3312 = vpop.permute.xlu0 %3311
    %3313 = vrot.lane.b32.xlu0 %v1779, 96
    %v3314 = vpop.permute.xlu0 %3313
    %3315 = vrot.lane.b32.xlu0 %v1780, 96
    %v3316 = vpop.permute.xlu0 %3315
    %v3381 = vsel %vm163, %v1268, %v1910
    %v3382 = vsel %vm163, %v1269, %v1912
    %v3383 = vsel %vm163, %v1270, %v1914
    %v3384 = vsel %vm163, %v1271, %v1916
    %v3385 = vsel %vm163, %v1272, %v1918
    %v3386 = vsel %vm163, %v1273, %v1920
    %v3387 = vsel %vm163, %v1274, %v1922
    %v3388 = vsel %vm163, %v1275, %v1924
    %v3389 = vsel %vm163, %v1276, %v1926
    %v3390 = vsel %vm163, %v1277, %v1928
    %v3391 = vsel %vm163, %v1278, %v1930
    %v3392 = vsel %vm163, %v1279, %v1932
    %v3393 = vsel %vm163, %v1280, %v1934
    %v3394 = vsel %vm163, %v1281, %v1936
    %v3395 = vsel %vm163, %v1282, %v1938
    %v3396 = vsel %vm163, %v1283, %v1940
    %v3397 = vsel %vm163, %v1284, %v1942
    %v3398 = vsel %vm163, %v1285, %v1944
    %v3399 = vsel %vm163, %v1286, %v1946
    %v3400 = vsel %vm163, %v1287, %v1948
    %v3401 = vsel %vm163, %v1288, %v1950
    %v3402 = vsel %vm163, %v1289, %v1952
    %v3403 = vsel %vm163, %v1290, %v1954
    %v3404 = vsel %vm163, %v1291, %v1956
    %v3405 = vsel %vm163, %v1292, %v1958
    %v3406 = vsel %vm163, %v1293, %v1960
    %v3407 = vsel %vm163, %v1294, %v1962
    %v3408 = vsel %vm163, %v1295, %v1964
    %v3409 = vsel %vm163, %v1296, %v1966
    %v3410 = vsel %vm163, %v1297, %v1968
    %v3411 = vsel %vm163, %v1298, %v1970
    %v3412 = vsel %vm163, %v1299, %v1972
    %v3413 = vsel %vm163, %v1300, %v1974
    %v3414 = vsel %vm163, %v1301, %v1976
    %v3415 = vsel %vm163, %v1302, %v1978
    %v3416 = vsel %vm163, %v1303, %v1980
    %v3417 = vsel %vm163, %v1304, %v1982
    %v3418 = vsel %vm163, %v1305, %v1984
    %v3419 = vsel %vm163, %v1306, %v1986
    %v3420 = vsel %vm163, %v1307, %v1988
    %v3421 = vsel %vm163, %v1308, %v1990
    %v3422 = vsel %vm163, %v1309, %v1992
    %v3423 = vsel %vm163, %v1310, %v1994
    %v3424 = vsel %vm163, %v1311, %v1996
    %v3425 = vsel %vm163, %v1312, %v1998
    %v3426 = vsel %vm163, %v1313, %v2000
    %v3427 = vsel %vm163, %v1314, %v2002
    %v3428 = vsel %vm163, %v1315, %v2004
    %v3429 = vsel %vm163, %v1316, %v2006
    %v3430 = vsel %vm163, %v1317, %v2008
    %v3431 = vsel %vm163, %v1318, %v2010
    %v3432 = vsel %vm163, %v1319, %v2012
    %v3433 = vsel %vm163, %v1320, %v2014
    %v3434 = vsel %vm163, %v1321, %v2016
    %v3435 = vsel %vm163, %v1322, %v2018
    %v3436 = vsel %vm163, %v1323, %v2020
    %v3437 = vsel %vm163, %v1324, %v2022
    %v3438 = vsel %vm163, %v1325, %v2024
    %v3439 = vsel %vm163, %v1326, %v2026
    %v3440 = vsel %vm163, %v1327, %v2028
    %v3441 = vsel %vm163, %v1328, %v2030
    %v3442 = vsel %vm163, %v1329, %v2032
    %v3443 = vsel %vm163, %v1330, %v2034
    %v3444 = vsel %vm163, %v1331, %v2036
    %vm3445 = vcmask 523264
    %v3446 = vsel %vm3445, %v3381, %v2166
    %v3447 = vsel %vm3445, %v3382, %v2168
    %v3448 = vsel %vm3445, %v3383, %v2170
    %v3449 = vsel %vm3445, %v3384, %v2172
    %v3450 = vsel %vm3445, %v3385, %v2174
    %v3451 = vsel %vm3445, %v3386, %v2176
    %v3452 = vsel %vm3445, %v3387, %v2178
    %v3453 = vsel %vm3445, %v3388, %v2180
    %v3454 = vsel %vm3445, %v3389, %v2182
    %v3455 = vsel %vm3445, %v3390, %v2184
    %v3456 = vsel %vm3445, %v3391, %v2186
    %v3457 = vsel %vm3445, %v3392, %v2188
    %v3458 = vsel %vm3445, %v3393, %v2190
    %v3459 = vsel %vm3445, %v3394, %v2192
    %v3460 = vsel %vm3445, %v3395, %v2194
    %v3461 = vsel %vm3445, %v3396, %v2196
    %v3462 = vsel %vm3445, %v3397, %v2198
    %v3463 = vsel %vm3445, %v3398, %v2200
    %v3464 = vsel %vm3445, %v3399, %v2202
    %v3465 = vsel %vm3445, %v3400, %v2204
    %v3466 = vsel %vm3445, %v3401, %v2206
    %v3467 = vsel %vm3445, %v3402, %v2208
    %v3468 = vsel %vm3445, %v3403, %v2210
    %v3469 = vsel %vm3445, %v3404, %v2212
    %v3470 = vsel %vm3445, %v3405, %v2214
    %v3471 = vsel %vm3445, %v3406, %v2216
    %v3472 = vsel %vm3445, %v3407, %v2218
    %v3473 = vsel %vm3445, %v3408, %v2220
    %v3474 = vsel %vm3445, %v3409, %v2222
    %v3475 = vsel %vm3445, %v3410, %v2224
    %v3476 = vsel %vm3445, %v3411, %v2226
    %v3477 = vsel %vm3445, %v3412, %v2228
    %v3478 = vsel %vm3445, %v3413, %v2230
    %v3479 = vsel %vm3445, %v3414, %v2232
    %v3480 = vsel %vm3445, %v3415, %v2234
    %v3481 = vsel %vm3445, %v3416, %v2236
    %v3482 = vsel %vm3445, %v3417, %v2238
    %v3483 = vsel %vm3445, %v3418, %v2240
    %v3484 = vsel %vm3445, %v3419, %v2242
    %v3485 = vsel %vm3445, %v3420, %v2244
    %v3486 = vsel %vm3445, %v3421, %v2246
    %v3487 = vsel %vm3445, %v3422, %v2248
    %v3488 = vsel %vm3445, %v3423, %v2250
    %v3489 = vsel %vm3445, %v3424, %v2252
    %v3490 = vsel %vm3445, %v3425, %v2254
    %v3491 = vsel %vm3445, %v3426, %v2256
    %v3492 = vsel %vm3445, %v3427, %v2258
    %v3493 = vsel %vm3445, %v3428, %v2260
    %v3494 = vsel %vm3445, %v3429, %v2262
    %v3495 = vsel %vm3445, %v3430, %v2264
    %v3496 = vsel %vm3445, %v3431, %v2266
    %v3497 = vsel %vm3445, %v3432, %v2268
    %v3498 = vsel %vm3445, %v3433, %v2270
    %v3499 = vsel %vm3445, %v3434, %v2272
    %v3500 = vsel %vm3445, %v3435, %v2274
    %v3501 = vsel %vm3445, %v3436, %v2276
    %v3502 = vsel %vm3445, %v3437, %v2278
    %v3503 = vsel %vm3445, %v3438, %v2280
    %v3504 = vsel %vm3445, %v3439, %v2282
    %v3505 = vsel %vm3445, %v3440, %v2284
    %v3506 = vsel %vm3445, %v3441, %v2286
    %v3507 = vsel %vm3445, %v3442, %v2288
    %v3508 = vsel %vm3445, %v3443, %v2290
    %v3509 = vsel %vm3445, %v3444, %v2292
    %vm3510 = vcmask 785408
    %v3511 = vsel %vm3510, %v3446, %v2422
    %v3512 = vsel %vm3510, %v3447, %v2424
    %v3513 = vsel %vm3510, %v3448, %v2426
    %v3514 = vsel %vm3510, %v3449, %v2428
    %v3515 = vsel %vm3510, %v3450, %v2430
    %v3516 = vsel %vm3510, %v3451, %v2432
    %v3517 = vsel %vm3510, %v3452, %v2434
    %v3518 = vsel %vm3510, %v3453, %v2436
    %v3519 = vsel %vm3510, %v3454, %v2438
    %v3520 = vsel %vm3510, %v3455, %v2440
    %v3521 = vsel %vm3510, %v3456, %v2442
    %v3522 = vsel %vm3510, %v3457, %v2444
    %v3523 = vsel %vm3510, %v3458, %v2446
    %v3524 = vsel %vm3510, %v3459, %v2448
    %v3525 = vsel %vm3510, %v3460, %v2450
    %v3526 = vsel %vm3510, %v3461, %v2452
    %v3527 = vsel %vm3510, %v3462, %v2454
    %v3528 = vsel %vm3510, %v3463, %v2456
    %v3529 = vsel %vm3510, %v3464, %v2458
    %v3530 = vsel %vm3510, %v3465, %v2460
    %v3531 = vsel %vm3510, %v3466, %v2462
    %v3532 = vsel %vm3510, %v3467, %v2464
    %v3533 = vsel %vm3510, %v3468, %v2466
    %v3534 = vsel %vm3510, %v3469, %v2468
    %v3535 = vsel %vm3510, %v3470, %v2470
    %v3536 = vsel %vm3510, %v3471, %v2472
    %v3537 = vsel %vm3510, %v3472, %v2474
    %v3538 = vsel %vm3510, %v3473, %v2476
    %v3539 = vsel %vm3510, %v3474, %v2478
    %v3540 = vsel %vm3510, %v3475, %v2480
    %v3541 = vsel %vm3510, %v3476, %v2482
    %v3542 = vsel %vm3510, %v3477, %v2484
    %v3543 = vsel %vm3510, %v3478, %v2486
    %v3544 = vsel %vm3510, %v3479, %v2488
    %v3545 = vsel %vm3510, %v3480, %v2490
    %v3546 = vsel %vm3510, %v3481, %v2492
    %v3547 = vsel %vm3510, %v3482, %v2494
    %v3548 = vsel %vm3510, %v3483, %v2496
    %v3549 = vsel %vm3510, %v3484, %v2498
    %v3550 = vsel %vm3510, %v3485, %v2500
    %v3551 = vsel %vm3510, %v3486, %v2502
    %v3552 = vsel %vm3510, %v3487, %v2504
    %v3553 = vsel %vm3510, %v3488, %v2506
    %v3554 = vsel %vm3510, %v3489, %v2508
    %v3555 = vsel %vm3510, %v3490, %v2510
    %v3556 = vsel %vm3510, %v3491, %v2512
    %v3557 = vsel %vm3510, %v3492, %v2514
    %v3558 = vsel %vm3510, %v3493, %v2516
    %v3559 = vsel %vm3510, %v3494, %v2518
    %v3560 = vsel %vm3510, %v3495, %v2520
    %v3561 = vsel %vm3510, %v3496, %v2522
    %v3562 = vsel %vm3510, %v3497, %v2524
    %v3563 = vsel %vm3510, %v3498, %v2526
    %v3564 = vsel %vm3510, %v3499, %v2528
    %v3565 = vsel %vm3510, %v3500, %v2530
    %v3566 = vsel %vm3510, %v3501, %v2532
    %v3567 = vsel %vm3510, %v3502, %v2534
    %v3568 = vsel %vm3510, %v3503, %v2536
    %v3569 = vsel %vm3510, %v3504, %v2538
    %v3570 = vsel %vm3510, %v3505, %v2540
    %v3571 = vsel %vm3510, %v3506, %v2542
    %v3572 = vsel %vm3510, %v3507, %v2544
    %v3573 = vsel %vm3510, %v3508, %v2546
    %v3574 = vsel %vm3510, %v3509, %v2548
    %v3575 = vsel %vm163, %v1524, %v2678
    %v3576 = vsel %vm163, %v1525, %v2680
    %v3577 = vsel %vm163, %v1526, %v2682
    %v3578 = vsel %vm163, %v1527, %v2684
    %v3579 = vsel %vm163, %v1528, %v2686
    %v3580 = vsel %vm163, %v1529, %v2688
    %v3581 = vsel %vm163, %v1530, %v2690
    %v3582 = vsel %vm163, %v1531, %v2692
    %v3583 = vsel %vm163, %v1532, %v2694
    %v3584 = vsel %vm163, %v1533, %v2696
    %v3585 = vsel %vm163, %v1534, %v2698
    %v3586 = vsel %vm163, %v1535, %v2700
    %v3587 = vsel %vm163, %v1536, %v2702
    %v3588 = vsel %vm163, %v1537, %v2704
    %v3589 = vsel %vm163, %v1538, %v2706
    %v3590 = vsel %vm163, %v1539, %v2708
    %v3591 = vsel %vm163, %v1540, %v2710
    %v3592 = vsel %vm163, %v1541, %v2712
    %v3593 = vsel %vm163, %v1542, %v2714
    %v3594 = vsel %vm163, %v1543, %v2716
    %v3595 = vsel %vm163, %v1544, %v2718
    %v3596 = vsel %vm163, %v1545, %v2720
    %v3597 = vsel %vm163, %v1546, %v2722
    %v3598 = vsel %vm163, %v1547, %v2724
    %v3599 = vsel %vm163, %v1548, %v2726
    %v3600 = vsel %vm163, %v1549, %v2728
    %v3601 = vsel %vm163, %v1550, %v2730
    %v3602 = vsel %vm163, %v1551, %v2732
    %v3603 = vsel %vm163, %v1552, %v2734
    %v3604 = vsel %vm163, %v1553, %v2736
    %v3605 = vsel %vm163, %v1554, %v2738
    %v3606 = vsel %vm163, %v1555, %v2740
    %v3607 = vsel %vm163, %v1556, %v2742
    %v3608 = vsel %vm163, %v1557, %v2744
    %v3609 = vsel %vm163, %v1558, %v2746
    %v3610 = vsel %vm163, %v1559, %v2748
    %v3611 = vsel %vm163, %v1560, %v2750
    %v3612 = vsel %vm163, %v1561, %v2752
    %v3613 = vsel %vm163, %v1562, %v2754
    %v3614 = vsel %vm163, %v1563, %v2756
    %v3615 = vsel %vm163, %v1564, %v2758
    %v3616 = vsel %vm163, %v1565, %v2760
    %v3617 = vsel %vm163, %v1566, %v2762
    %v3618 = vsel %vm163, %v1567, %v2764
    %v3619 = vsel %vm163, %v1568, %v2766
    %v3620 = vsel %vm163, %v1569, %v2768
    %v3621 = vsel %vm163, %v1570, %v2770
    %v3622 = vsel %vm163, %v1571, %v2772
    %v3623 = vsel %vm163, %v1572, %v2774
    %v3624 = vsel %vm163, %v1573, %v2776
    %v3625 = vsel %vm163, %v1574, %v2778
    %v3626 = vsel %vm163, %v1575, %v2780
    %v3627 = vsel %vm163, %v1576, %v2782
    %v3628 = vsel %vm163, %v1577, %v2784
    %v3629 = vsel %vm163, %v1578, %v2786
    %v3630 = vsel %vm163, %v1579, %v2788
    %v3631 = vsel %vm163, %v1580, %v2790
    %v3632 = vsel %vm163, %v1581, %v2792
    %v3633 = vsel %vm163, %v1582, %v2794
    %v3634 = vsel %vm163, %v1583, %v2796
    %v3635 = vsel %vm163, %v1584, %v2798
    %v3636 = vsel %vm163, %v1585, %v2800
    %v3637 = vsel %vm163, %v1586, %v2802
    %v3638 = vsel %vm163, %v1587, %v2804
    %v3639 = vsel %vm3445, %v3575, %v2934
    %v3640 = vsel %vm3445, %v3576, %v2936
    %v3641 = vsel %vm3445, %v3577, %v2938
    %v3642 = vsel %vm3445, %v3578, %v2940
    %v3643 = vsel %vm3445, %v3579, %v2942
    %v3644 = vsel %vm3445, %v3580, %v2944
    %v3645 = vsel %vm3445, %v3581, %v2946
    %v3646 = vsel %vm3445, %v3582, %v2948
    %v3647 = vsel %vm3445, %v3583, %v2950
    %v3648 = vsel %vm3445, %v3584, %v2952
    %v3649 = vsel %vm3445, %v3585, %v2954
    %v3650 = vsel %vm3445, %v3586, %v2956
    %v3651 = vsel %vm3445, %v3587, %v2958
    %v3652 = vsel %vm3445, %v3588, %v2960
    %v3653 = vsel %vm3445, %v3589, %v2962
    %v3654 = vsel %vm3445, %v3590, %v2964
    %v3655 = vsel %vm3445, %v3591, %v2966
    %v3656 = vsel %vm3445, %v3592, %v2968
    %v3657 = vsel %vm3445, %v3593, %v2970
    %v3658 = vsel %vm3445, %v3594, %v2972
    %v3659 = vsel %vm3445, %v3595, %v2974
    %v3660 = vsel %vm3445, %v3596, %v2976
    %v3661 = vsel %vm3445, %v3597, %v2978
    %v3662 = vsel %vm3445, %v3598, %v2980
    %v3663 = vsel %vm3445, %v3599, %v2982
    %v3664 = vsel %vm3445, %v3600, %v2984
    %v3665 = vsel %vm3445, %v3601, %v2986
    %v3666 = vsel %vm3445, %v3602, %v2988
    %v3667 = vsel %vm3445, %v3603, %v2990
    %v3668 = vsel %vm3445, %v3604, %v2992
    %v3669 = vsel %vm3445, %v3605, %v2994
    %v3670 = vsel %vm3445, %v3606, %v2996
    %v3671 = vsel %vm3445, %v3607, %v2998
    %v3672 = vsel %vm3445, %v3608, %v3000
    %v3673 = vsel %vm3445, %v3609, %v3002
    %v3674 = vsel %vm3445, %v3610, %v3004
    %v3675 = vsel %vm3445, %v3611, %v3006
    %v3676 = vsel %vm3445, %v3612, %v3008
    %v3677 = vsel %vm3445, %v3613, %v3010
    %v3678 = vsel %vm3445, %v3614, %v3012
    %v3679 = vsel %vm3445, %v3615, %v3014
    %v3680 = vsel %vm3445, %v3616, %v3016
    %v3681 = vsel %vm3445, %v3617, %v3018
    %v3682 = vsel %vm3445, %v3618, %v3020
    %v3683 = vsel %vm3445, %v3619, %v3022
    %v3684 = vsel %vm3445, %v3620, %v3024
    %v3685 = vsel %vm3445, %v3621, %v3026
    %v3686 = vsel %vm3445, %v3622, %v3028
    %v3687 = vsel %vm3445, %v3623, %v3030
    %v3688 = vsel %vm3445, %v3624, %v3032
    %v3689 = vsel %vm3445, %v3625, %v3034
    %v3690 = vsel %vm3445, %v3626, %v3036
    %v3691 = vsel %vm3445, %v3627, %v3038
    %v3692 = vsel %vm3445, %v3628, %v3040
    %v3693 = vsel %vm3445, %v3629, %v3042
    %v3694 = vsel %vm3445, %v3630, %v3044
    %v3695 = vsel %vm3445, %v3631, %v3046
    %v3696 = vsel %vm3445, %v3632, %v3048
    %v3697 = vsel %vm3445, %v3633, %v3050
    %v3698 = vsel %vm3445, %v3634, %v3052
    %v3699 = vsel %vm3445, %v3635, %v3054
    %v3700 = vsel %vm3445, %v3636, %v3056
    %v3701 = vsel %vm3445, %v3637, %v3058
    %v3702 = vsel %vm3445, %v3638, %v3060
    %v3703 = vsel %vm3510, %v3639, %v3190
    %v3704 = vsel %vm3510, %v3640, %v3192
    %v3705 = vsel %vm3510, %v3641, %v3194
    %v3706 = vsel %vm3510, %v3642, %v3196
    %v3707 = vsel %vm3510, %v3643, %v3198
    %v3708 = vsel %vm3510, %v3644, %v3200
    %v3709 = vsel %vm3510, %v3645, %v3202
    %v3710 = vsel %vm3510, %v3646, %v3204
    %v3711 = vsel %vm3510, %v3647, %v3206
    %v3712 = vsel %vm3510, %v3648, %v3208
    %v3713 = vsel %vm3510, %v3649, %v3210
    %v3714 = vsel %vm3510, %v3650, %v3212
    %v3715 = vsel %vm3510, %v3651, %v3214
    %v3716 = vsel %vm3510, %v3652, %v3216
    %v3717 = vsel %vm3510, %v3653, %v3218
    %v3718 = vsel %vm3510, %v3654, %v3220
    %v3719 = vsel %vm3510, %v3655, %v3222
    %v3720 = vsel %vm3510, %v3656, %v3224
    %v3721 = vsel %vm3510, %v3657, %v3226
    %v3722 = vsel %vm3510, %v3658, %v3228
    %v3723 = vsel %vm3510, %v3659, %v3230
    %v3724 = vsel %vm3510, %v3660, %v3232
    %v3725 = vsel %vm3510, %v3661, %v3234
    %v3726 = vsel %vm3510, %v3662, %v3236
    %v3727 = vsel %vm3510, %v3663, %v3238
    %v3728 = vsel %vm3510, %v3664, %v3240
    %v3729 = vsel %vm3510, %v3665, %v3242
    %v3730 = vsel %vm3510, %v3666, %v3244
    %v3731 = vsel %vm3510, %v3667, %v3246
    %v3732 = vsel %vm3510, %v3668, %v3248
    %v3733 = vsel %vm3510, %v3669, %v3250
    %v3734 = vsel %vm3510, %v3670, %v3252
    %v3735 = vsel %vm3510, %v3671, %v3254
    %v3736 = vsel %vm3510, %v3672, %v3256
    %v3737 = vsel %vm3510, %v3673, %v3258
    %v3738 = vsel %vm3510, %v3674, %v3260
    %v3739 = vsel %vm3510, %v3675, %v3262
    %v3740 = vsel %vm3510, %v3676, %v3264
    %v3741 = vsel %vm3510, %v3677, %v3266
    %v3742 = vsel %vm3510, %v3678, %v3268
    %v3743 = vsel %vm3510, %v3679, %v3270
    %v3744 = vsel %vm3510, %v3680, %v3272
    %v3745 = vsel %vm3510, %v3681, %v3274
    %v3746 = vsel %vm3510, %v3682, %v3276
    %v3747 = vsel %vm3510, %v3683, %v3278
    %v3748 = vsel %vm3510, %v3684, %v3280
    %v3749 = vsel %vm3510, %v3685, %v3282
    %v3750 = vsel %vm3510, %v3686, %v3284
    %v3751 = vsel %vm3510, %v3687, %v3286
    %v3752 = vsel %vm3510, %v3688, %v3288
    %v3753 = vsel %vm3510, %v3689, %v3290
    %v3754 = vsel %vm3510, %v3690, %v3292
    %v3755 = vsel %vm3510, %v3691, %v3294
    %v3756 = vsel %vm3510, %v3692, %v3296
    %v3757 = vsel %vm3510, %v3693, %v3298
    %v3758 = vsel %vm3510, %v3694, %v3300
    %v3759 = vsel %vm3510, %v3695, %v3302
    %v3760 = vsel %vm3510, %v3696, %v3304
    %v3761 = vsel %vm3510, %v3697, %v3306
    %v3762 = vsel %vm3510, %v3698, %v3308
    %v3763 = vsel %vm3510, %v3699, %v3310
    %v3764 = vsel %vm3510, %v3700, %v3312
    %v3765 = vsel %vm3510, %v3701, %v3314
    %v3766 = vsel %vm3510, %v3702, %v3316
    %v3767 = vpack.c.bf16 %v3512, %v3511
    %v3768 = vpack.c.bf16 %v3704, %v3703
    %v3769 = vpack.c.bf16 %v1782, %v1781
    %v3770 = vpack.c.bf16 %v3514, %v3513
    %v3771 = vpack.c.bf16 %v3706, %v3705
    %v3772 = vpack.c.bf16 %v1784, %v1783
    %v3773 = vpack.c.bf16 %v3516, %v3515
    %v3774 = vpack.c.bf16 %v3708, %v3707
    %v3775 = vpack.c.bf16 %v1786, %v1785
    %v3776 = vpack.c.bf16 %v3518, %v3517
    %v3777 = vpack.c.bf16 %v3710, %v3709
    %v3778 = vpack.c.bf16 %v1788, %v1787
    %v3779 = vpack.c.bf16 %v3520, %v3519
    %v3780 = vpack.c.bf16 %v3712, %v3711
    %v3781 = vpack.c.bf16 %v1790, %v1789
    %v3782 = vpack.c.bf16 %v3522, %v3521
    %v3783 = vpack.c.bf16 %v3714, %v3713
    %v3784 = vpack.c.bf16 %v1792, %v1791
    %v3785 = vpack.c.bf16 %v3524, %v3523
    %v3786 = vpack.c.bf16 %v3716, %v3715
    %v3787 = vpack.c.bf16 %v1794, %v1793
    %v3788 = vpack.c.bf16 %v3526, %v3525
    %v3789 = vpack.c.bf16 %v3718, %v3717
    %v3790 = vpack.c.bf16 %v1796, %v1795
    %v3791 = vpack.c.bf16 %v3528, %v3527
    %v3792 = vpack.c.bf16 %v3720, %v3719
    %v3793 = vpack.c.bf16 %v1798, %v1797
    %v3794 = vpack.c.bf16 %v3530, %v3529
    %v3795 = vpack.c.bf16 %v3722, %v3721
    %v3796 = vpack.c.bf16 %v1800, %v1799
    %v3797 = vpack.c.bf16 %v3532, %v3531
    %v3798 = vpack.c.bf16 %v3724, %v3723
    %v3799 = vpack.c.bf16 %v1802, %v1801
    %v3800 = vpack.c.bf16 %v3534, %v3533
    %v3801 = vpack.c.bf16 %v3726, %v3725
    %v3802 = vpack.c.bf16 %v1804, %v1803
    %v3803 = vpack.c.bf16 %v3536, %v3535
    %v3804 = vpack.c.bf16 %v3728, %v3727
    %v3805 = vpack.c.bf16 %v1806, %v1805
    %v3806 = vpack.c.bf16 %v3538, %v3537
    %v3807 = vpack.c.bf16 %v3730, %v3729
    %v3808 = vpack.c.bf16 %v1808, %v1807
    %v3809 = vpack.c.bf16 %v3540, %v3539
    %v3810 = vpack.c.bf16 %v3732, %v3731
    %v3811 = vpack.c.bf16 %v1810, %v1809
    %v3812 = vpack.c.bf16 %v3542, %v3541
    %v3813 = vpack.c.bf16 %v3734, %v3733
    %v3814 = vpack.c.bf16 %v1812, %v1811
    %v3815 = vpack.c.bf16 %v3544, %v3543
    %v3816 = vpack.c.bf16 %v3736, %v3735
    %v3817 = vpack.c.bf16 %v1814, %v1813
    %v3818 = vpack.c.bf16 %v3546, %v3545
    %v3819 = vpack.c.bf16 %v3738, %v3737
    %v3820 = vpack.c.bf16 %v1816, %v1815
    %v3821 = vpack.c.bf16 %v3548, %v3547
    %v3822 = vpack.c.bf16 %v3740, %v3739
    %v3823 = vpack.c.bf16 %v1818, %v1817
    %v3824 = vpack.c.bf16 %v3550, %v3549
    %v3825 = vpack.c.bf16 %v3742, %v3741
    %v3826 = vpack.c.bf16 %v1820, %v1819
    %v3827 = vpack.c.bf16 %v3552, %v3551
    %v3828 = vpack.c.bf16 %v3744, %v3743
    %v3829 = vpack.c.bf16 %v1822, %v1821
    %v3830 = vpack.c.bf16 %v3554, %v3553
    %v3831 = vpack.c.bf16 %v3746, %v3745
    %v3832 = vpack.c.bf16 %v1824, %v1823
    %v3833 = vpack.c.bf16 %v3556, %v3555
    %v3834 = vpack.c.bf16 %v3748, %v3747
    %v3835 = vpack.c.bf16 %v1826, %v1825
    %v3836 = vpack.c.bf16 %v3558, %v3557
    %v3837 = vpack.c.bf16 %v3750, %v3749
    %v3838 = vpack.c.bf16 %v1828, %v1827
    %v3839 = vpack.c.bf16 %v3560, %v3559
    %v3840 = vpack.c.bf16 %v3752, %v3751
    %v3841 = vpack.c.bf16 %v1830, %v1829
    %v3842 = vpack.c.bf16 %v3562, %v3561
    %v3843 = vpack.c.bf16 %v3754, %v3753
    %v3844 = vpack.c.bf16 %v1832, %v1831
    %v3845 = vpack.c.bf16 %v3564, %v3563
    %v3846 = vpack.c.bf16 %v3756, %v3755
    %v3847 = vpack.c.bf16 %v1834, %v1833
    %v3848 = vpack.c.bf16 %v3566, %v3565
    %v3849 = vpack.c.bf16 %v3758, %v3757
    %v3850 = vpack.c.bf16 %v1836, %v1835
    %v3851 = vpack.c.bf16 %v3568, %v3567
    %v3852 = vpack.c.bf16 %v3760, %v3759
    %v3853 = vpack.c.bf16 %v1838, %v1837
    %v3854 = vpack.c.bf16 %v3570, %v3569
    %v3855 = vpack.c.bf16 %v3762, %v3761
    %v3856 = vpack.c.bf16 %v1840, %v1839
    %v3857 = vpack.c.bf16 %v3572, %v3571
    %v3858 = vpack.c.bf16 %v3764, %v3763
    %v3859 = vpack.c.bf16 %v1842, %v1841
    %v3860 = vpack.c.bf16 %v3574, %v3573
    %v3861 = vpack.c.bf16 %v3766, %v3765
    %v3862 = vpack.c.bf16 %v1844, %v1843
    %v3863 = vld [vmem:[%s5] sm:$0xff]
    %v3864 = vld [vmem:[%s5 + $0x8] sm:$0xff]
    %v3865 = vld [vmem:[%s5 + $0x10] sm:$0xff]
    %v3866 = vld [vmem:[%s5 + $0x18] sm:$0xff]
    %v3867 = vld [vmem:[%s5 + $0x20] sm:$0xff]
    %v3868 = vld [vmem:[%s5 + $0x28] sm:$0xff]
    %v3869 = vld [vmem:[%s5 + $0x30] sm:$0xff]
    %v3870 = vld [vmem:[%s5 + $0x38] sm:$0xff]
    %v3871 = vld [vmem:[%s5 + $0x40] sm:$0xff]
    %v3872 = vld [vmem:[%s5 + $0x48] sm:$0xff]
    %v3873 = vld [vmem:[%s5 + $0x50] sm:$0xff]
    %v3874 = vld [vmem:[%s5 + $0x58] sm:$0xff]
    %v3875 = vld [vmem:[%s5 + $0x60] sm:$0xff]
    %v3876 = vld [vmem:[%s5 + $0x68] sm:$0xff]
    %v3877 = vld [vmem:[%s5 + $0x70] sm:$0xff]
    %v3878 = vld [vmem:[%s5 + $0x78] sm:$0xff]
    %v3879 = vld [vmem:[%s5 + $0x80] sm:$0xff]
    %v3880 = vld [vmem:[%s5 + $0x88] sm:$0xff]
    %v3881 = vld [vmem:[%s5 + $0x90] sm:$0xff]
    %v3882 = vld [vmem:[%s5 + $0x98] sm:$0xff]
    %v3883 = vld [vmem:[%s5 + $0xa0] sm:$0xff]
    %v3884 = vld [vmem:[%s5 + $0xa8] sm:$0xff]
    %v3885 = vld [vmem:[%s5 + $0xb0] sm:$0xff]
    %v3886 = vld [vmem:[%s5 + $0xb8] sm:$0xff]
    %v3887 = vld [vmem:[%s5 + $0xc0] sm:$0xff]
    %v3888 = vld [vmem:[%s5 + $0xc8] sm:$0xff]
    %v3889 = vld [vmem:[%s5 + $0xd0] sm:$0xff]
    %v3890 = vld [vmem:[%s5 + $0xd8] sm:$0xff]
    %v3891 = vld [vmem:[%s5 + $0xe0] sm:$0xff]
    %v3892 = vld [vmem:[%s5 + $0xe8] sm:$0xff]
    %v3893 = vld [vmem:[%s5 + $0xf0] sm:$0xff]
    %v3894 = vld [vmem:[%s5 + $0xf8] sm:$0xff]
    %v3895 = vld [vmem:[%s5 + $0x100] sm:$0xff]
    %v3896 = vld [vmem:[%s5 + $0x108] sm:$0xff]
    %v3897 = vld [vmem:[%s5 + $0x110] sm:$0xff]
    %v3898 = vld [vmem:[%s5 + $0x118] sm:$0xff]
    %v3899 = vpack.c.bf16 %v3864, %v3863
    %v3900 = vpack.c.bf16 %v3866, %v3865
    %v3901 = vpack.c.bf16 %v3868, %v3867
    %v3902 = vpack.c.bf16 %v3870, %v3869
    %v3903 = vpack.c.bf16 %v3872, %v3871
    %v3904 = vpack.c.bf16 %v3874, %v3873
    %v3905 = vpack.c.bf16 %v3876, %v3875
    %v3906 = vpack.c.bf16 %v3878, %v3877
    %v3907 = vpack.c.bf16 %v3880, %v3879
    %v3908 = vpack.c.bf16 %v3882, %v3881
    %v3909 = vpack.c.bf16 %v3884, %v3883
    %v3910 = vpack.c.bf16 %v3886, %v3885
    %v3911 = vpack.c.bf16 %v3888, %v3887
    %v3912 = vpack.c.bf16 %v3890, %v3889
    %v3913 = vpack.c.bf16 %v3892, %v3891
    %v3914 = vpack.c.bf16 %v3894, %v3893
    %v3915 = vpack.c.bf16 %v3896, %v3895
    %v3916 = vpack.c.bf16 %v3898, %v3897
    %v3917 = vld [vmem:[%s6] sm:$0x1]
    %v3919 = vlaneseq
    %v3920 = vshrl.u32 %v3919, 7
    %v3921 = vsub.s32 0, %v3920
    %v3922 = vrot.slane %v3917, %v3921
    %v3925 = vsel %vm163, %v3769, 0
    %v3928 = vsel %vm163, %v3772, 0
    %v3931 = vsel %vm163, %v3775, 0
    %v3934 = vsel %vm163, %v3778, 0
    %v3937 = vsel %vm163, %v3781, 0
    %v3940 = vsel %vm163, %v3784, 0
    %v3943 = vsel %vm163, %v3787, 0
    %v3946 = vsel %vm163, %v3790, 0
    %v3949 = vsel %vm163, %v3793, 0
    %v3952 = vsel %vm163, %v3796, 0
    %v3955 = vsel %vm163, %v3799, 0
    %v3958 = vsel %vm163, %v3802, 0
    %v3961 = vsel %vm163, %v3805, 0
    %v3964 = vsel %vm163, %v3808, 0
    %v3967 = vsel %vm163, %v3811, 0
    %v3970 = vsel %vm163, %v3814, 0
    %v3973 = vsel %vm163, %v3817, 0
    %v3976 = vsel %vm163, %v3820, 0
    %v3979 = vsel %vm163, %v3823, 0
    %v3982 = vsel %vm163, %v3826, 0
    %v3985 = vsel %vm163, %v3829, 0
    %v3988 = vsel %vm163, %v3832, 0
    %v3991 = vsel %vm163, %v3835, 0
    %v3994 = vsel %vm163, %v3838, 0
    %v3997 = vsel %vm163, %v3841, 0
    %v4000 = vsel %vm163, %v3844, 0
    %v4003 = vsel %vm163, %v3847, 0
    %v4006 = vsel %vm163, %v3850, 0
    %v4009 = vsel %vm163, %v3853, 0
    %v4012 = vsel %vm163, %v3856, 0
    %v4015 = vsel %vm163, %v3859, 0
    %v4018 = vsel %vm163, %v3862, 0
    %4020 = vmatprep.subr.bf16.mxu0 0
    %4021 = vmatpush1.bf16.msra.mxu0 %v3899
    %4022 = vmatprep.subr.bf16.mxu0 0
    %4023 = vmatpush1.bf16.msra.mxu0 %v3900
    %4024 = vmatprep.subr.bf16.mxu0 0
    %4025 = vmatpush1.bf16.msra.mxu0 %v3901
    %4026 = vmatprep.subr.bf16.mxu0 0
    %4027 = vmatpush1.bf16.msra.mxu0 %v3902
    %4028 = vmatprep.subr.bf16.mxu0 0
    %4029 = vmatpush1.bf16.msra.mxu0 %v3903
    %4030 = vmatprep.subr.bf16.mxu0 0
    %4031 = vmatpush1.bf16.msra.mxu0 %v3904
    %4032 = vmatprep.subr.bf16.mxu0 0
    %4033 = vmatpush1.bf16.msra.mxu0 %v3905
    %4034 = vmatprep.subr.bf16.mxu0 0
    %4035 = vmatpush1.bf16.msra.mxu0 %v3906
    %4036 = vmatprep.subr.bf16.mxu0 0
    %4037 = vmatpush1.bf16.msra.mxu0 %v3907
    %4038 = vmatprep.subr.bf16.mxu0 0
    %4039 = vmatpush1.bf16.msra.mxu0 %v3908
    %4040 = vmatprep.subr.bf16.mxu0 0
    %4041 = vmatpush1.bf16.msra.mxu0 %v3909
    %4042 = vmatprep.subr.bf16.mxu0 0
    %4043 = vmatpush1.bf16.msra.mxu0 %v3910
    %4044 = vmatprep.subr.bf16.mxu0 0
    %4045 = vmatpush1.bf16.msra.mxu0 %v3911
    %4046 = vmatprep.subr.bf16.mxu0 0
    %4047 = vmatpush1.bf16.msra.mxu0 %v3912
    %4048 = vmatprep.subr.bf16.mxu0 0
    %4049 = vmatpush1.bf16.msra.mxu0 %v3913
    %4050 = vmatprep.subr.bf16.mxu0 0
    %4051 = vmatpush1.bf16.msra.mxu0 %v3914
    %4052 = vmatprep.mubr.bf16.mxu0 %v3768
    %4053 = vmatmul.mubr.bf16.gmra.mrb[0].mxu0 %v3767
    %v4054 = vpop.f32.mrb[0].mxu0
    %v4055 = vadd.f32 %v3922, %v4054
    %v4056 = vpop.f32.mrb[0].mxu0
    %v4057 = vpop.f32.mrb[0].mxu0
    %v4058 = vadd.f32 %v3922, %v4057
    %v4059 = vpop.f32.mrb[0].mxu0
    %4060 = vmatprep.mubr.bf16.mxu0 %v3771
    %4061 = vmatmul.mubr.bf16.gmra.mrb[0].mxu0 %v3770
    %v4062 = vpop.f32.mrb[0].mxu0
    %v4063 = vadd.f32 %v3922, %v4062
    %v4064 = vpop.f32.mrb[0].mxu0
    %v4065 = vpop.f32.mrb[0].mxu0
    %v4066 = vadd.f32 %v3922, %v4065
    %v4067 = vpop.f32.mrb[0].mxu0
    %4068 = vmatprep.mubr.bf16.mxu0 %v3774
    %4069 = vmatmul.mubr.bf16.gmra.mrb[0].mxu0 %v3773
    %v4070 = vpop.f32.mrb[0].mxu0
    %v4071 = vadd.f32 %v3922, %v4070
    %v4072 = vpop.f32.mrb[0].mxu0
    %v4073 = vpop.f32.mrb[0].mxu0
    %v4074 = vadd.f32 %v3922, %v4073
    %v4075 = vpop.f32.mrb[0].mxu0
    %4076 = vmatprep.mubr.bf16.mxu0 %v3777
    %4077 = vmatmul.mubr.bf16.gmra.mrb[0].mxu0 %v3776
    %v4078 = vpop.f32.mrb[0].mxu0
    %v4079 = vadd.f32 %v3922, %v4078
    %v4080 = vpop.f32.mrb[0].mxu0
    %v4081 = vpop.f32.mrb[0].mxu0
    %v4082 = vadd.f32 %v3922, %v4081
    %v4083 = vpop.f32.mrb[0].mxu0
    %4084 = vmatprep.mubr.bf16.mxu0 %v3780
    %4085 = vmatmul.mubr.bf16.gmra.mrb[0].mxu0 %v3779
    %v4086 = vpop.f32.mrb[0].mxu0
    %v4087 = vadd.f32 %v3922, %v4086
    %v4088 = vpop.f32.mrb[0].mxu0
    %v4089 = vpop.f32.mrb[0].mxu0
    %v4090 = vadd.f32 %v3922, %v4089
    %v4091 = vpop.f32.mrb[0].mxu0
    %4092 = vmatprep.mubr.bf16.mxu0 %v3783
    %4093 = vmatmul.mubr.bf16.gmra.mrb[0].mxu0 %v3782
    %v4094 = vpop.f32.mrb[0].mxu0
    %v4095 = vadd.f32 %v3922, %v4094
    %v4096 = vpop.f32.mrb[0].mxu0
    %v4097 = vpop.f32.mrb[0].mxu0
    %v4098 = vadd.f32 %v3922, %v4097
    %v4099 = vpop.f32.mrb[0].mxu0
    %4100 = vmatprep.mubr.bf16.mxu0 %v3786
    %4101 = vmatmul.mubr.bf16.gmra.mrb[0].mxu0 %v3785
    %v4102 = vpop.f32.mrb[0].mxu0
    %v4103 = vadd.f32 %v3922, %v4102
    %v4104 = vpop.f32.mrb[0].mxu0
    %v4105 = vpop.f32.mrb[0].mxu0
    %v4106 = vadd.f32 %v3922, %v4105
    %v4107 = vpop.f32.mrb[0].mxu0
    %4108 = vmatprep.mubr.bf16.mxu0 %v3789
    %4109 = vmatmul.mubr.bf16.gmra.mrb[0].mxu0 %v3788
    %v4110 = vpop.f32.mrb[0].mxu0
    %v4111 = vadd.f32 %v3922, %v4110
    %v4112 = vpop.f32.mrb[0].mxu0
    %v4113 = vpop.f32.mrb[0].mxu0
    %v4114 = vadd.f32 %v3922, %v4113
    %v4115 = vpop.f32.mrb[0].mxu0
    %4116 = vmatprep.mubr.bf16.mxu0 %v3792
    %4117 = vmatmul.mubr.bf16.gmra.mrb[0].mxu0 %v3791
    %v4118 = vpop.f32.mrb[0].mxu0
    %v4119 = vadd.f32 %v3922, %v4118
    %v4120 = vpop.f32.mrb[0].mxu0
    %v4121 = vpop.f32.mrb[0].mxu0
    %v4122 = vadd.f32 %v3922, %v4121
    %v4123 = vpop.f32.mrb[0].mxu0
    %4124 = vmatprep.mubr.bf16.mxu0 %v3795
    %4125 = vmatmul.mubr.bf16.gmra.mrb[0].mxu0 %v3794
    %v4126 = vpop.f32.mrb[0].mxu0
    %v4127 = vadd.f32 %v3922, %v4126
    %v4128 = vpop.f32.mrb[0].mxu0
    %v4129 = vpop.f32.mrb[0].mxu0
    %v4130 = vadd.f32 %v3922, %v4129
    %v4131 = vpop.f32.mrb[0].mxu0
    %4132 = vmatprep.mubr.bf16.mxu0 %v3798
    %4133 = vmatmul.mubr.bf16.gmra.mrb[0].mxu0 %v3797
    %v4134 = vpop.f32.mrb[0].mxu0
    %v4135 = vadd.f32 %v3922, %v4134
    %v4136 = vpop.f32.mrb[0].mxu0
    %v4137 = vpop.f32.mrb[0].mxu0
    %v4138 = vadd.f32 %v3922, %v4137
    %v4139 = vpop.f32.mrb[0].mxu0
    %4140 = vmatprep.mubr.bf16.mxu0 %v3801
    %4141 = vmatmul.mubr.bf16.gmra.mrb[0].mxu0 %v3800
    %v4142 = vpop.f32.mrb[0].mxu0
    %v4143 = vadd.f32 %v3922, %v4142
    %v4144 = vpop.f32.mrb[0].mxu0
    %v4145 = vpop.f32.mrb[0].mxu0
    %v4146 = vadd.f32 %v3922, %v4145
    %v4147 = vpop.f32.mrb[0].mxu0
    %4148 = vmatprep.mubr.bf16.mxu0 %v3804
    %4149 = vmatmul.mubr.bf16.gmra.mrb[0].mxu0 %v3803
    %v4150 = vpop.f32.mrb[0].mxu0
    %v4151 = vadd.f32 %v3922, %v4150
    %v4152 = vpop.f32.mrb[0].mxu0
    %v4153 = vpop.f32.mrb[0].mxu0
    %v4154 = vadd.f32 %v3922, %v4153
    %v4155 = vpop.f32.mrb[0].mxu0
    %4156 = vmatprep.mubr.bf16.mxu0 %v3807
    %4157 = vmatmul.mubr.bf16.gmra.mrb[0].mxu0 %v3806
    %v4158 = vpop.f32.mrb[0].mxu0
    %v4159 = vadd.f32 %v3922, %v4158
    %v4160 = vpop.f32.mrb[0].mxu0
    %v4161 = vpop.f32.mrb[0].mxu0
    %v4162 = vadd.f32 %v3922, %v4161
    %v4163 = vpop.f32.mrb[0].mxu0
    %4164 = vmatprep.mubr.bf16.mxu0 %v3810
    %4165 = vmatmul.mubr.bf16.gmra.mrb[0].mxu0 %v3809
    %v4166 = vpop.f32.mrb[0].mxu0
    %v4167 = vadd.f32 %v3922, %v4166
    %v4168 = vpop.f32.mrb[0].mxu0
    %v4169 = vpop.f32.mrb[0].mxu0
    %v4170 = vadd.f32 %v3922, %v4169
    %v4171 = vpop.f32.mrb[0].mxu0
    %4172 = vmatprep.mubr.bf16.mxu0 %v3813
    %4173 = vmatmul.mubr.bf16.gmra.mrb[0].mxu0 %v3812
    %v4174 = vpop.f32.mrb[0].mxu0
    %v4175 = vadd.f32 %v3922, %v4174
    %v4176 = vpop.f32.mrb[0].mxu0
    %v4177 = vpop.f32.mrb[0].mxu0
    %v4178 = vadd.f32 %v3922, %v4177
    %v4179 = vpop.f32.mrb[0].mxu0
    %4180 = vmatprep.mubr.bf16.mxu0 %v3816
    %4181 = vmatmul.mubr.bf16.gmra.mrb[0].mxu0 %v3815
    %v4182 = vpop.f32.mrb[0].mxu0
    %v4183 = vadd.f32 %v3922, %v4182
    %v4184 = vpop.f32.mrb[0].mxu0
    %v4185 = vpop.f32.mrb[0].mxu0
    %v4186 = vadd.f32 %v3922, %v4185
    %v4187 = vpop.f32.mrb[0].mxu0
    %4188 = vmatprep.mubr.bf16.mxu0 %v3819
    %4189 = vmatmul.mubr.bf16.gmra.mrb[0].mxu0 %v3818
    %v4190 = vpop.f32.mrb[0].mxu0
    %v4191 = vadd.f32 %v3922, %v4190
    %v4192 = vpop.f32.mrb[0].mxu0
    %v4193 = vpop.f32.mrb[0].mxu0
    %v4194 = vadd.f32 %v3922, %v4193
    %v4195 = vpop.f32.mrb[0].mxu0
    %4196 = vmatprep.mubr.bf16.mxu0 %v3822
    %4197 = vmatmul.mubr.bf16.gmra.mrb[0].mxu0 %v3821
    %v4198 = vpop.f32.mrb[0].mxu0
    %v4199 = vadd.f32 %v3922, %v4198
    %v4200 = vpop.f32.mrb[0].mxu0
    %v4201 = vpop.f32.mrb[0].mxu0
    %v4202 = vadd.f32 %v3922, %v4201
    %v4203 = vpop.f32.mrb[0].mxu0
    %4204 = vmatprep.mubr.bf16.mxu0 %v3825
    %4205 = vmatmul.mubr.bf16.gmra.mrb[0].mxu0 %v3824
    %v4206 = vpop.f32.mrb[0].mxu0
    %v4207 = vadd.f32 %v3922, %v4206
    %v4208 = vpop.f32.mrb[0].mxu0
    %v4209 = vpop.f32.mrb[0].mxu0
    %v4210 = vadd.f32 %v3922, %v4209
    %v4211 = vpop.f32.mrb[0].mxu0
    %4212 = vmatprep.mubr.bf16.mxu0 %v3828
    %4213 = vmatmul.mubr.bf16.gmra.mrb[0].mxu0 %v3827
    %v4214 = vpop.f32.mrb[0].mxu0
    %v4215 = vadd.f32 %v3922, %v4214
    %v4216 = vpop.f32.mrb[0].mxu0
    %v4217 = vpop.f32.mrb[0].mxu0
    %v4218 = vadd.f32 %v3922, %v4217
    %v4219 = vpop.f32.mrb[0].mxu0
    %4220 = vmatprep.mubr.bf16.mxu0 %v3831
    %4221 = vmatmul.mubr.bf16.gmra.mrb[0].mxu0 %v3830
    %v4222 = vpop.f32.mrb[0].mxu0
    %v4223 = vadd.f32 %v3922, %v4222
    %v4224 = vpop.f32.mrb[0].mxu0
    %v4225 = vpop.f32.mrb[0].mxu0
    %v4226 = vadd.f32 %v3922, %v4225
    %v4227 = vpop.f32.mrb[0].mxu0
    %4228 = vmatprep.mubr.bf16.mxu0 %v3834
    %4229 = vmatmul.mubr.bf16.gmra.mrb[0].mxu0 %v3833
    %v4230 = vpop.f32.mrb[0].mxu0
    %v4231 = vadd.f32 %v3922, %v4230
    %v4232 = vpop.f32.mrb[0].mxu0
    %v4233 = vpop.f32.mrb[0].mxu0
    %v4234 = vadd.f32 %v3922, %v4233
    %v4235 = vpop.f32.mrb[0].mxu0
    %4236 = vmatprep.mubr.bf16.mxu0 %v3837
    %4237 = vmatmul.mubr.bf16.gmra.mrb[0].mxu0 %v3836
    %v4238 = vpop.f32.mrb[0].mxu0
    %v4239 = vadd.f32 %v3922, %v4238
    %v4240 = vpop.f32.mrb[0].mxu0
    %v4241 = vpop.f32.mrb[0].mxu0
    %v4242 = vadd.f32 %v3922, %v4241
    %v4243 = vpop.f32.mrb[0].mxu0
    %4244 = vmatprep.mubr.bf16.mxu0 %v3840
    %4245 = vmatmul.mubr.bf16.gmra.mrb[0].mxu0 %v3839
    %v4246 = vpop.f32.mrb[0].mxu0
    %v4247 = vadd.f32 %v3922, %v4246
    %v4248 = vpop.f32.mrb[0].mxu0
    %v4249 = vpop.f32.mrb[0].mxu0
    %v4250 = vadd.f32 %v3922, %v4249
    %v4251 = vpop.f32.mrb[0].mxu0
    %4252 = vmatprep.mubr.bf16.mxu0 %v3843
    %4253 = vmatmul.mubr.bf16.gmra.mrb[0].mxu0 %v3842
    %v4254 = vpop.f32.mrb[0].mxu0
    %v4255 = vadd.f32 %v3922, %v4254
    %v4256 = vpop.f32.mrb[0].mxu0
    %v4257 = vpop.f32.mrb[0].mxu0
    %v4258 = vadd.f32 %v3922, %v4257
    %v4259 = vpop.f32.mrb[0].mxu0
    %4260 = vmatprep.mubr.bf16.mxu0 %v3846
    %4261 = vmatmul.mubr.bf16.gmra.mrb[0].mxu0 %v3845
    %v4262 = vpop.f32.mrb[0].mxu0
    %v4263 = vadd.f32 %v3922, %v4262
    %v4264 = vpop.f32.mrb[0].mxu0
    %v4265 = vpop.f32.mrb[0].mxu0
    %v4266 = vadd.f32 %v3922, %v4265
    %v4267 = vpop.f32.mrb[0].mxu0
    %4268 = vmatprep.mubr.bf16.mxu0 %v3849
    %4269 = vmatmul.mubr.bf16.gmra.mrb[0].mxu0 %v3848
    %v4270 = vpop.f32.mrb[0].mxu0
    %v4271 = vadd.f32 %v3922, %v4270
    %v4272 = vpop.f32.mrb[0].mxu0
    %v4273 = vpop.f32.mrb[0].mxu0
    %v4274 = vadd.f32 %v3922, %v4273
    %v4275 = vpop.f32.mrb[0].mxu0
    %4276 = vmatprep.mubr.bf16.mxu0 %v3852
    %4277 = vmatmul.mubr.bf16.gmra.mrb[0].mxu0 %v3851
    %v4278 = vpop.f32.mrb[0].mxu0
    %v4279 = vadd.f32 %v3922, %v4278
    %v4280 = vpop.f32.mrb[0].mxu0
    %v4281 = vpop.f32.mrb[0].mxu0
    %v4282 = vadd.f32 %v3922, %v4281
    %v4283 = vpop.f32.mrb[0].mxu0
    %4284 = vmatprep.mubr.bf16.mxu0 %v3855
    %4285 = vmatmul.mubr.bf16.gmra.mrb[0].mxu0 %v3854
    %v4286 = vpop.f32.mrb[0].mxu0
    %v4287 = vadd.f32 %v3922, %v4286
    %v4288 = vpop.f32.mrb[0].mxu0
    %v4289 = vpop.f32.mrb[0].mxu0
    %v4290 = vadd.f32 %v3922, %v4289
    %v4291 = vpop.f32.mrb[0].mxu0
    %4292 = vmatprep.mubr.bf16.mxu0 %v3858
    %4293 = vmatmul.mubr.bf16.gmra.mrb[0].mxu0 %v3857
    %v4294 = vpop.f32.mrb[0].mxu0
    %v4295 = vadd.f32 %v3922, %v4294
    %v4296 = vpop.f32.mrb[0].mxu0
    %v4297 = vpop.f32.mrb[0].mxu0
    %v4298 = vadd.f32 %v3922, %v4297
    %v4299 = vpop.f32.mrb[0].mxu0
    %4300 = vmatprep.mubr.bf16.mxu0 %v3861
    %4301 = vmatmul.mubr.bf16.gmra.mrb[0].mxu0 %v3860
    %v4302 = vpop.f32.mrb[0].mxu0
    %v4303 = vadd.f32 %v3922, %v4302
    %v4304 = vpop.f32.mrb[0].mxu0
    %v4305 = vpop.f32.mrb[0].mxu0
    %v4306 = vadd.f32 %v3922, %v4305
    %v4307 = vpop.f32.mrb[0].mxu0
    %4308 = vdwg.mxu0
    %4309 = vmatprep.subr.bf16.mxu0 0
    %4310 = vmatpush1.bf16.msra.mxu0 %v3915
    %4311 = vmatprep.subr.bf16.mxu0 0
    %4312 = vmatpush1.bf16.msra.mxu0 %v3916
    %4313 = vmatprep.subr.bf16.mxu0 0
    %4314 = vmatpush1.bf16.msra.mxu0 0
    %4315 = vmatprep.subr.bf16.mxu0 0
    %4316 = vmatpush1.bf16.msra.mxu0 0
    %4317 = vmatprep.subr.bf16.mxu0 0
    %4318 = vmatpush1.bf16.msra.mxu0 0
    %4319 = vmatprep.subr.bf16.mxu0 0
    %4320 = vmatpush1.bf16.msra.mxu0 0
    %4321 = vmatprep.subr.bf16.mxu0 0
    %4322 = vmatpush1.bf16.msra.mxu0 0
    %4323 = vmatprep.subr.bf16.mxu0 0
    %4324 = vmatpush1.bf16.msra.mxu0 0
    %4325 = vmatprep.subr.bf16.mxu0 0
    %4326 = vmatpush1.bf16.msra.mxu0 0
    %4327 = vmatprep.subr.bf16.mxu0 0
    %4328 = vmatpush1.bf16.msra.mxu0 0
    %4329 = vmatprep.subr.bf16.mxu0 0
    %4330 = vmatpush1.bf16.msra.mxu0 0
    %4331 = vmatprep.subr.bf16.mxu0 0
    %4332 = vmatpush1.bf16.msra.mxu0 0
    %4333 = vmatprep.subr.bf16.mxu0 0
    %4334 = vmatpush1.bf16.msra.mxu0 0
    %4335 = vmatprep.subr.bf16.mxu0 0
    %4336 = vmatpush1.bf16.msra.mxu0 0
    %4337 = vmatprep.subr.bf16.mxu0 0
    %4338 = vmatpush1.bf16.msra.mxu0 0
    %4339 = vmatprep.subr.bf16.mxu0 0
    %4340 = vmatpush1.bf16.msra.mxu0 0
    %4341 = vmatprep.mubr.bf16.mxu0 0
    %4342 = vmatmul.mubr.bf16.gmra.mrb[0].mxu0 %v3925
    %v4343 = vpop.f32.mrb[0].mxu0
    %v4344 = vadd.f32 %v4055, %v4343
    %v4345 = vpop.f32.mrb[0].mxu0
    %v4346 = vpop.f32.mrb[0].mxu0
    %v4347 = vadd.f32 %v4058, %v4346
    %v4348 = vpop.f32.mrb[0].mxu0
    %4349 = vmatprep.mubr.bf16.mxu0 0
    %4350 = vmatmul.mubr.bf16.gmra.mrb[0].mxu0 %v3928
    %v4351 = vpop.f32.mrb[0].mxu0
    %v4352 = vadd.f32 %v4063, %v4351
    %v4353 = vpop.f32.mrb[0].mxu0
    %v4354 = vpop.f32.mrb[0].mxu0
    %v4355 = vadd.f32 %v4066, %v4354
    %v4356 = vpop.f32.mrb[0].mxu0
    %4357 = vmatprep.mubr.bf16.mxu0 0
    %4358 = vmatmul.mubr.bf16.gmra.mrb[0].mxu0 %v3931
    %v4359 = vpop.f32.mrb[0].mxu0
    %v4360 = vadd.f32 %v4071, %v4359
    %v4361 = vpop.f32.mrb[0].mxu0
    %v4362 = vpop.f32.mrb[0].mxu0
    %v4363 = vadd.f32 %v4074, %v4362
    %v4364 = vpop.f32.mrb[0].mxu0
    %4365 = vmatprep.mubr.bf16.mxu0 0
    %4366 = vmatmul.mubr.bf16.gmra.mrb[0].mxu0 %v3934
    %v4367 = vpop.f32.mrb[0].mxu0
    %v4368 = vadd.f32 %v4079, %v4367
    %v4369 = vpop.f32.mrb[0].mxu0
    %v4370 = vpop.f32.mrb[0].mxu0
    %v4371 = vadd.f32 %v4082, %v4370
    %v4372 = vpop.f32.mrb[0].mxu0
    %4373 = vmatprep.mubr.bf16.mxu0 0
    %4374 = vmatmul.mubr.bf16.gmra.mrb[0].mxu0 %v3937
    %v4375 = vpop.f32.mrb[0].mxu0
    %v4376 = vadd.f32 %v4087, %v4375
    %v4377 = vpop.f32.mrb[0].mxu0
    %v4378 = vpop.f32.mrb[0].mxu0
    %v4379 = vadd.f32 %v4090, %v4378
    %v4380 = vpop.f32.mrb[0].mxu0
    %4381 = vmatprep.mubr.bf16.mxu0 0
    %4382 = vmatmul.mubr.bf16.gmra.mrb[0].mxu0 %v3940
    %v4383 = vpop.f32.mrb[0].mxu0
    %v4384 = vadd.f32 %v4095, %v4383
    %v4385 = vpop.f32.mrb[0].mxu0
    %v4386 = vpop.f32.mrb[0].mxu0
    %v4387 = vadd.f32 %v4098, %v4386
    %v4388 = vpop.f32.mrb[0].mxu0
    %4389 = vmatprep.mubr.bf16.mxu0 0
    %4390 = vmatmul.mubr.bf16.gmra.mrb[0].mxu0 %v3943
    %v4391 = vpop.f32.mrb[0].mxu0
    %v4392 = vadd.f32 %v4103, %v4391
    %v4393 = vpop.f32.mrb[0].mxu0
    %v4394 = vpop.f32.mrb[0].mxu0
    %v4395 = vadd.f32 %v4106, %v4394
    %v4396 = vpop.f32.mrb[0].mxu0
    %4397 = vmatprep.mubr.bf16.mxu0 0
    %4398 = vmatmul.mubr.bf16.gmra.mrb[0].mxu0 %v3946
    %v4399 = vpop.f32.mrb[0].mxu0
    %v4400 = vadd.f32 %v4111, %v4399
    %v4401 = vpop.f32.mrb[0].mxu0
    %v4402 = vpop.f32.mrb[0].mxu0
    %v4403 = vadd.f32 %v4114, %v4402
    %v4404 = vpop.f32.mrb[0].mxu0
    %4405 = vmatprep.mubr.bf16.mxu0 0
    %4406 = vmatmul.mubr.bf16.gmra.mrb[0].mxu0 %v3949
    %v4407 = vpop.f32.mrb[0].mxu0
    %v4408 = vadd.f32 %v4119, %v4407
    %v4409 = vpop.f32.mrb[0].mxu0
    %v4410 = vpop.f32.mrb[0].mxu0
    %v4411 = vadd.f32 %v4122, %v4410
    %v4412 = vpop.f32.mrb[0].mxu0
    %4413 = vmatprep.mubr.bf16.mxu0 0
    %4414 = vmatmul.mubr.bf16.gmra.mrb[0].mxu0 %v3952
    %v4415 = vpop.f32.mrb[0].mxu0
    %v4416 = vadd.f32 %v4127, %v4415
    %v4417 = vpop.f32.mrb[0].mxu0
    %v4418 = vpop.f32.mrb[0].mxu0
    %v4419 = vadd.f32 %v4130, %v4418
    %v4420 = vpop.f32.mrb[0].mxu0
    %4421 = vmatprep.mubr.bf16.mxu0 0
    %4422 = vmatmul.mubr.bf16.gmra.mrb[0].mxu0 %v3955
    %v4423 = vpop.f32.mrb[0].mxu0
    %v4424 = vadd.f32 %v4135, %v4423
    %v4425 = vpop.f32.mrb[0].mxu0
    %v4426 = vpop.f32.mrb[0].mxu0
    %v4427 = vadd.f32 %v4138, %v4426
    %v4428 = vpop.f32.mrb[0].mxu0
    %4429 = vmatprep.mubr.bf16.mxu0 0
    %4430 = vmatmul.mubr.bf16.gmra.mrb[0].mxu0 %v3958
    %v4431 = vpop.f32.mrb[0].mxu0
    %v4432 = vadd.f32 %v4143, %v4431
    %v4433 = vpop.f32.mrb[0].mxu0
    %v4434 = vpop.f32.mrb[0].mxu0
    %v4435 = vadd.f32 %v4146, %v4434
    %v4436 = vpop.f32.mrb[0].mxu0
    %4437 = vmatprep.mubr.bf16.mxu0 0
    %4438 = vmatmul.mubr.bf16.gmra.mrb[0].mxu0 %v3961
    %v4439 = vpop.f32.mrb[0].mxu0
    %v4440 = vadd.f32 %v4151, %v4439
    %v4441 = vpop.f32.mrb[0].mxu0
    %v4442 = vpop.f32.mrb[0].mxu0
    %v4443 = vadd.f32 %v4154, %v4442
    %v4444 = vpop.f32.mrb[0].mxu0
    %4445 = vmatprep.mubr.bf16.mxu0 0
    %4446 = vmatmul.mubr.bf16.gmra.mrb[0].mxu0 %v3964
    %v4447 = vpop.f32.mrb[0].mxu0
    %v4448 = vadd.f32 %v4159, %v4447
    %v4449 = vpop.f32.mrb[0].mxu0
    %v4450 = vpop.f32.mrb[0].mxu0
    %v4451 = vadd.f32 %v4162, %v4450
    %v4452 = vpop.f32.mrb[0].mxu0
    %4453 = vmatprep.mubr.bf16.mxu0 0
    %4454 = vmatmul.mubr.bf16.gmra.mrb[0].mxu0 %v3967
    %v4455 = vpop.f32.mrb[0].mxu0
    %v4456 = vadd.f32 %v4167, %v4455
    %v4457 = vpop.f32.mrb[0].mxu0
    %v4458 = vpop.f32.mrb[0].mxu0
    %v4459 = vadd.f32 %v4170, %v4458
    %v4460 = vpop.f32.mrb[0].mxu0
    %4461 = vmatprep.mubr.bf16.mxu0 0
    %4462 = vmatmul.mubr.bf16.gmra.mrb[0].mxu0 %v3970
    %v4463 = vpop.f32.mrb[0].mxu0
    %v4464 = vadd.f32 %v4175, %v4463
    %v4465 = vpop.f32.mrb[0].mxu0
    %v4466 = vpop.f32.mrb[0].mxu0
    %v4467 = vadd.f32 %v4178, %v4466
    %v4468 = vpop.f32.mrb[0].mxu0
    %4469 = vmatprep.mubr.bf16.mxu0 0
    %4470 = vmatmul.mubr.bf16.gmra.mrb[0].mxu0 %v3973
    %v4471 = vpop.f32.mrb[0].mxu0
    %v4472 = vadd.f32 %v4183, %v4471
    %v4473 = vpop.f32.mrb[0].mxu0
    %v4474 = vpop.f32.mrb[0].mxu0
    %v4475 = vadd.f32 %v4186, %v4474
    %v4476 = vpop.f32.mrb[0].mxu0
    %4477 = vmatprep.mubr.bf16.mxu0 0
    %4478 = vmatmul.mubr.bf16.gmra.mrb[0].mxu0 %v3976
    %v4479 = vpop.f32.mrb[0].mxu0
    %v4480 = vadd.f32 %v4191, %v4479
    %v4481 = vpop.f32.mrb[0].mxu0
    %v4482 = vpop.f32.mrb[0].mxu0
    %v4483 = vadd.f32 %v4194, %v4482
    %v4484 = vpop.f32.mrb[0].mxu0
    %4485 = vmatprep.mubr.bf16.mxu0 0
    %4486 = vmatmul.mubr.bf16.gmra.mrb[0].mxu0 %v3979
    %v4487 = vpop.f32.mrb[0].mxu0
    %v4488 = vadd.f32 %v4199, %v4487
    %v4489 = vpop.f32.mrb[0].mxu0
    %v4490 = vpop.f32.mrb[0].mxu0
    %v4491 = vadd.f32 %v4202, %v4490
    %v4492 = vpop.f32.mrb[0].mxu0
    %4493 = vmatprep.mubr.bf16.mxu0 0
    %4494 = vmatmul.mubr.bf16.gmra.mrb[0].mxu0 %v3982
    %v4495 = vpop.f32.mrb[0].mxu0
    %v4496 = vadd.f32 %v4207, %v4495
    %v4497 = vpop.f32.mrb[0].mxu0
    %v4498 = vpop.f32.mrb[0].mxu0
    %v4499 = vadd.f32 %v4210, %v4498
    %v4500 = vpop.f32.mrb[0].mxu0
    %4501 = vmatprep.mubr.bf16.mxu0 0
    %4502 = vmatmul.mubr.bf16.gmra.mrb[0].mxu0 %v3985
    %v4503 = vpop.f32.mrb[0].mxu0
    %v4504 = vadd.f32 %v4215, %v4503
    %v4505 = vpop.f32.mrb[0].mxu0
    %v4506 = vpop.f32.mrb[0].mxu0
    %v4507 = vadd.f32 %v4218, %v4506
    %v4508 = vpop.f32.mrb[0].mxu0
    %4509 = vmatprep.mubr.bf16.mxu0 0
    %4510 = vmatmul.mubr.bf16.gmra.mrb[0].mxu0 %v3988
    %v4511 = vpop.f32.mrb[0].mxu0
    %v4512 = vadd.f32 %v4223, %v4511
    %v4513 = vpop.f32.mrb[0].mxu0
    %v4514 = vpop.f32.mrb[0].mxu0
    %v4515 = vadd.f32 %v4226, %v4514
    %v4516 = vpop.f32.mrb[0].mxu0
    %4517 = vmatprep.mubr.bf16.mxu0 0
    %4518 = vmatmul.mubr.bf16.gmra.mrb[0].mxu0 %v3991
    %v4519 = vpop.f32.mrb[0].mxu0
    %v4520 = vadd.f32 %v4231, %v4519
    %v4521 = vpop.f32.mrb[0].mxu0
    %v4522 = vpop.f32.mrb[0].mxu0
    %v4523 = vadd.f32 %v4234, %v4522
    %v4524 = vpop.f32.mrb[0].mxu0
    %4525 = vmatprep.mubr.bf16.mxu0 0
    %4526 = vmatmul.mubr.bf16.gmra.mrb[0].mxu0 %v3994
    %v4527 = vpop.f32.mrb[0].mxu0
    %v4528 = vadd.f32 %v4239, %v4527
    %v4529 = vpop.f32.mrb[0].mxu0
    %v4530 = vpop.f32.mrb[0].mxu0
    %v4531 = vadd.f32 %v4242, %v4530
    %v4532 = vpop.f32.mrb[0].mxu0
    %4533 = vmatprep.mubr.bf16.mxu0 0
    %4534 = vmatmul.mubr.bf16.gmra.mrb[0].mxu0 %v3997
    %v4535 = vpop.f32.mrb[0].mxu0
    %v4536 = vadd.f32 %v4247, %v4535
    %v4537 = vpop.f32.mrb[0].mxu0
    %v4538 = vpop.f32.mrb[0].mxu0
    %v4539 = vadd.f32 %v4250, %v4538
    %v4540 = vpop.f32.mrb[0].mxu0
    %4541 = vmatprep.mubr.bf16.mxu0 0
    %4542 = vmatmul.mubr.bf16.gmra.mrb[0].mxu0 %v4000
    %v4543 = vpop.f32.mrb[0].mxu0
    %v4544 = vadd.f32 %v4255, %v4543
    %v4545 = vpop.f32.mrb[0].mxu0
    %v4546 = vpop.f32.mrb[0].mxu0
    %v4547 = vadd.f32 %v4258, %v4546
    %v4548 = vpop.f32.mrb[0].mxu0
    %4549 = vmatprep.mubr.bf16.mxu0 0
    %4550 = vmatmul.mubr.bf16.gmra.mrb[0].mxu0 %v4003
    %v4551 = vpop.f32.mrb[0].mxu0
    %v4552 = vadd.f32 %v4263, %v4551
    %v4553 = vpop.f32.mrb[0].mxu0
    %v4554 = vpop.f32.mrb[0].mxu0
    %v4555 = vadd.f32 %v4266, %v4554
    %v4556 = vpop.f32.mrb[0].mxu0
    %4557 = vmatprep.mubr.bf16.mxu0 0
    %4558 = vmatmul.mubr.bf16.gmra.mrb[0].mxu0 %v4006
    %v4559 = vpop.f32.mrb[0].mxu0
    %v4560 = vadd.f32 %v4271, %v4559
    %v4561 = vpop.f32.mrb[0].mxu0
    %v4562 = vpop.f32.mrb[0].mxu0
    %v4563 = vadd.f32 %v4274, %v4562
    %v4564 = vpop.f32.mrb[0].mxu0
    %4565 = vmatprep.mubr.bf16.mxu0 0
    %4566 = vmatmul.mubr.bf16.gmra.mrb[0].mxu0 %v4009
    %v4567 = vpop.f32.mrb[0].mxu0
    %v4568 = vadd.f32 %v4279, %v4567
    %v4569 = vpop.f32.mrb[0].mxu0
    %v4570 = vpop.f32.mrb[0].mxu0
    %v4571 = vadd.f32 %v4282, %v4570
    %v4572 = vpop.f32.mrb[0].mxu0
    %4573 = vmatprep.mubr.bf16.mxu0 0
    %4574 = vmatmul.mubr.bf16.gmra.mrb[0].mxu0 %v4012
    %v4575 = vpop.f32.mrb[0].mxu0
    %v4576 = vadd.f32 %v4287, %v4575
    %v4577 = vpop.f32.mrb[0].mxu0
    %v4578 = vpop.f32.mrb[0].mxu0
    %v4579 = vadd.f32 %v4290, %v4578
    %v4580 = vpop.f32.mrb[0].mxu0
    %4581 = vmatprep.mubr.bf16.mxu0 0
    %4582 = vmatmul.mubr.bf16.gmra.mrb[0].mxu0 %v4015
    %v4583 = vpop.f32.mrb[0].mxu0
    %v4584 = vadd.f32 %v4295, %v4583
    %v4585 = vpop.f32.mrb[0].mxu0
    %v4586 = vpop.f32.mrb[0].mxu0
    %v4587 = vadd.f32 %v4298, %v4586
    %v4588 = vpop.f32.mrb[0].mxu0
    %4589 = vmatprep.mubr.bf16.mxu0 0
    %4590 = vmatmul.mubr.bf16.gmra.mrb[0].mxu0 %v4018
    %v4591 = vpop.f32.mrb[0].mxu0
    %v4592 = vadd.f32 %v4303, %v4591
    %v4593 = vpop.f32.mrb[0].mxu0
    %v4594 = vpop.f32.mrb[0].mxu0
    %v4595 = vadd.f32 %v4306, %v4594
    %v4596 = vpop.f32.mrb[0].mxu0
    %4597 = vdwg.mxu0
    %v4598 = vld [vmem:[%s7] sm:$0x1]
    %v4599 = vld [vmem:[%s8] sm:$0x1]
    %v4600 = vsel %vm163, %v4344, 0.0
    %v4601 = vsel %vm163, %v4347, 0.0
    %v4602 = vadd.f32 %v4600, %v4601
    %v4603 = vsel %vm163, %v4352, 0.0
    %v4604 = vadd.f32 %v4602, %v4603
    %v4605 = vsel %vm163, %v4355, 0.0
    %v4606 = vadd.f32 %v4604, %v4605
    %v4607 = vsel %vm163, %v4360, 0.0
    %v4608 = vadd.f32 %v4606, %v4607
    %v4609 = vsel %vm163, %v4363, 0.0
    %v4610 = vadd.f32 %v4608, %v4609
    %v4611 = vsel %vm163, %v4368, 0.0
    %v4612 = vadd.f32 %v4610, %v4611
    %v4613 = vsel %vm163, %v4371, 0.0
    %v4614 = vadd.f32 %v4612, %v4613
    %v4615 = vsel %vm163, %v4376, 0.0
    %v4616 = vadd.f32 %v4614, %v4615
    %v4617 = vsel %vm163, %v4379, 0.0
    %v4618 = vadd.f32 %v4616, %v4617
    %v4619 = vsel %vm163, %v4384, 0.0
    %v4620 = vadd.f32 %v4618, %v4619
    %v4621 = vsel %vm163, %v4387, 0.0
    %v4622 = vadd.f32 %v4620, %v4621
    %v4623 = vsel %vm163, %v4392, 0.0
    %v4624 = vadd.f32 %v4622, %v4623
    %v4625 = vsel %vm163, %v4395, 0.0
    %v4626 = vadd.f32 %v4624, %v4625
    %v4627 = vsel %vm163, %v4400, 0.0
    %v4628 = vadd.f32 %v4626, %v4627
    %v4629 = vsel %vm163, %v4403, 0.0
    %v4630 = vadd.f32 %v4628, %v4629
    %v4631 = vsel %vm163, %v4408, 0.0
    %v4632 = vadd.f32 %v4630, %v4631
    %v4633 = vsel %vm163, %v4411, 0.0
    %v4634 = vadd.f32 %v4632, %v4633
    %v4635 = vsel %vm163, %v4416, 0.0
    %v4636 = vadd.f32 %v4634, %v4635
    %v4637 = vsel %vm163, %v4419, 0.0
    %v4638 = vadd.f32 %v4636, %v4637
    %v4639 = vsel %vm163, %v4424, 0.0
    %v4640 = vadd.f32 %v4638, %v4639
    %v4641 = vsel %vm163, %v4427, 0.0
    %v4642 = vadd.f32 %v4640, %v4641
    %v4643 = vsel %vm163, %v4432, 0.0
    %v4644 = vadd.f32 %v4642, %v4643
    %v4645 = vsel %vm163, %v4435, 0.0
    %v4646 = vadd.f32 %v4644, %v4645
    %v4647 = vsel %vm163, %v4440, 0.0
    %v4648 = vadd.f32 %v4646, %v4647
    %v4649 = vsel %vm163, %v4443, 0.0
    %v4650 = vadd.f32 %v4648, %v4649
    %v4651 = vsel %vm163, %v4448, 0.0
    %v4652 = vadd.f32 %v4650, %v4651
    %v4653 = vsel %vm163, %v4451, 0.0
    %v4654 = vadd.f32 %v4652, %v4653
    %v4655 = vsel %vm163, %v4456, 0.0
    %v4656 = vadd.f32 %v4654, %v4655
    %v4657 = vsel %vm163, %v4459, 0.0
    %v4658 = vadd.f32 %v4656, %v4657
    %v4659 = vsel %vm163, %v4464, 0.0
    %v4660 = vadd.f32 %v4658, %v4659
    %v4661 = vsel %vm163, %v4467, 0.0
    %v4662 = vadd.f32 %v4660, %v4661
    %v4663 = vsel %vm163, %v4472, 0.0
    %v4664 = vadd.f32 %v4662, %v4663
    %v4665 = vsel %vm163, %v4475, 0.0
    %v4666 = vadd.f32 %v4664, %v4665
    %v4667 = vsel %vm163, %v4480, 0.0
    %v4668 = vadd.f32 %v4666, %v4667
    %v4669 = vsel %vm163, %v4483, 0.0
    %v4670 = vadd.f32 %v4668, %v4669
    %v4671 = vsel %vm163, %v4488, 0.0
    %v4672 = vadd.f32 %v4670, %v4671
    %v4673 = vsel %vm163, %v4491, 0.0
    %v4674 = vadd.f32 %v4672, %v4673
    %v4675 = vsel %vm163, %v4496, 0.0
    %v4676 = vadd.f32 %v4674, %v4675
    %v4677 = vsel %vm163, %v4499, 0.0
    %v4678 = vadd.f32 %v4676, %v4677
    %v4679 = vsel %vm163, %v4504, 0.0
    %v4680 = vadd.f32 %v4678, %v4679
    %v4681 = vsel %vm163, %v4507, 0.0
    %v4682 = vadd.f32 %v4680, %v4681
    %v4683 = vsel %vm163, %v4512, 0.0
    %v4684 = vadd.f32 %v4682, %v4683
    %v4685 = vsel %vm163, %v4515, 0.0
    %v4686 = vadd.f32 %v4684, %v4685
    %v4687 = vsel %vm163, %v4520, 0.0
    %v4688 = vadd.f32 %v4686, %v4687
    %v4689 = vsel %vm163, %v4523, 0.0
    %v4690 = vadd.f32 %v4688, %v4689
    %v4691 = vsel %vm163, %v4528, 0.0
    %v4692 = vadd.f32 %v4690, %v4691
    %v4693 = vsel %vm163, %v4531, 0.0
    %v4694 = vadd.f32 %v4692, %v4693
    %v4695 = vsel %vm163, %v4536, 0.0
    %v4696 = vadd.f32 %v4694, %v4695
    %v4697 = vsel %vm163, %v4539, 0.0
    %v4698 = vadd.f32 %v4696, %v4697
    %v4699 = vsel %vm163, %v4544, 0.0
    %v4700 = vadd.f32 %v4698, %v4699
    %v4701 = vsel %vm163, %v4547, 0.0
    %v4702 = vadd.f32 %v4700, %v4701
    %v4703 = vsel %vm163, %v4552, 0.0
    %v4704 = vadd.f32 %v4702, %v4703
    %v4705 = vsel %vm163, %v4555, 0.0
    %v4706 = vadd.f32 %v4704, %v4705
    %v4707 = vsel %vm163, %v4560, 0.0
    %v4708 = vadd.f32 %v4706, %v4707
    %v4709 = vsel %vm163, %v4563, 0.0
    %v4710 = vadd.f32 %v4708, %v4709
    %v4711 = vsel %vm163, %v4568, 0.0
    %v4712 = vadd.f32 %v4710, %v4711
    %v4713 = vsel %vm163, %v4571, 0.0
    %v4714 = vadd.f32 %v4712, %v4713
    %v4715 = vsel %vm163, %v4576, 0.0
    %v4716 = vadd.f32 %v4714, %v4715
    %v4717 = vsel %vm163, %v4579, 0.0
    %v4718 = vadd.f32 %v4716, %v4717
    %v4719 = vsel %vm163, %v4584, 0.0
    %v4720 = vadd.f32 %v4718, %v4719
    %v4721 = vsel %vm163, %v4587, 0.0
    %v4722 = vadd.f32 %v4720, %v4721
    %v4723 = vsel %vm163, %v4592, 0.0
    %v4724 = vadd.f32 %v4722, %v4723
    %v4725 = vsel %vm163, %v4595, 0.0
    %v4726 = vadd.f32 %v4724, %v4725
    %v4727 = vrot.slane %v4726, 4
    %v4728 = vadd.f32 %v4726, %v4727
    %v4729 = vrot.slane %v4728, 2
    %v4730 = vadd.f32 %v4728, %v4729
    %v4731 = vrot.slane %v4730, 1
    %v4732 = vadd.f32 %v4730, %v4731
    %v4733 = vmul.f32 %v4732, 0.001953125
    %v4734 = vmul.f32 %v4344, %v4344
    %v4735 = vmul.f32 %v4347, %v4347
    %v4736 = vmul.f32 %v4352, %v4352
    %v4737 = vmul.f32 %v4355, %v4355
    %v4738 = vmul.f32 %v4360, %v4360
    %v4739 = vmul.f32 %v4363, %v4363
    %v4740 = vmul.f32 %v4368, %v4368
    %v4741 = vmul.f32 %v4371, %v4371
    %v4742 = vmul.f32 %v4376, %v4376
    %v4743 = vmul.f32 %v4379, %v4379
    %v4744 = vmul.f32 %v4384, %v4384
    %v4745 = vmul.f32 %v4387, %v4387
    %v4746 = vmul.f32 %v4392, %v4392
    %v4747 = vmul.f32 %v4395, %v4395
    %v4748 = vmul.f32 %v4400, %v4400
    %v4749 = vmul.f32 %v4403, %v4403
    %v4750 = vmul.f32 %v4408, %v4408
    %v4751 = vmul.f32 %v4411, %v4411
    %v4752 = vmul.f32 %v4416, %v4416
    %v4753 = vmul.f32 %v4419, %v4419
    %v4754 = vmul.f32 %v4424, %v4424
    %v4755 = vmul.f32 %v4427, %v4427
    %v4756 = vmul.f32 %v4432, %v4432
    %v4757 = vmul.f32 %v4435, %v4435
    %v4758 = vmul.f32 %v4440, %v4440
    %v4759 = vmul.f32 %v4443, %v4443
    %v4760 = vmul.f32 %v4448, %v4448
    %v4761 = vmul.f32 %v4451, %v4451
    %v4762 = vmul.f32 %v4456, %v4456
    %v4763 = vmul.f32 %v4459, %v4459
    %v4764 = vmul.f32 %v4464, %v4464
    %v4765 = vmul.f32 %v4467, %v4467
    %v4766 = vmul.f32 %v4472, %v4472
    %v4767 = vmul.f32 %v4475, %v4475
    %v4768 = vmul.f32 %v4480, %v4480
    %v4769 = vmul.f32 %v4483, %v4483
    %v4770 = vmul.f32 %v4488, %v4488
    %v4771 = vmul.f32 %v4491, %v4491
    %v4772 = vmul.f32 %v4496, %v4496
    %v4773 = vmul.f32 %v4499, %v4499
    %v4774 = vmul.f32 %v4504, %v4504
    %v4775 = vmul.f32 %v4507, %v4507
    %v4776 = vmul.f32 %v4512, %v4512
    %v4777 = vmul.f32 %v4515, %v4515
    %v4778 = vmul.f32 %v4520, %v4520
    %v4779 = vmul.f32 %v4523, %v4523
    %v4780 = vmul.f32 %v4528, %v4528
    %v4781 = vmul.f32 %v4531, %v4531
    %v4782 = vmul.f32 %v4536, %v4536
    %v4783 = vmul.f32 %v4539, %v4539
    %v4784 = vmul.f32 %v4544, %v4544
    %v4785 = vmul.f32 %v4547, %v4547
    %v4786 = vmul.f32 %v4552, %v4552
    %v4787 = vmul.f32 %v4555, %v4555
    %v4788 = vmul.f32 %v4560, %v4560
    %v4789 = vmul.f32 %v4563, %v4563
    %v4790 = vmul.f32 %v4568, %v4568
    %v4791 = vmul.f32 %v4571, %v4571
    %v4792 = vmul.f32 %v4576, %v4576
    %v4793 = vmul.f32 %v4579, %v4579
    %v4794 = vmul.f32 %v4584, %v4584
    %v4795 = vmul.f32 %v4587, %v4587
    %v4796 = vmul.f32 %v4592, %v4592
    %v4797 = vmul.f32 %v4595, %v4595
    %v4798 = vsel %vm163, %v4734, 0.0
    %v4799 = vsel %vm163, %v4735, 0.0
    %v4800 = vadd.f32 %v4798, %v4799
    %v4801 = vsel %vm163, %v4736, 0.0
    %v4802 = vadd.f32 %v4800, %v4801
    %v4803 = vsel %vm163, %v4737, 0.0
    %v4804 = vadd.f32 %v4802, %v4803
    %v4805 = vsel %vm163, %v4738, 0.0
    %v4806 = vadd.f32 %v4804, %v4805
    %v4807 = vsel %vm163, %v4739, 0.0
    %v4808 = vadd.f32 %v4806, %v4807
    %v4809 = vsel %vm163, %v4740, 0.0
    %v4810 = vadd.f32 %v4808, %v4809
    %v4811 = vsel %vm163, %v4741, 0.0
    %v4812 = vadd.f32 %v4810, %v4811
    %v4813 = vsel %vm163, %v4742, 0.0
    %v4814 = vadd.f32 %v4812, %v4813
    %v4815 = vsel %vm163, %v4743, 0.0
    %v4816 = vadd.f32 %v4814, %v4815
    %v4817 = vsel %vm163, %v4744, 0.0
    %v4818 = vadd.f32 %v4816, %v4817
    %v4819 = vsel %vm163, %v4745, 0.0
    %v4820 = vadd.f32 %v4818, %v4819
    %v4821 = vsel %vm163, %v4746, 0.0
    %v4822 = vadd.f32 %v4820, %v4821
    %v4823 = vsel %vm163, %v4747, 0.0
    %v4824 = vadd.f32 %v4822, %v4823
    %v4825 = vsel %vm163, %v4748, 0.0
    %v4826 = vadd.f32 %v4824, %v4825
    %v4827 = vsel %vm163, %v4749, 0.0
    %v4828 = vadd.f32 %v4826, %v4827
    %v4829 = vsel %vm163, %v4750, 0.0
    %v4830 = vadd.f32 %v4828, %v4829
    %v4831 = vsel %vm163, %v4751, 0.0
    %v4832 = vadd.f32 %v4830, %v4831
    %v4833 = vsel %vm163, %v4752, 0.0
    %v4834 = vadd.f32 %v4832, %v4833
    %v4835 = vsel %vm163, %v4753, 0.0
    %v4836 = vadd.f32 %v4834, %v4835
    %v4837 = vsel %vm163, %v4754, 0.0
    %v4838 = vadd.f32 %v4836, %v4837
    %v4839 = vsel %vm163, %v4755, 0.0
    %v4840 = vadd.f32 %v4838, %v4839
    %v4841 = vsel %vm163, %v4756, 0.0
    %v4842 = vadd.f32 %v4840, %v4841
    %v4843 = vsel %vm163, %v4757, 0.0
    %v4844 = vadd.f32 %v4842, %v4843
    %v4845 = vsel %vm163, %v4758, 0.0
    %v4846 = vadd.f32 %v4844, %v4845
    %v4847 = vsel %vm163, %v4759, 0.0
    %v4848 = vadd.f32 %v4846, %v4847
    %v4849 = vsel %vm163, %v4760, 0.0
    %v4850 = vadd.f32 %v4848, %v4849
    %v4851 = vsel %vm163, %v4761, 0.0
    %v4852 = vadd.f32 %v4850, %v4851
    %v4853 = vsel %vm163, %v4762, 0.0
    %v4854 = vadd.f32 %v4852, %v4853
    %v4855 = vsel %vm163, %v4763, 0.0
    %v4856 = vadd.f32 %v4854, %v4855
    %v4857 = vsel %vm163, %v4764, 0.0
    %v4858 = vadd.f32 %v4856, %v4857
    %v4859 = vsel %vm163, %v4765, 0.0
    %v4860 = vadd.f32 %v4858, %v4859
    %v4861 = vsel %vm163, %v4766, 0.0
    %v4862 = vadd.f32 %v4860, %v4861
    %v4863 = vsel %vm163, %v4767, 0.0
    %v4864 = vadd.f32 %v4862, %v4863
    %v4865 = vsel %vm163, %v4768, 0.0
    %v4866 = vadd.f32 %v4864, %v4865
    %v4867 = vsel %vm163, %v4769, 0.0
    %v4868 = vadd.f32 %v4866, %v4867
    %v4869 = vsel %vm163, %v4770, 0.0
    %v4870 = vadd.f32 %v4868, %v4869
    %v4871 = vsel %vm163, %v4771, 0.0
    %v4872 = vadd.f32 %v4870, %v4871
    %v4873 = vsel %vm163, %v4772, 0.0
    %v4874 = vadd.f32 %v4872, %v4873
    %v4875 = vsel %vm163, %v4773, 0.0
    %v4876 = vadd.f32 %v4874, %v4875
    %v4877 = vsel %vm163, %v4774, 0.0
    %v4878 = vadd.f32 %v4876, %v4877
    %v4879 = vsel %vm163, %v4775, 0.0
    %v4880 = vadd.f32 %v4878, %v4879
    %v4881 = vsel %vm163, %v4776, 0.0
    %v4882 = vadd.f32 %v4880, %v4881
    %v4883 = vsel %vm163, %v4777, 0.0
    %v4884 = vadd.f32 %v4882, %v4883
    %v4885 = vsel %vm163, %v4778, 0.0
    %v4886 = vadd.f32 %v4884, %v4885
    %v4887 = vsel %vm163, %v4779, 0.0
    %v4888 = vadd.f32 %v4886, %v4887
    %v4889 = vsel %vm163, %v4780, 0.0
    %v4890 = vadd.f32 %v4888, %v4889
    %v4891 = vsel %vm163, %v4781, 0.0
    %v4892 = vadd.f32 %v4890, %v4891
    %v4893 = vsel %vm163, %v4782, 0.0
    %v4894 = vadd.f32 %v4892, %v4893
    %v4895 = vsel %vm163, %v4783, 0.0
    %v4896 = vadd.f32 %v4894, %v4895
    %v4897 = vsel %vm163, %v4784, 0.0
    %v4898 = vadd.f32 %v4896, %v4897
    %v4899 = vsel %vm163, %v4785, 0.0
    %v4900 = vadd.f32 %v4898, %v4899
    %v4901 = vsel %vm163, %v4786, 0.0
    %v4902 = vadd.f32 %v4900, %v4901
    %v4903 = vsel %vm163, %v4787, 0.0
    %v4904 = vadd.f32 %v4902, %v4903
    %v4905 = vsel %vm163, %v4788, 0.0
    %v4906 = vadd.f32 %v4904, %v4905
    %v4907 = vsel %vm163, %v4789, 0.0
    %v4908 = vadd.f32 %v4906, %v4907
    %v4909 = vsel %vm163, %v4790, 0.0
    %v4910 = vadd.f32 %v4908, %v4909
    %v4911 = vsel %vm163, %v4791, 0.0
    %v4912 = vadd.f32 %v4910, %v4911
    %v4913 = vsel %vm163, %v4792, 0.0
    %v4914 = vadd.f32 %v4912, %v4913
    %v4915 = vsel %vm163, %v4793, 0.0
    %v4916 = vadd.f32 %v4914, %v4915
    %v4917 = vsel %vm163, %v4794, 0.0
    %v4918 = vadd.f32 %v4916, %v4917
    %v4919 = vsel %vm163, %v4795, 0.0
    %v4920 = vadd.f32 %v4918, %v4919
    %v4921 = vsel %vm163, %v4796, 0.0
    %v4922 = vadd.f32 %v4920, %v4921
    %v4923 = vsel %vm163, %v4797, 0.0
    %v4924 = vadd.f32 %v4922, %v4923
    %v4925 = vrot.slane %v4924, 4
    %v4926 = vadd.f32 %v4924, %v4925
    %v4927 = vrot.slane %v4926, 2
    %v4928 = vadd.f32 %v4926, %v4927
    %v4929 = vrot.slane %v4928, 1
    %v4930 = vadd.f32 %v4928, %v4929
    %v4931 = vmul.f32 %v4930, 0.001953125
    %v4932 = vmul.f32 %v4733, %v4733
    %v4933 = vsub.f32 %v4931, %v4932
    %v4934 = vadd.f32 %v4933, 1e-05
    %v4935 = vrsqrt.pop %v4934
    %v4936 = vmul.f32 %v4598, %v4935
    %v4937 = vmul.f32 %v4733, %v4936
    %v4938 = vsub.f32 %v4599, %v4937
    %v4940 = vlaneseq
    %v4941 = vshrl.u32 %v4940, 7
    %v4942 = vsub.s32 0, %v4941
    %v4943 = vrot.slane %v4936, %v4942
    %v4945 = vmul.f32 %v4344, %v4943
    %v4946 = vmul.f32 %v4347, %v4943
    %v4947 = vmul.f32 %v4352, %v4943
    %v4948 = vmul.f32 %v4355, %v4943
    %v4949 = vmul.f32 %v4360, %v4943
    %v4950 = vmul.f32 %v4363, %v4943
    %v4951 = vmul.f32 %v4368, %v4943
    %v4952 = vmul.f32 %v4371, %v4943
    %v4953 = vmul.f32 %v4376, %v4943
    %v4954 = vmul.f32 %v4379, %v4943
    %v4955 = vmul.f32 %v4384, %v4943
    %v4956 = vmul.f32 %v4387, %v4943
    %v4957 = vmul.f32 %v4392, %v4943
    %v4958 = vmul.f32 %v4395, %v4943
    %v4959 = vmul.f32 %v4400, %v4943
    %v4960 = vmul.f32 %v4403, %v4943
    %v4961 = vmul.f32 %v4408, %v4943
    %v4962 = vmul.f32 %v4411, %v4943
    %v4963 = vmul.f32 %v4416, %v4943
    %v4964 = vmul.f32 %v4419, %v4943
    %v4965 = vmul.f32 %v4424, %v4943
    %v4966 = vmul.f32 %v4427, %v4943
    %v4967 = vmul.f32 %v4432, %v4943
    %v4968 = vmul.f32 %v4435, %v4943
    %v4969 = vmul.f32 %v4440, %v4943
    %v4970 = vmul.f32 %v4443, %v4943
    %v4971 = vmul.f32 %v4448, %v4943
    %v4972 = vmul.f32 %v4451, %v4943
    %v4973 = vmul.f32 %v4456, %v4943
    %v4974 = vmul.f32 %v4459, %v4943
    %v4975 = vmul.f32 %v4464, %v4943
    %v4976 = vmul.f32 %v4467, %v4943
    %v4977 = vmul.f32 %v4472, %v4943
    %v4978 = vmul.f32 %v4475, %v4943
    %v4979 = vmul.f32 %v4480, %v4943
    %v4980 = vmul.f32 %v4483, %v4943
    %v4981 = vmul.f32 %v4488, %v4943
    %v4982 = vmul.f32 %v4491, %v4943
    %v4983 = vmul.f32 %v4496, %v4943
    %v4984 = vmul.f32 %v4499, %v4943
    %v4985 = vmul.f32 %v4504, %v4943
    %v4986 = vmul.f32 %v4507, %v4943
    %v4987 = vmul.f32 %v4512, %v4943
    %v4988 = vmul.f32 %v4515, %v4943
    %v4989 = vmul.f32 %v4520, %v4943
    %v4990 = vmul.f32 %v4523, %v4943
    %v4991 = vmul.f32 %v4528, %v4943
    %v4992 = vmul.f32 %v4531, %v4943
    %v4993 = vmul.f32 %v4536, %v4943
    %v4994 = vmul.f32 %v4539, %v4943
    %v4995 = vmul.f32 %v4544, %v4943
    %v4996 = vmul.f32 %v4547, %v4943
    %v4997 = vmul.f32 %v4552, %v4943
    %v4998 = vmul.f32 %v4555, %v4943
    %v4999 = vmul.f32 %v4560, %v4943
    %v5000 = vmul.f32 %v4563, %v4943
    %v5001 = vmul.f32 %v4568, %v4943
    %v5002 = vmul.f32 %v4571, %v4943
    %v5003 = vmul.f32 %v4576, %v4943
    %v5004 = vmul.f32 %v4579, %v4943
    %v5005 = vmul.f32 %v4584, %v4943
    %v5006 = vmul.f32 %v4587, %v4943
    %v5007 = vmul.f32 %v4592, %v4943
    %v5008 = vmul.f32 %v4595, %v4943
    %v5010 = vlaneseq
    %v5011 = vshrl.u32 %v5010, 7
    %v5012 = vsub.s32 0, %v5011
    %v5013 = vrot.slane %v4938, %v5012
    %v5015 = vadd.f32 %v4945, %v5013
    %v5016 = vadd.f32 %v4946, %v5013
    %v5017 = vadd.f32 %v4947, %v5013
    %v5018 = vadd.f32 %v4948, %v5013
    %v5019 = vadd.f32 %v4949, %v5013
    %v5020 = vadd.f32 %v4950, %v5013
    %v5021 = vadd.f32 %v4951, %v5013
    %v5022 = vadd.f32 %v4952, %v5013
    %v5023 = vadd.f32 %v4953, %v5013
    %v5024 = vadd.f32 %v4954, %v5013
    %v5025 = vadd.f32 %v4955, %v5013
    %v5026 = vadd.f32 %v4956, %v5013
    %v5027 = vadd.f32 %v4957, %v5013
    %v5028 = vadd.f32 %v4958, %v5013
    %v5029 = vadd.f32 %v4959, %v5013
    %v5030 = vadd.f32 %v4960, %v5013
    %v5031 = vadd.f32 %v4961, %v5013
    %v5032 = vadd.f32 %v4962, %v5013
    %v5033 = vadd.f32 %v4963, %v5013
    %v5034 = vadd.f32 %v4964, %v5013
    %v5035 = vadd.f32 %v4965, %v5013
    %v5036 = vadd.f32 %v4966, %v5013
    %v5037 = vadd.f32 %v4967, %v5013
    %v5038 = vadd.f32 %v4968, %v5013
    %v5039 = vadd.f32 %v4969, %v5013
    %v5040 = vadd.f32 %v4970, %v5013
    %v5041 = vadd.f32 %v4971, %v5013
    %v5042 = vadd.f32 %v4972, %v5013
    %v5043 = vadd.f32 %v4973, %v5013
    %v5044 = vadd.f32 %v4974, %v5013
    %v5045 = vadd.f32 %v4975, %v5013
    %v5046 = vadd.f32 %v4976, %v5013
    %v5047 = vadd.f32 %v4977, %v5013
    %v5048 = vadd.f32 %v4978, %v5013
    %v5049 = vadd.f32 %v4979, %v5013
    %v5050 = vadd.f32 %v4980, %v5013
    %v5051 = vadd.f32 %v4981, %v5013
    %v5052 = vadd.f32 %v4982, %v5013
    %v5053 = vadd.f32 %v4983, %v5013
    %v5054 = vadd.f32 %v4984, %v5013
    %v5055 = vadd.f32 %v4985, %v5013
    %v5056 = vadd.f32 %v4986, %v5013
    %v5057 = vadd.f32 %v4987, %v5013
    %v5058 = vadd.f32 %v4988, %v5013
    %v5059 = vadd.f32 %v4989, %v5013
    %v5060 = vadd.f32 %v4990, %v5013
    %v5061 = vadd.f32 %v4991, %v5013
    %v5062 = vadd.f32 %v4992, %v5013
    %v5063 = vadd.f32 %v4993, %v5013
    %v5064 = vadd.f32 %v4994, %v5013
    %v5065 = vadd.f32 %v4995, %v5013
    %v5066 = vadd.f32 %v4996, %v5013
    %v5067 = vadd.f32 %v4997, %v5013
    %v5068 = vadd.f32 %v4998, %v5013
    %v5069 = vadd.f32 %v4999, %v5013
    %v5070 = vadd.f32 %v5000, %v5013
    %v5071 = vadd.f32 %v5001, %v5013
    %v5072 = vadd.f32 %v5002, %v5013
    %v5073 = vadd.f32 %v5003, %v5013
    %v5074 = vadd.f32 %v5004, %v5013
    %v5075 = vadd.f32 %v5005, %v5013
    %v5076 = vadd.f32 %v5006, %v5013
    %v5077 = vadd.f32 %v5007, %v5013
    %v5078 = vadd.f32 %v5008, %v5013
    %v5079 = vmax.f32 %v5015, 0.0
    %v5080 = vmax.f32 %v5016, 0.0
    %v5081 = vmax.f32 %v5017, 0.0
    %v5082 = vmax.f32 %v5018, 0.0
    %v5083 = vmax.f32 %v5019, 0.0
    %v5084 = vmax.f32 %v5020, 0.0
    %v5085 = vmax.f32 %v5021, 0.0
    %v5086 = vmax.f32 %v5022, 0.0
    %v5087 = vmax.f32 %v5023, 0.0
    %v5088 = vmax.f32 %v5024, 0.0
    %v5089 = vmax.f32 %v5025, 0.0
    %v5090 = vmax.f32 %v5026, 0.0
    %v5091 = vmax.f32 %v5027, 0.0
    %v5092 = vmax.f32 %v5028, 0.0
    %v5093 = vmax.f32 %v5029, 0.0
    %v5094 = vmax.f32 %v5030, 0.0
    %v5095 = vmax.f32 %v5031, 0.0
    %v5096 = vmax.f32 %v5032, 0.0
    %v5097 = vmax.f32 %v5033, 0.0
    %v5098 = vmax.f32 %v5034, 0.0
    %v5099 = vmax.f32 %v5035, 0.0
    %v5100 = vmax.f32 %v5036, 0.0
    %v5101 = vmax.f32 %v5037, 0.0
    %v5102 = vmax.f32 %v5038, 0.0
    %v5103 = vmax.f32 %v5039, 0.0
    %v5104 = vmax.f32 %v5040, 0.0
    %v5105 = vmax.f32 %v5041, 0.0
    %v5106 = vmax.f32 %v5042, 0.0
    %v5107 = vmax.f32 %v5043, 0.0
    %v5108 = vmax.f32 %v5044, 0.0
    %v5109 = vmax.f32 %v5045, 0.0
    %v5110 = vmax.f32 %v5046, 0.0
    %v5111 = vmax.f32 %v5047, 0.0
    %v5112 = vmax.f32 %v5048, 0.0
    %v5113 = vmax.f32 %v5049, 0.0
    %v5114 = vmax.f32 %v5050, 0.0
    %v5115 = vmax.f32 %v5051, 0.0
    %v5116 = vmax.f32 %v5052, 0.0
    %v5117 = vmax.f32 %v5053, 0.0
    %v5118 = vmax.f32 %v5054, 0.0
    %v5119 = vmax.f32 %v5055, 0.0
    %v5120 = vmax.f32 %v5056, 0.0
    %v5121 = vmax.f32 %v5057, 0.0
    %v5122 = vmax.f32 %v5058, 0.0
    %v5123 = vmax.f32 %v5059, 0.0
    %v5124 = vmax.f32 %v5060, 0.0
    %v5125 = vmax.f32 %v5061, 0.0
    %v5126 = vmax.f32 %v5062, 0.0
    %v5127 = vmax.f32 %v5063, 0.0
    %v5128 = vmax.f32 %v5064, 0.0
    %v5129 = vmax.f32 %v5065, 0.0
    %v5130 = vmax.f32 %v5066, 0.0
    %v5131 = vmax.f32 %v5067, 0.0
    %v5132 = vmax.f32 %v5068, 0.0
    %v5133 = vmax.f32 %v5069, 0.0
    %v5134 = vmax.f32 %v5070, 0.0
    %v5135 = vmax.f32 %v5071, 0.0
    %v5136 = vmax.f32 %v5072, 0.0
    %v5137 = vmax.f32 %v5073, 0.0
    %v5138 = vmax.f32 %v5074, 0.0
    %v5139 = vmax.f32 %v5075, 0.0
    %v5140 = vmax.f32 %v5076, 0.0
    %v5141 = vmax.f32 %v5077, 0.0
    %v5142 = vmax.f32 %v5078, 0.0
    %v5143 = vpack.c.bf16 %v5080, %v5079
    %v5144 = vpack.c.bf16 %v5082, %v5081
    %v5145 = vpack.c.bf16 %v5084, %v5083
    %v5146 = vpack.c.bf16 %v5086, %v5085
    %v5147 = vpack.c.bf16 %v5088, %v5087
    %v5148 = vpack.c.bf16 %v5090, %v5089
    %v5149 = vpack.c.bf16 %v5092, %v5091
    %v5150 = vpack.c.bf16 %v5094, %v5093
    %v5151 = vpack.c.bf16 %v5096, %v5095
    %v5152 = vpack.c.bf16 %v5098, %v5097
    %v5153 = vpack.c.bf16 %v5100, %v5099
    %v5154 = vpack.c.bf16 %v5102, %v5101
    %v5155 = vpack.c.bf16 %v5104, %v5103
    %v5156 = vpack.c.bf16 %v5106, %v5105
    %v5157 = vpack.c.bf16 %v5108, %v5107
    %v5158 = vpack.c.bf16 %v5110, %v5109
    %v5159 = vpack.c.bf16 %v5112, %v5111
    %v5160 = vpack.c.bf16 %v5114, %v5113
    %v5161 = vpack.c.bf16 %v5116, %v5115
    %v5162 = vpack.c.bf16 %v5118, %v5117
    %v5163 = vpack.c.bf16 %v5120, %v5119
    %v5164 = vpack.c.bf16 %v5122, %v5121
    %v5165 = vpack.c.bf16 %v5124, %v5123
    %v5166 = vpack.c.bf16 %v5126, %v5125
    %v5167 = vpack.c.bf16 %v5128, %v5127
    %v5168 = vpack.c.bf16 %v5130, %v5129
    %v5169 = vpack.c.bf16 %v5132, %v5131
    %v5170 = vpack.c.bf16 %v5134, %v5133
    %v5171 = vpack.c.bf16 %v5136, %v5135
    %v5172 = vpack.c.bf16 %v5138, %v5137
    %v5173 = vpack.c.bf16 %v5140, %v5139
    %v5174 = vpack.c.bf16 %v5142, %v5141
    %v5175 = vld [vmem:[%s9] sm:$0xff]
    %v5176 = vld [vmem:[%s9 + $0x8] sm:$0xff]
    %v5177 = vld [vmem:[%s9 + $0x10] sm:$0xff]
    %v5178 = vld [vmem:[%s9 + $0x18] sm:$0xff]
    %v5179 = vpack.c.bf16 %v5176, %v5175
    %v5180 = vpack.c.bf16 %v5178, %v5177
    %v5181 = vld [vmem:[%s10] sm:$0x1]
    %v5183 = vlaneseq
    %v5184 = vshrl.u32 %v5183, 7
    %v5185 = vsub.s32 0, %v5184
    %v5186 = vrot.slane %v5181, %v5185
    %v5189 = vsel %vm163, %v5143, 0
    %v5192 = vsel %vm163, %v5144, 0
    %v5195 = vsel %vm163, %v5145, 0
    %v5198 = vsel %vm163, %v5146, 0
    %v5201 = vsel %vm163, %v5147, 0
    %v5204 = vsel %vm163, %v5148, 0
    %v5207 = vsel %vm163, %v5149, 0
    %v5210 = vsel %vm163, %v5150, 0
    %v5213 = vsel %vm163, %v5151, 0
    %v5216 = vsel %vm163, %v5152, 0
    %v5219 = vsel %vm163, %v5153, 0
    %v5222 = vsel %vm163, %v5154, 0
    %v5225 = vsel %vm163, %v5155, 0
    %v5228 = vsel %vm163, %v5156, 0
    %v5231 = vsel %vm163, %v5157, 0
    %v5234 = vsel %vm163, %v5158, 0
    %v5237 = vsel %vm163, %v5159, 0
    %v5240 = vsel %vm163, %v5160, 0
    %v5243 = vsel %vm163, %v5161, 0
    %v5246 = vsel %vm163, %v5162, 0
    %v5249 = vsel %vm163, %v5163, 0
    %v5252 = vsel %vm163, %v5164, 0
    %v5255 = vsel %vm163, %v5165, 0
    %v5258 = vsel %vm163, %v5166, 0
    %v5261 = vsel %vm163, %v5167, 0
    %v5264 = vsel %vm163, %v5168, 0
    %v5267 = vsel %vm163, %v5169, 0
    %v5270 = vsel %vm163, %v5170, 0
    %v5273 = vsel %vm163, %v5171, 0
    %v5276 = vsel %vm163, %v5172, 0
    %v5279 = vsel %vm163, %v5173, 0
    %v5282 = vsel %vm163, %v5174, 0
    %5284 = vmatprep.subr.bf16.mxu0 0
    %5285 = vmatpush1.bf16.msra.mxu0 %v5179
    %5286 = vmatprep.subr.bf16.mxu0 0
    %5287 = vmatpush1.bf16.msra.mxu0 %v5180
    %5288 = vmatprep.subr.bf16.mxu0 0
    %5289 = vmatpush1.bf16.msra.mxu0 0
    %5290 = vmatprep.subr.bf16.mxu0 0
    %5291 = vmatpush1.bf16.msra.mxu0 0
    %5292 = vmatprep.subr.bf16.mxu0 0
    %5293 = vmatpush1.bf16.msra.mxu0 0
    %5294 = vmatprep.subr.bf16.mxu0 0
    %5295 = vmatpush1.bf16.msra.mxu0 0
    %5296 = vmatprep.subr.bf16.mxu0 0
    %5297 = vmatpush1.bf16.msra.mxu0 0
    %5298 = vmatprep.subr.bf16.mxu0 0
    %5299 = vmatpush1.bf16.msra.mxu0 0
    %5300 = vmatprep.subr.bf16.mxu0 0
    %5301 = vmatpush1.bf16.msra.mxu0 0
    %5302 = vmatprep.subr.bf16.mxu0 0
    %5303 = vmatpush1.bf16.msra.mxu0 0
    %5304 = vmatprep.subr.bf16.mxu0 0
    %5305 = vmatpush1.bf16.msra.mxu0 0
    %5306 = vmatprep.subr.bf16.mxu0 0
    %5307 = vmatpush1.bf16.msra.mxu0 0
    %5308 = vmatprep.subr.bf16.mxu0 0
    %5309 = vmatpush1.bf16.msra.mxu0 0
    %5310 = vmatprep.subr.bf16.mxu0 0
    %5311 = vmatpush1.bf16.msra.mxu0 0
    %5312 = vmatprep.subr.bf16.mxu0 0
    %5313 = vmatpush1.bf16.msra.mxu0 0
    %5314 = vmatprep.subr.bf16.mxu0 0
    %5315 = vmatpush1.bf16.msra.mxu0 0
    %5316 = vmatprep.mubr.bf16.mxu0 0
    %5317 = vmatmul.mubr.bf16.gmra.mrb[0].mxu0 %v5189
    %v5318 = vpop.f32.mrb[0].mxu0
    %v5319 = vadd.f32 %v5186, %v5318
    %v5320 = vpop.f32.mrb[0].mxu0
    %v5321 = vpop.f32.mrb[0].mxu0
    %v5322 = vadd.f32 %v5186, %v5321
    %v5323 = vpop.f32.mrb[0].mxu0
    %5324 = vmatprep.mubr.bf16.mxu0 0
    %5325 = vmatmul.mubr.bf16.gmra.mrb[0].mxu0 %v5192
    %v5326 = vpop.f32.mrb[0].mxu0
    %v5327 = vadd.f32 %v5186, %v5326
    %v5328 = vpop.f32.mrb[0].mxu0
    %v5329 = vpop.f32.mrb[0].mxu0
    %v5330 = vadd.f32 %v5186, %v5329
    %v5331 = vpop.f32.mrb[0].mxu0
    %5332 = vmatprep.mubr.bf16.mxu0 0
    %5333 = vmatmul.mubr.bf16.gmra.mrb[0].mxu0 %v5195
    %v5334 = vpop.f32.mrb[0].mxu0
    %v5335 = vadd.f32 %v5186, %v5334
    %v5336 = vpop.f32.mrb[0].mxu0
    %v5337 = vpop.f32.mrb[0].mxu0
    %v5338 = vadd.f32 %v5186, %v5337
    %v5339 = vpop.f32.mrb[0].mxu0
    %5340 = vmatprep.mubr.bf16.mxu0 0
    %5341 = vmatmul.mubr.bf16.gmra.mrb[0].mxu0 %v5198
    %v5342 = vpop.f32.mrb[0].mxu0
    %v5343 = vadd.f32 %v5186, %v5342
    %v5344 = vpop.f32.mrb[0].mxu0
    %v5345 = vpop.f32.mrb[0].mxu0
    %v5346 = vadd.f32 %v5186, %v5345
    %v5347 = vpop.f32.mrb[0].mxu0
    %5348 = vmatprep.mubr.bf16.mxu0 0
    %5349 = vmatmul.mubr.bf16.gmra.mrb[0].mxu0 %v5201
    %v5350 = vpop.f32.mrb[0].mxu0
    %v5351 = vadd.f32 %v5186, %v5350
    %v5352 = vpop.f32.mrb[0].mxu0
    %v5353 = vpop.f32.mrb[0].mxu0
    %v5354 = vadd.f32 %v5186, %v5353
    %v5355 = vpop.f32.mrb[0].mxu0
    %5356 = vmatprep.mubr.bf16.mxu0 0
    %5357 = vmatmul.mubr.bf16.gmra.mrb[0].mxu0 %v5204
    %v5358 = vpop.f32.mrb[0].mxu0
    %v5359 = vadd.f32 %v5186, %v5358
    %v5360 = vpop.f32.mrb[0].mxu0
    %v5361 = vpop.f32.mrb[0].mxu0
    %v5362 = vadd.f32 %v5186, %v5361
    %v5363 = vpop.f32.mrb[0].mxu0
    %5364 = vmatprep.mubr.bf16.mxu0 0
    %5365 = vmatmul.mubr.bf16.gmra.mrb[0].mxu0 %v5207
    %v5366 = vpop.f32.mrb[0].mxu0
    %v5367 = vadd.f32 %v5186, %v5366
    %v5368 = vpop.f32.mrb[0].mxu0
    %v5369 = vpop.f32.mrb[0].mxu0
    %v5370 = vadd.f32 %v5186, %v5369
    %v5371 = vpop.f32.mrb[0].mxu0
    %5372 = vmatprep.mubr.bf16.mxu0 0
    %5373 = vmatmul.mubr.bf16.gmra.mrb[0].mxu0 %v5210
    %v5374 = vpop.f32.mrb[0].mxu0
    %v5375 = vadd.f32 %v5186, %v5374
    %v5376 = vpop.f32.mrb[0].mxu0
    %v5377 = vpop.f32.mrb[0].mxu0
    %v5378 = vadd.f32 %v5186, %v5377
    %v5379 = vpop.f32.mrb[0].mxu0
    %5380 = vmatprep.mubr.bf16.mxu0 0
    %5381 = vmatmul.mubr.bf16.gmra.mrb[0].mxu0 %v5213
    %v5382 = vpop.f32.mrb[0].mxu0
    %v5383 = vadd.f32 %v5186, %v5382
    %v5384 = vpop.f32.mrb[0].mxu0
    %v5385 = vpop.f32.mrb[0].mxu0
    %v5386 = vadd.f32 %v5186, %v5385
    %v5387 = vpop.f32.mrb[0].mxu0
    %5388 = vmatprep.mubr.bf16.mxu0 0
    %5389 = vmatmul.mubr.bf16.gmra.mrb[0].mxu0 %v5216
    %v5390 = vpop.f32.mrb[0].mxu0
    %v5391 = vadd.f32 %v5186, %v5390
    %v5392 = vpop.f32.mrb[0].mxu0
    %v5393 = vpop.f32.mrb[0].mxu0
    %v5394 = vadd.f32 %v5186, %v5393
    %v5395 = vpop.f32.mrb[0].mxu0
    %5396 = vmatprep.mubr.bf16.mxu0 0
    %5397 = vmatmul.mubr.bf16.gmra.mrb[0].mxu0 %v5219
    %v5398 = vpop.f32.mrb[0].mxu0
    %v5399 = vadd.f32 %v5186, %v5398
    %v5400 = vpop.f32.mrb[0].mxu0
    %v5401 = vpop.f32.mrb[0].mxu0
    %v5402 = vadd.f32 %v5186, %v5401
    %v5403 = vpop.f32.mrb[0].mxu0
    %5404 = vmatprep.mubr.bf16.mxu0 0
    %5405 = vmatmul.mubr.bf16.gmra.mrb[0].mxu0 %v5222
    %v5406 = vpop.f32.mrb[0].mxu0
    %v5407 = vadd.f32 %v5186, %v5406
    %v5408 = vpop.f32.mrb[0].mxu0
    %v5409 = vpop.f32.mrb[0].mxu0
    %v5410 = vadd.f32 %v5186, %v5409
    %v5411 = vpop.f32.mrb[0].mxu0
    %5412 = vmatprep.mubr.bf16.mxu0 0
    %5413 = vmatmul.mubr.bf16.gmra.mrb[0].mxu0 %v5225
    %v5414 = vpop.f32.mrb[0].mxu0
    %v5415 = vadd.f32 %v5186, %v5414
    %v5416 = vpop.f32.mrb[0].mxu0
    %v5417 = vpop.f32.mrb[0].mxu0
    %v5418 = vadd.f32 %v5186, %v5417
    %v5419 = vpop.f32.mrb[0].mxu0
    %5420 = vmatprep.mubr.bf16.mxu0 0
    %5421 = vmatmul.mubr.bf16.gmra.mrb[0].mxu0 %v5228
    %v5422 = vpop.f32.mrb[0].mxu0
    %v5423 = vadd.f32 %v5186, %v5422
    %v5424 = vpop.f32.mrb[0].mxu0
    %v5425 = vpop.f32.mrb[0].mxu0
    %v5426 = vadd.f32 %v5186, %v5425
    %v5427 = vpop.f32.mrb[0].mxu0
    %5428 = vmatprep.mubr.bf16.mxu0 0
    %5429 = vmatmul.mubr.bf16.gmra.mrb[0].mxu0 %v5231
    %v5430 = vpop.f32.mrb[0].mxu0
    %v5431 = vadd.f32 %v5186, %v5430
    %v5432 = vpop.f32.mrb[0].mxu0
    %v5433 = vpop.f32.mrb[0].mxu0
    %v5434 = vadd.f32 %v5186, %v5433
    %v5435 = vpop.f32.mrb[0].mxu0
    %5436 = vmatprep.mubr.bf16.mxu0 0
    %5437 = vmatmul.mubr.bf16.gmra.mrb[0].mxu0 %v5234
    %v5438 = vpop.f32.mrb[0].mxu0
    %v5439 = vadd.f32 %v5186, %v5438
    %v5440 = vpop.f32.mrb[0].mxu0
    %v5441 = vpop.f32.mrb[0].mxu0
    %v5442 = vadd.f32 %v5186, %v5441
    %v5443 = vpop.f32.mrb[0].mxu0
    %5444 = vmatprep.mubr.bf16.mxu0 0
    %5445 = vmatmul.mubr.bf16.gmra.mrb[0].mxu0 %v5237
    %v5446 = vpop.f32.mrb[0].mxu0
    %v5447 = vadd.f32 %v5186, %v5446
    %v5448 = vpop.f32.mrb[0].mxu0
    %v5449 = vpop.f32.mrb[0].mxu0
    %v5450 = vadd.f32 %v5186, %v5449
    %v5451 = vpop.f32.mrb[0].mxu0
    %5452 = vmatprep.mubr.bf16.mxu0 0
    %5453 = vmatmul.mubr.bf16.gmra.mrb[0].mxu0 %v5240
    %v5454 = vpop.f32.mrb[0].mxu0
    %v5455 = vadd.f32 %v5186, %v5454
    %v5456 = vpop.f32.mrb[0].mxu0
    %v5457 = vpop.f32.mrb[0].mxu0
    %v5458 = vadd.f32 %v5186, %v5457
    %v5459 = vpop.f32.mrb[0].mxu0
    %5460 = vmatprep.mubr.bf16.mxu0 0
    %5461 = vmatmul.mubr.bf16.gmra.mrb[0].mxu0 %v5243
    %v5462 = vpop.f32.mrb[0].mxu0
    %v5463 = vadd.f32 %v5186, %v5462
    %v5464 = vpop.f32.mrb[0].mxu0
    %v5465 = vpop.f32.mrb[0].mxu0
    %v5466 = vadd.f32 %v5186, %v5465
    %v5467 = vpop.f32.mrb[0].mxu0
    %5468 = vmatprep.mubr.bf16.mxu0 0
    %5469 = vmatmul.mubr.bf16.gmra.mrb[0].mxu0 %v5246
    %v5470 = vpop.f32.mrb[0].mxu0
    %v5471 = vadd.f32 %v5186, %v5470
    %v5472 = vpop.f32.mrb[0].mxu0
    %v5473 = vpop.f32.mrb[0].mxu0
    %v5474 = vadd.f32 %v5186, %v5473
    %v5475 = vpop.f32.mrb[0].mxu0
    %5476 = vmatprep.mubr.bf16.mxu0 0
    %5477 = vmatmul.mubr.bf16.gmra.mrb[0].mxu0 %v5249
    %v5478 = vpop.f32.mrb[0].mxu0
    %v5479 = vadd.f32 %v5186, %v5478
    %v5480 = vpop.f32.mrb[0].mxu0
    %v5481 = vpop.f32.mrb[0].mxu0
    %v5482 = vadd.f32 %v5186, %v5481
    %v5483 = vpop.f32.mrb[0].mxu0
    %5484 = vmatprep.mubr.bf16.mxu0 0
    %5485 = vmatmul.mubr.bf16.gmra.mrb[0].mxu0 %v5252
    %v5486 = vpop.f32.mrb[0].mxu0
    %v5487 = vadd.f32 %v5186, %v5486
    %v5488 = vpop.f32.mrb[0].mxu0
    %v5489 = vpop.f32.mrb[0].mxu0
    %v5490 = vadd.f32 %v5186, %v5489
    %v5491 = vpop.f32.mrb[0].mxu0
    %5492 = vmatprep.mubr.bf16.mxu0 0
    %5493 = vmatmul.mubr.bf16.gmra.mrb[0].mxu0 %v5255
    %v5494 = vpop.f32.mrb[0].mxu0
    %v5495 = vadd.f32 %v5186, %v5494
    %v5496 = vpop.f32.mrb[0].mxu0
    %v5497 = vpop.f32.mrb[0].mxu0
    %v5498 = vadd.f32 %v5186, %v5497
    %v5499 = vpop.f32.mrb[0].mxu0
    %5500 = vmatprep.mubr.bf16.mxu0 0
    %5501 = vmatmul.mubr.bf16.gmra.mrb[0].mxu0 %v5258
    %v5502 = vpop.f32.mrb[0].mxu0
    %v5503 = vadd.f32 %v5186, %v5502
    %v5504 = vpop.f32.mrb[0].mxu0
    %v5505 = vpop.f32.mrb[0].mxu0
    %v5506 = vadd.f32 %v5186, %v5505
    %v5507 = vpop.f32.mrb[0].mxu0
    %5508 = vmatprep.mubr.bf16.mxu0 0
    %5509 = vmatmul.mubr.bf16.gmra.mrb[0].mxu0 %v5261
    %v5510 = vpop.f32.mrb[0].mxu0
    %v5511 = vadd.f32 %v5186, %v5510
    %v5512 = vpop.f32.mrb[0].mxu0
    %v5513 = vpop.f32.mrb[0].mxu0
    %v5514 = vadd.f32 %v5186, %v5513
    %v5515 = vpop.f32.mrb[0].mxu0
    %5516 = vmatprep.mubr.bf16.mxu0 0
    %5517 = vmatmul.mubr.bf16.gmra.mrb[0].mxu0 %v5264
    %v5518 = vpop.f32.mrb[0].mxu0
    %v5519 = vadd.f32 %v5186, %v5518
    %v5520 = vpop.f32.mrb[0].mxu0
    %v5521 = vpop.f32.mrb[0].mxu0
    %v5522 = vadd.f32 %v5186, %v5521
    %v5523 = vpop.f32.mrb[0].mxu0
    %5524 = vmatprep.mubr.bf16.mxu0 0
    %5525 = vmatmul.mubr.bf16.gmra.mrb[0].mxu0 %v5267
    %v5526 = vpop.f32.mrb[0].mxu0
    %v5527 = vadd.f32 %v5186, %v5526
    %v5528 = vpop.f32.mrb[0].mxu0
    %v5529 = vpop.f32.mrb[0].mxu0
    %v5530 = vadd.f32 %v5186, %v5529
    %v5531 = vpop.f32.mrb[0].mxu0
    %5532 = vmatprep.mubr.bf16.mxu0 0
    %5533 = vmatmul.mubr.bf16.gmra.mrb[0].mxu0 %v5270
    %v5534 = vpop.f32.mrb[0].mxu0
    %v5535 = vadd.f32 %v5186, %v5534
    %v5536 = vpop.f32.mrb[0].mxu0
    %v5537 = vpop.f32.mrb[0].mxu0
    %v5538 = vadd.f32 %v5186, %v5537
    %v5539 = vpop.f32.mrb[0].mxu0
    %5540 = vmatprep.mubr.bf16.mxu0 0
    %5541 = vmatmul.mubr.bf16.gmra.mrb[0].mxu0 %v5273
    %v5542 = vpop.f32.mrb[0].mxu0
    %v5543 = vadd.f32 %v5186, %v5542
    %v5544 = vpop.f32.mrb[0].mxu0
    %v5545 = vpop.f32.mrb[0].mxu0
    %v5546 = vadd.f32 %v5186, %v5545
    %v5547 = vpop.f32.mrb[0].mxu0
    %5548 = vmatprep.mubr.bf16.mxu0 0
    %5549 = vmatmul.mubr.bf16.gmra.mrb[0].mxu0 %v5276
    %v5550 = vpop.f32.mrb[0].mxu0
    %v5551 = vadd.f32 %v5186, %v5550
    %v5552 = vpop.f32.mrb[0].mxu0
    %v5553 = vpop.f32.mrb[0].mxu0
    %v5554 = vadd.f32 %v5186, %v5553
    %v5555 = vpop.f32.mrb[0].mxu0
    %5556 = vmatprep.mubr.bf16.mxu0 0
    %5557 = vmatmul.mubr.bf16.gmra.mrb[0].mxu0 %v5279
    %v5558 = vpop.f32.mrb[0].mxu0
    %v5559 = vadd.f32 %v5186, %v5558
    %v5560 = vpop.f32.mrb[0].mxu0
    %v5561 = vpop.f32.mrb[0].mxu0
    %v5562 = vadd.f32 %v5186, %v5561
    %v5563 = vpop.f32.mrb[0].mxu0
    %5564 = vmatprep.mubr.bf16.mxu0 0
    %5565 = vmatmul.mubr.bf16.gmra.mrb[0].mxu0 %v5282
    %v5566 = vpop.f32.mrb[0].mxu0
    %v5567 = vadd.f32 %v5186, %v5566
    %v5568 = vpop.f32.mrb[0].mxu0
    %v5569 = vpop.f32.mrb[0].mxu0
    %v5570 = vadd.f32 %v5186, %v5569
    %v5571 = vpop.f32.mrb[0].mxu0
    %5572 = vdwg.mxu0
    %v5573 = vadd.f32 %v5319, %v54
    %v5574 = vadd.f32 %v5322, %v55
    %v5575 = vadd.f32 %v5327, %v56
    %v5576 = vadd.f32 %v5330, %v57
    %v5577 = vadd.f32 %v5335, %v58
    %v5578 = vadd.f32 %v5338, %v59
    %v5579 = vadd.f32 %v5343, %v60
    %v5580 = vadd.f32 %v5346, %v61
    %v5581 = vadd.f32 %v5351, %v62
    %v5582 = vadd.f32 %v5354, %v63
    %v5583 = vadd.f32 %v5359, %v64
    %v5584 = vadd.f32 %v5362, %v65
    %v5585 = vadd.f32 %v5367, %v66
    %v5586 = vadd.f32 %v5370, %v67
    %v5587 = vadd.f32 %v5375, %v68
    %v5588 = vadd.f32 %v5378, %v69
    %v5589 = vadd.f32 %v5383, %v70
    %v5590 = vadd.f32 %v5386, %v71
    %v5591 = vadd.f32 %v5391, %v72
    %v5592 = vadd.f32 %v5394, %v73
    %v5593 = vadd.f32 %v5399, %v74
    %v5594 = vadd.f32 %v5402, %v75
    %v5595 = vadd.f32 %v5407, %v76
    %v5596 = vadd.f32 %v5410, %v77
    %v5597 = vadd.f32 %v5415, %v78
    %v5598 = vadd.f32 %v5418, %v79
    %v5599 = vadd.f32 %v5423, %v80
    %v5600 = vadd.f32 %v5426, %v81
    %v5601 = vadd.f32 %v5431, %v82
    %v5602 = vadd.f32 %v5434, %v83
    %v5603 = vadd.f32 %v5439, %v84
    %v5604 = vadd.f32 %v5442, %v85
    %v5605 = vadd.f32 %v5447, %v86
    %v5606 = vadd.f32 %v5450, %v87
    %v5607 = vadd.f32 %v5455, %v88
    %v5608 = vadd.f32 %v5458, %v89
    %v5609 = vadd.f32 %v5463, %v90
    %v5610 = vadd.f32 %v5466, %v91
    %v5611 = vadd.f32 %v5471, %v92
    %v5612 = vadd.f32 %v5474, %v93
    %v5613 = vadd.f32 %v5479, %v94
    %v5614 = vadd.f32 %v5482, %v95
    %v5615 = vadd.f32 %v5487, %v96
    %v5616 = vadd.f32 %v5490, %v97
    %v5617 = vadd.f32 %v5495, %v98
    %v5618 = vadd.f32 %v5498, %v99
    %v5619 = vadd.f32 %v5503, %v100
    %v5620 = vadd.f32 %v5506, %v101
    %v5621 = vadd.f32 %v5511, %v102
    %v5622 = vadd.f32 %v5514, %v103
    %v5623 = vadd.f32 %v5519, %v104
    %v5624 = vadd.f32 %v5522, %v105
    %v5625 = vadd.f32 %v5527, %v106
    %v5626 = vadd.f32 %v5530, %v107
    %v5627 = vadd.f32 %v5535, %v108
    %v5628 = vadd.f32 %v5538, %v109
    %v5629 = vadd.f32 %v5543, %v110
    %v5630 = vadd.f32 %v5546, %v111
    %v5631 = vadd.f32 %v5551, %v112
    %v5632 = vadd.f32 %v5554, %v113
    %v5633 = vadd.f32 %v5559, %v114
    %v5634 = vadd.f32 %v5562, %v115
    %v5635 = vadd.f32 %v5567, %v116
    %v5636 = vadd.f32 %v5570, %v117
    %5637 = vst.msk [vmem:[#allocation6] sm:$0xff] %vm163, %v5573
    %5638 = vst.msk [vmem:[#allocation6 + $0x8] sm:$0xff] %vm163, %v5574
    %5639 = vst.msk [vmem:[#allocation6 + $0x10] sm:$0xff] %vm163, %v5575
    %5640 = vst.msk [vmem:[#allocation6 + $0x18] sm:$0xff] %vm163, %v5576
    %5641 = vst.msk [vmem:[#allocation6 + $0x20] sm:$0xff] %vm163, %v5577
    %5642 = vst.msk [vmem:[#allocation6 + $0x28] sm:$0xff] %vm163, %v5578
    %5643 = vst.msk [vmem:[#allocation6 + $0x30] sm:$0xff] %vm163, %v5579
    %5644 = vst.msk [vmem:[#allocation6 + $0x38] sm:$0xff] %vm163, %v5580
    %5645 = vst.msk [vmem:[#allocation6 + $0x40] sm:$0xff] %vm163, %v5581
    %5646 = vst.msk [vmem:[#allocation6 + $0x48] sm:$0xff] %vm163, %v5582
    %5647 = vst.msk [vmem:[#allocation6 + $0x50] sm:$0xff] %vm163, %v5583
    %5648 = vst.msk [vmem:[#allocation6 + $0x58] sm:$0xff] %vm163, %v5584
    %5649 = vst.msk [vmem:[#allocation6 + $0x60] sm:$0xff] %vm163, %v5585
    %5650 = vst.msk [vmem:[#allocation6 + $0x68] sm:$0xff] %vm163, %v5586
    %5651 = vst.msk [vmem:[#allocation6 + $0x70] sm:$0xff] %vm163, %v5587
    %5652 = vst.msk [vmem:[#allocation6 + $0x78] sm:$0xff] %vm163, %v5588
    %5653 = vst.msk [vmem:[#allocation6 + $0x80] sm:$0xff] %vm163, %v5589
    %5654 = vst.msk [vmem:[#allocation6 + $0x88] sm:$0xff] %vm163, %v5590
    %5655 = vst.msk [vmem:[#allocation6 + $0x90] sm:$0xff] %vm163, %v5591
    %5656 = vst.msk [vmem:[#allocation6 + $0x98] sm:$0xff] %vm163, %v5592
    %5657 = vst.msk [vmem:[#allocation6 + $0xa0] sm:$0xff] %vm163, %v5593
    %5658 = vst.msk [vmem:[#allocation6 + $0xa8] sm:$0xff] %vm163, %v5594
    %5659 = vst.msk [vmem:[#allocation6 + $0xb0] sm:$0xff] %vm163, %v5595
    %5660 = vst.msk [vmem:[#allocation6 + $0xb8] sm:$0xff] %vm163, %v5596
    %5661 = vst.msk [vmem:[#allocation6 + $0xc0] sm:$0xff] %vm163, %v5597
    %5662 = vst.msk [vmem:[#allocation6 + $0xc8] sm:$0xff] %vm163, %v5598
    %5663 = vst.msk [vmem:[#allocation6 + $0xd0] sm:$0xff] %vm163, %v5599
    %5664 = vst.msk [vmem:[#allocation6 + $0xd8] sm:$0xff] %vm163, %v5600
    %5665 = vst.msk [vmem:[#allocation6 + $0xe0] sm:$0xff] %vm163, %v5601
    %5666 = vst.msk [vmem:[#allocation6 + $0xe8] sm:$0xff] %vm163, %v5602
    %5667 = vst.msk [vmem:[#allocation6 + $0xf0] sm:$0xff] %vm163, %v5603
    %5668 = vst.msk [vmem:[#allocation6 + $0xf8] sm:$0xff] %vm163, %v5604
    %5669 = vst.msk [vmem:[#allocation6 + $0x100] sm:$0xff] %vm163, %v5605
    %5670 = vst.msk [vmem:[#allocation6 + $0x108] sm:$0xff] %vm163, %v5606
    %5671 = vst.msk [vmem:[#allocation6 + $0x110] sm:$0xff] %vm163, %v5607
    %5672 = vst.msk [vmem:[#allocation6 + $0x118] sm:$0xff] %vm163, %v5608
    %5673 = vst.msk [vmem:[#allocation6 + $0x120] sm:$0xff] %vm163, %v5609
    %5674 = vst.msk [vmem:[#allocation6 + $0x128] sm:$0xff] %vm163, %v5610
    %5675 = vst.msk [vmem:[#allocation6 + $0x130] sm:$0xff] %vm163, %v5611
    %5676 = vst.msk [vmem:[#allocation6 + $0x138] sm:$0xff] %vm163, %v5612
    %5677 = vst.msk [vmem:[#allocation6 + $0x140] sm:$0xff] %vm163, %v5613
    %5678 = vst.msk [vmem:[#allocation6 + $0x148] sm:$0xff] %vm163, %v5614
    %5679 = vst.msk [vmem:[#allocation6 + $0x150] sm:$0xff] %vm163, %v5615
    %5680 = vst.msk [vmem:[#allocation6 + $0x158] sm:$0xff] %vm163, %v5616
    %5681 = vst.msk [vmem:[#allocation6 + $0x160] sm:$0xff] %vm163, %v5617
    %5682 = vst.msk [vmem:[#allocation6 + $0x168] sm:$0xff] %vm163, %v5618
    %5683 = vst.msk [vmem:[#allocation6 + $0x170] sm:$0xff] %vm163, %v5619
    %5684 = vst.msk [vmem:[#allocation6 + $0x178] sm:$0xff] %vm163, %v5620
    %5685 = vst.msk [vmem:[#allocation6 + $0x180] sm:$0xff] %vm163, %v5621
    %5686 = vst.msk [vmem:[#allocation6 + $0x188] sm:$0xff] %vm163, %v5622
    %5687 = vst.msk [vmem:[#allocation6 + $0x190] sm:$0xff] %vm163, %v5623
    %5688 = vst.msk [vmem:[#allocation6 + $0x198] sm:$0xff] %vm163, %v5624
    %5689 = vst.msk [vmem:[#allocation6 + $0x1a0] sm:$0xff] %vm163, %v5625
    %5690 = vst.msk [vmem:[#allocation6 + $0x1a8] sm:$0xff] %vm163, %v5626
    %5691 = vst.msk [vmem:[#allocation6 + $0x1b0] sm:$0xff] %vm163, %v5627
    %5692 = vst.msk [vmem:[#allocation6 + $0x1b8] sm:$0xff] %vm163, %v5628
    %5693 = vst.msk [vmem:[#allocation6 + $0x1c0] sm:$0xff] %vm163, %v5629
    %5694 = vst.msk [vmem:[#allocation6 + $0x1c8] sm:$0xff] %vm163, %v5630
    %5695 = vst.msk [vmem:[#allocation6 + $0x1d0] sm:$0xff] %vm163, %v5631
    %5696 = vst.msk [vmem:[#allocation6 + $0x1d8] sm:$0xff] %vm163, %v5632
    %5697 = vst.msk [vmem:[#allocation6 + $0x1e0] sm:$0xff] %vm163, %v5633
    %5698 = vst.msk [vmem:[#allocation6 + $0x1e8] sm:$0xff] %vm163, %v5634
    %5699 = vst.msk [vmem:[#allocation6 + $0x1f0] sm:$0xff] %vm163, %v5635
    %5700 = vst.msk [vmem:[#allocation6 + $0x1f8] sm:$0xff] %vm163, %v5636
    // Predicated region
    $region50: #{res_block_forward.1} parent=1 // pred_check
      _
    $region51: #{res_block_forward.1} parent=1 // pred_check_branch
      %5702 = sbr.rel (0) target = $region53
    $region52: #{res_block_forward.1} parent=1 // pred_region
      %s5704 = ssub.s32 8192, 8192
      %5705 = vsyncadd [#allocation5], %s5704
      %s5706 = sshll.u32 [#allocation6], 4
      %s5707 = int_to_ptr.vmem [resolvable:$true] %s5706
      %5712 = dma.vmem_to_hbm [thread:$0]  %s5707, 8192, %s11, [#allocation5], 128, 128, 8
    $region53: #{res_block_forward.1} parent=1 // pred_fallthru
      _
    // Predicated region
    $region54: #{res_block_forward.1} parent=1 // pred_check
      _
    $region55: #{res_block_forward.1} parent=1 // pred_check_branch
      %5714 = sbr.rel (0) target = $region57
    $region56: #{res_block_forward.1} parent=1 // pred_region
      %5715 = dma.done [#allocation5], 8192
    $region57: #{res_block_forward.1} parent=1 // pred_fallthru
      _
    %5716 = vsyncpa [#allocation4], 1
    %5717 = vsyncpa [#allocation5], 1

</llo_original>
